<compile_context>
chip_gen: v6e
topology: v6e:2x2x1
jax: 0.10.0
libtpu: 0.0.40
codegen_flags: <defaults>
</compile_context>

<pallas_src>
import jax
import jax.numpy as jnp
from jax.experimental import pallas as pl
from jax.experimental.pallas import tpu as pltpu


def _projection_head_kernel(x_ref, w1_ref, b1_ref, w2_ref, b2_ref, o_ref):
    # x_ref:  (C_in, TH, W)    one (image, H-tile) slab, native NCHW layout
    # w1_ref: (C_in, C_in)     first 1x1 conv weight   (resident in VMEM)
    # b1_ref: (C_in, 1)
    # w2_ref: (C_proj, C_in)   second 1x1 conv weight  (resident in VMEM)
    # b2_ref: (C_proj, 1)
    # o_ref:  (C_proj, TH, W)
    w1 = w1_ref[...]
    b1 = b1_ref[...]
    w2 = w2_ref[...]
    b2 = b2_ref[...]

    th = x_ref.shape[1]                      # static tile height
    for h in range(th):                      # static unroll (capped in wrapper)
        x = x_ref[:, h, :].astype(jnp.float32)                        # (C_in, W)

        # Conv2d(dim_in, dim_in, 1)  ==  W1 @ x + b1, per spatial column.
        t = jnp.dot(w1, x, preferred_element_type=jnp.float32) + b1   # (C_in, W)
        t = jnp.maximum(t, 0.0)                                       # ReLU

        # Conv2d(dim_in, proj_dim, 1)  ==  W2 @ t + b2.
        y = jnp.dot(w2, t, preferred_element_type=jnp.float32) + b2   # (C_proj, W)

        # F.normalize(y, p=2, dim=-1):  y / max(||y||_2, 1e-12)
        #   == y * rsqrt(max(sum(y^2), 1e-24))   (identical semantics, one EUP op)
        sq = jnp.sum(y * y, axis=-1, keepdims=True)                   # (C_proj, 1)
        inv = jax.lax.rsqrt(jnp.maximum(sq, 1e-24))
        o_ref[:, h, :] = (y * inv).astype(o_ref.dtype)


def _pick_h_tile(H, C_in, C_proj, W,
                 budget_bytes=8 * 1024 * 1024, max_unroll=128):
    """Largest H-tile whose double-buffered in+out f32 blocks stay under budget.

    Keeps the kernel inside the smallest scoped-VMEM default (v5e: 16 MiB) and
    under v7x's 64 MiB physical VMEM, while amortizing the ~0.35 us per-grid-step
    pipeline overhead over many rows.
    """
    lane_w = ((W + 127) // 128) * 128            # VMEM lane padding
    per_row = 2 * (C_in + C_proj) * lane_w * 4   # double-buffered in+out, f32
    th = max(8, (budget_bytes // per_row) // 8 * 8)
    th = min(th, max_unroll)                     # keep the static unroll sane
    return H if th >= H else th                  # TH == H or TH % 8 == 0 (legal block)


def projection_head_forward(x, w1, b1, w2, b2, *, h_tile=None):
    """x: (N, C_in, H, W) float32 (NCHW, as in PyTorch). Returns (N, C_proj, H, W)."""
    N, C_in, H, W = x.shape
    C_proj = w2.shape[0]

    if h_tile is None:
        h_tile = _pick_h_tile(H, C_in, C_proj, W)
    assert h_tile == H or h_tile % 8 == 0, "h_tile must be H or a multiple of 8"

    b1_col = b1.reshape(C_in, 1)
    b2_col = b2.reshape(C_proj, 1)

    grid = (N, pl.cdiv(H, h_tile))

    return pl.pallas_call(
        _projection_head_kernel,
        out_shape=jax.ShapeDtypeStruct((N, C_proj, H, W), x.dtype),
        grid_spec=pltpu.PrefetchScalarGridSpec(
            num_scalar_prefetch=0,
            grid=grid,
            in_specs=[
                # Native NCHW indexing -- no HBM transpose/reshape in the wrapper.
                pl.BlockSpec((None, C_in, h_tile, W), lambda n, hb: (n, 0, hb, 0)),
                # Weights/biases: constant block index -> resident in VMEM.
                pl.BlockSpec((C_in, C_in), lambda n, hb: (0, 0)),
                pl.BlockSpec((C_in, 1), lambda n, hb: (0, 0)),
                pl.BlockSpec((C_proj, C_in), lambda n, hb: (0, 0)),
                pl.BlockSpec((C_proj, 1), lambda n, hb: (0, 0)),
            ],
            out_specs=pl.BlockSpec((None, C_proj, h_tile, W),
                                   lambda n, hb: (n, 0, hb, 0)),
        ),
        compiler_params=pltpu.CompilerParams(
            # Both axes independent -> v7x's two TensorCores both get work.
            dimension_semantics=("parallel", "parallel"),
            vmem_limit_bytes=64 * 1024 * 1024,
        ),
    )(x, w1, b1_col, w2, b2_col)


def _reference_forward(x, w1, b1, w2, b2):
    """Pure-JAX reference matching the PyTorch module exactly."""
    h = jnp.einsum("oc,nchw->nohw", w1, x) + b1[None, :, None, None]
    h = jnp.maximum(h, 0.0)
    y = jnp.einsum("oc,nchw->nohw", w2, h) + b2[None, :, None, None]
    norm = jnp.maximum(jnp.sqrt(jnp.sum(y * y, axis=-1, keepdims=True)), 1e-12)
    return y / norm


def _run_case(key, N, C_in, H, W, C_proj, h_tile=None):
    kx, k1, k2, k3, k4 = jax.random.split(key, 5)
    x = jax.random.normal(kx, (N, C_in, H, W), dtype=jnp.float32)
    # Synthetic parameters; shapes from nn.Conv2d(dim_in, dim_in, 1) and
    # nn.Conv2d(dim_in, proj_dim, 1), 1x1 kernels squeezed to 2-D matrices.
    w1 = jax.random.normal(k1, (C_in, C_in), dtype=jnp.float32) * 0.5
    b1 = jax.random.normal(k2, (C_in,), dtype=jnp.float32) * 0.1
    w2 = jax.random.normal(k3, (C_proj, C_in), dtype=jnp.float32) * 0.5
    b2 = jax.random.normal(k4, (C_proj,), dtype=jnp.float32) * 0.1

    out = jax.block_until_ready(
        projection_head_forward(x, w1, b1, w2, b2, h_tile=h_tile))
    ref = jax.block_until_ready(_reference_forward(x, w1, b1, w2, b2))

    assert out.shape == (N, C_proj, H, W)
    assert jnp.allclose(out, ref, atol=1e-5, rtol=1e-5), \
        float(jnp.max(jnp.abs(out - ref)))


if __name__ == "__main__":
    key = jax.random.PRNGKey(0)
    k_a, k_b = jax.random.split(key)

    # Small config consistent with the module (batch=2, channels=4, spatial=16).
    _run_case(k_a, N=2, C_in=4, H=16, W=16, C_proj=8)

    # Slightly larger, lane-dense (W=128) config that exercises the tiled-H grid
    # (grid = (2, 4)) and the multi-row-per-step path.
    _run_case(k_b, N=2, C_in=8, H=32, W=128, C_proj=16, h_tile=8)

    print("KERNEL_OK")
</pallas_src>

<mosaic_0001>
module attributes {stable_mosaic.version = 11 : i64} {
  func.func @_projection_head_kernel(%arg0: i32, %arg1: i32, %arg2: memref<1x4x16x16xf32, #tpu.memory_space<vmem>>, %arg3: memref<4x4xf32, #tpu.memory_space<vmem>>, %arg4: memref<4x1xf32, #tpu.memory_space<vmem>>, %arg5: memref<8x4xf32, #tpu.memory_space<vmem>>, %arg6: memref<8x1xf32, #tpu.memory_space<vmem>>, %arg7: memref<1x8x16x16xf32, #tpu.memory_space<vmem>>) attributes {dimension_semantics = [#tpu.dimension_semantics<parallel>, #tpu.dimension_semantics<parallel>], iteration_bounds = array<i64: 2, 1>, scalar_prefetch = 0 : i64, scratch_operands = 0 : i64, tpu.core_type = #tpu.core_type<tc>, window_params = [{transform_indices = @transform_0, window_bounds = array<i64: 1, 4, 16, 16>}, {pipeline_mode = #tpu.pipeline_mode<synchronous>, transform_indices = @transform_1, window_bounds = array<i64: 4, 4>}, {pipeline_mode = #tpu.pipeline_mode<synchronous>, transform_indices = @transform_2, window_bounds = array<i64: 4, 1>}, {pipeline_mode = #tpu.pipeline_mode<synchronous>, transform_indices = @transform_3, window_bounds = array<i64: 8, 4>}, {pipeline_mode = #tpu.pipeline_mode<synchronous>, transform_indices = @transform_4, window_bounds = array<i64: 8, 1>}, {transform_indices = @transform_5, window_bounds = array<i64: 1, 8, 16, 16>}]} {
    %c0 = arith.constant 0 : index
    %c0_0 = arith.constant 0 : index
    %0 = vector.load %arg3[%c0, %c0_0] : memref<4x4xf32, #tpu.memory_space<vmem>>, vector<4x4xf32>
    %c0_1 = arith.constant 0 : index
    %c0_2 = arith.constant 0 : index
    %1 = vector.load %arg4[%c0_1, %c0_2] : memref<4x1xf32, #tpu.memory_space<vmem>>, vector<4x1xf32>
    %c0_3 = arith.constant 0 : index
    %c0_4 = arith.constant 0 : index
    %2 = vector.load %arg5[%c0_3, %c0_4] : memref<8x4xf32, #tpu.memory_space<vmem>>, vector<8x4xf32>
    %c0_5 = arith.constant 0 : index
    %c0_6 = arith.constant 0 : index
    %3 = vector.load %arg6[%c0_5, %c0_6] : memref<8x1xf32, #tpu.memory_space<vmem>>, vector<8x1xf32>
    %c0_7 = arith.constant 0 : index
    %c0_8 = arith.constant 0 : index
    %c0_9 = arith.constant 0 : index
    %c0_10 = arith.constant 0 : index
    %4 = vector.load %arg2[%c0_7, %c0_8, %c0_9, %c0_10] : memref<1x4x16x16xf32, #tpu.memory_space<vmem>>, vector<1x4x1x16xf32>
    %5 = vector.shape_cast %4 : vector<1x4x1x16xf32> to vector<4x16xf32>
    %cst = arith.constant dense<0.000000e+00> : vector<4x16xf32>
    %6 = tpu.matmul %0, %5, %cst {dimension_numbers = #tpu.dot_dimension_numbers<[1], [0], [0], [1], [0, 0, 1, 1], [], []>} : vector<4x4xf32>, vector<4x16xf32>, vector<4x16xf32> -> vector<4x16xf32>
    %7 = vector.broadcast %1 : vector<4x1xf32> to vector<4x16xf32>
    %8 = arith.addf %6, %7 : vector<4x16xf32>
    %cst_11 = arith.constant 0.000000e+00 : f32
    %9 = vector.broadcast %cst_11 : f32 to vector<4x16xf32>
    %10 = arith.maximumf %8, %9 : vector<4x16xf32>
    %cst_12 = arith.constant dense<0.000000e+00> : vector<8x16xf32>
    %11 = tpu.matmul %2, %10, %cst_12 {dimension_numbers = #tpu.dot_dimension_numbers<[1], [0], [0], [1], [0, 0, 1, 1], [], []>} : vector<8x4xf32>, vector<4x16xf32>, vector<8x16xf32> -> vector<8x16xf32>
    %12 = vector.broadcast %3 : vector<8x1xf32> to vector<8x16xf32>
    %13 = arith.addf %11, %12 : vector<8x16xf32>
    %14 = arith.mulf %13, %13 : vector<8x16xf32>
    %cst_13 = arith.constant dense<0.000000e+00> : vector<8xf32>
    %15 = vector.multi_reduction <add>, %14, %cst_13 [1] : vector<8x16xf32> to vector<8xf32>
    %16 = vector.shape_cast %15 : vector<8xf32> to vector<8x1xf32>
    %cst_14 = arith.constant 1.000000e-24 : f32
    %17 = vector.broadcast %cst_14 : f32 to vector<8x1xf32>
    %18 = arith.maximumf %16, %17 : vector<8x1xf32>
    %19 = math.rsqrt %18 : vector<8x1xf32>
    %20 = vector.broadcast %19 : vector<8x1xf32> to vector<8x16xf32>
    %21 = arith.mulf %13, %20 : vector<8x16xf32>
    %c0_15 = arith.constant 0 : index
    %c0_16 = arith.constant 0 : index
    %c0_17 = arith.constant 0 : index
    %c0_18 = arith.constant 0 : index
    %22 = vector.load %arg7[%c0_15, %c0_16, %c0_17, %c0_18] : memref<1x8x16x16xf32, #tpu.memory_space<vmem>>, vector<1x8x1x16xf32>
    %23 = vector.shape_cast %22 : vector<1x8x1x16xf32> to vector<8x16xf32>
    %24 = vector.shape_cast %21 : vector<8x16xf32> to vector<1x8x1x16xf32>
    tpu.vector_store %arg7[%c0_15, %c0_16, %c0_17, %c0_18], %24 {strides = array<i32>} : memref<1x8x16x16xf32, #tpu.memory_space<vmem>>, vector<1x8x1x16xf32>,
    %c0_19 = arith.constant 0 : index
    %c0_20 = arith.constant 0 : index
    %c1 = arith.constant 1 : index
    %c0_21 = arith.constant 0 : index
    %25 = vector.load %arg2[%c0_19, %c0_20, %c1, %c0_21] : memref<1x4x16x16xf32, #tpu.memory_space<vmem>>, vector<1x4x1x16xf32>
    %26 = vector.shape_cast %25 : vector<1x4x1x16xf32> to vector<4x16xf32>
    %cst_22 = arith.constant dense<0.000000e+00> : vector<4x16xf32>
    %27 = tpu.matmul %0, %26, %cst_22 {dimension_numbers = #tpu.dot_dimension_numbers<[1], [0], [0], [1], [0, 0, 1, 1], [], []>} : vector<4x4xf32>, vector<4x16xf32>, vector<4x16xf32> -> vector<4x16xf32>
    %28 = vector.broadcast %1 : vector<4x1xf32> to vector<4x16xf32>
    %29 = arith.addf %27, %28 : vector<4x16xf32>
    %cst_23 = arith.constant 0.000000e+00 : f32
    %30 = vector.broadcast %cst_23 : f32 to vector<4x16xf32>
    %31 = arith.maximumf %29, %30 : vector<4x16xf32>
    %cst_24 = arith.constant dense<0.000000e+00> : vector<8x16xf32>
    %32 = tpu.matmul %2, %31, %cst_24 {dimension_numbers = #tpu.dot_dimension_numbers<[1], [0], [0], [1], [0, 0, 1, 1], [], []>} : vector<8x4xf32>, vector<4x16xf32>, vector<8x16xf32> -> vector<8x16xf32>
    %33 = vector.broadcast %3 : vector<8x1xf32> to vector<8x16xf32>
    %34 = arith.addf %32, %33 : vector<8x16xf32>
    %35 = arith.mulf %34, %34 : vector<8x16xf32>
    %cst_25 = arith.constant dense<0.000000e+00> : vector<8xf32>
    %36 = vector.multi_reduction <add>, %35, %cst_25 [1] : vector<8x16xf32> to vector<8xf32>
    %37 = vector.shape_cast %36 : vector<8xf32> to vector<8x1xf32>
    %cst_26 = arith.constant 1.000000e-24 : f32
    %38 = vector.broadcast %cst_26 : f32 to vector<8x1xf32>
    %39 = arith.maximumf %37, %38 : vector<8x1xf32>
    %40 = math.rsqrt %39 : vector<8x1xf32>
    %41 = vector.broadcast %40 : vector<8x1xf32> to vector<8x16xf32>
    %42 = arith.mulf %34, %41 : vector<8x16xf32>
    %c0_27 = arith.constant 0 : index
    %c0_28 = arith.constant 0 : index
    %c1_29 = arith.constant 1 : index
    %c0_30 = arith.constant 0 : index
    %43 = vector.load %arg7[%c0_27, %c0_28, %c1_29, %c0_30] : memref<1x8x16x16xf32, #tpu.memory_space<vmem>>, vector<1x8x1x16xf32>
    %44 = vector.shape_cast %43 : vector<1x8x1x16xf32> to vector<8x16xf32>
    %45 = vector.shape_cast %42 : vector<8x16xf32> to vector<1x8x1x16xf32>
    tpu.vector_store %arg7[%c0_27, %c0_28, %c1_29, %c0_30], %45 {strides = array<i32>} : memref<1x8x16x16xf32, #tpu.memory_space<vmem>>, vector<1x8x1x16xf32>,
    %c0_31 = arith.constant 0 : index
    %c0_32 = arith.constant 0 : index
    %c2 = arith.constant 2 : index
    %c0_33 = arith.constant 0 : index
    %46 = vector.load %arg2[%c0_31, %c0_32, %c2, %c0_33] : memref<1x4x16x16xf32, #tpu.memory_space<vmem>>, vector<1x4x1x16xf32>
    %47 = vector.shape_cast %46 : vector<1x4x1x16xf32> to vector<4x16xf32>
    %cst_34 = arith.constant dense<0.000000e+00> : vector<4x16xf32>
    %48 = tpu.matmul %0, %47, %cst_34 {dimension_numbers = #tpu.dot_dimension_numbers<[1], [0], [0], [1], [0, 0, 1, 1], [], []>} : vector<4x4xf32>, vector<4x16xf32>, vector<4x16xf32> -> vector<4x16xf32>
    %49 = vector.broadcast %1 : vector<4x1xf32> to vector<4x16xf32>
    %50 = arith.addf %48, %49 : vector<4x16xf32>
    %cst_35 = arith.constant 0.000000e+00 : f32
    %51 = vector.broadcast %cst_35 : f32 to vector<4x16xf32>
    %52 = arith.maximumf %50, %51 : vector<4x16xf32>
    %cst_36 = arith.constant dense<0.000000e+00> : vector<8x16xf32>
    %53 = tpu.matmul %2, %52, %cst_36 {dimension_numbers = #tpu.dot_dimension_numbers<[1], [0], [0], [1], [0, 0, 1, 1], [], []>} : vector<8x4xf32>, vector<4x16xf32>, vector<8x16xf32> -> vector<8x16xf32>
    %54 = vector.broadcast %3 : vector<8x1xf32> to vector<8x16xf32>
    %55 = arith.addf %53, %54 : vector<8x16xf32>
    %56 = arith.mulf %55, %55 : vector<8x16xf32>
    %cst_37 = arith.constant dense<0.000000e+00> : vector<8xf32>
    %57 = vector.multi_reduction <add>, %56, %cst_37 [1] : vector<8x16xf32> to vector<8xf32>
    %58 = vector.shape_cast %57 : vector<8xf32> to vector<8x1xf32>
    %cst_38 = arith.constant 1.000000e-24 : f32
    %59 = vector.broadcast %cst_38 : f32 to vector<8x1xf32>
    %60 = arith.maximumf %58, %59 : vector<8x1xf32>
    %61 = math.rsqrt %60 : vector<8x1xf32>
    %62 = vector.broadcast %61 : vector<8x1xf32> to vector<8x16xf32>
    %63 = arith.mulf %55, %62 : vector<8x16xf32>
    %c0_39 = arith.constant 0 : index
    %c0_40 = arith.constant 0 : index
    %c2_41 = arith.constant 2 : index
    %c0_42 = arith.constant 0 : index
    %64 = vector.load %arg7[%c0_39, %c0_40, %c2_41, %c0_42] : memref<1x8x16x16xf32, #tpu.memory_space<vmem>>, vector<1x8x1x16xf32>
    %65 = vector.shape_cast %64 : vector<1x8x1x16xf32> to vector<8x16xf32>
    %66 = vector.shape_cast %63 : vector<8x16xf32> to vector<1x8x1x16xf32>
    tpu.vector_store %arg7[%c0_39, %c0_40, %c2_41, %c0_42], %66 {strides = array<i32>} : memref<1x8x16x16xf32, #tpu.memory_space<vmem>>, vector<1x8x1x16xf32>,
    %c0_43 = arith.constant 0 : index
    %c0_44 = arith.constant 0 : index
    %c3 = arith.constant 3 : index
    %c0_45 = arith.constant 0 : index
    %67 = vector.load %arg2[%c0_43, %c0_44, %c3, %c0_45] : memref<1x4x16x16xf32, #tpu.memory_space<vmem>>, vector<1x4x1x16xf32>
    %68 = vector.shape_cast %67 : vector<1x4x1x16xf32> to vector<4x16xf32>
    %cst_46 = arith.constant dense<0.000000e+00> : vector<4x16xf32>
    %69 = tpu.matmul %0, %68, %cst_46 {dimension_numbers = #tpu.dot_dimension_numbers<[1], [0], [0], [1], [0, 0, 1, 1], [], []>} : vector<4x4xf32>, vector<4x16xf32>, vector<4x16xf32> -> vector<4x16xf32>
    %70 = vector.broadcast %1 : vector<4x1xf32> to vector<4x16xf32>
    %71 = arith.addf %69, %70 : vector<4x16xf32>
    %cst_47 = arith.constant 0.000000e+00 : f32
    %72 = vector.broadcast %cst_47 : f32 to vector<4x16xf32>
    %73 = arith.maximumf %71, %72 : vector<4x16xf32>
    %cst_48 = arith.constant dense<0.000000e+00> : vector<8x16xf32>
    %74 = tpu.matmul %2, %73, %cst_48 {dimension_numbers = #tpu.dot_dimension_numbers<[1], [0], [0], [1], [0, 0, 1, 1], [], []>} : vector<8x4xf32>, vector<4x16xf32>, vector<8x16xf32> -> vector<8x16xf32>
    %75 = vector.broadcast %3 : vector<8x1xf32> to vector<8x16xf32>
    %76 = arith.addf %74, %75 : vector<8x16xf32>
    %77 = arith.mulf %76, %76 : vector<8x16xf32>
    %cst_49 = arith.constant dense<0.000000e+00> : vector<8xf32>
    %78 = vector.multi_reduction <add>, %77, %cst_49 [1] : vector<8x16xf32> to vector<8xf32>
    %79 = vector.shape_cast %78 : vector<8xf32> to vector<8x1xf32>
    %cst_50 = arith.constant 1.000000e-24 : f32
    %80 = vector.broadcast %cst_50 : f32 to vector<8x1xf32>
    %81 = arith.maximumf %79, %80 : vector<8x1xf32>
    %82 = math.rsqrt %81 : vector<8x1xf32>
    %83 = vector.broadcast %82 : vector<8x1xf32> to vector<8x16xf32>
    %84 = arith.mulf %76, %83 : vector<8x16xf32>
    %c0_51 = arith.constant 0 : index
    %c0_52 = arith.constant 0 : index
    %c3_53 = arith.constant 3 : index
    %c0_54 = arith.constant 0 : index
    %85 = vector.load %arg7[%c0_51, %c0_52, %c3_53, %c0_54] : memref<1x8x16x16xf32, #tpu.memory_space<vmem>>, vector<1x8x1x16xf32>
    %86 = vector.shape_cast %85 : vector<1x8x1x16xf32> to vector<8x16xf32>
    %87 = vector.shape_cast %84 : vector<8x16xf32> to vector<1x8x1x16xf32>
    tpu.vector_store %arg7[%c0_51, %c0_52, %c3_53, %c0_54], %87 {strides = array<i32>} : memref<1x8x16x16xf32, #tpu.memory_space<vmem>>, vector<1x8x1x16xf32>,
    %c0_55 = arith.constant 0 : index
    %c0_56 = arith.constant 0 : index
    %c4 = arith.constant 4 : index
    %c0_57 = arith.constant 0 : index
    %88 = vector.load %arg2[%c0_55, %c0_56, %c4, %c0_57] : memref<1x4x16x16xf32, #tpu.memory_space<vmem>>, vector<1x4x1x16xf32>
    %89 = vector.shape_cast %88 : vector<1x4x1x16xf32> to vector<4x16xf32>
    %cst_58 = arith.constant dense<0.000000e+00> : vector<4x16xf32>
    %90 = tpu.matmul %0, %89, %cst_58 {dimension_numbers = #tpu.dot_dimension_numbers<[1], [0], [0], [1], [0, 0, 1, 1], [], []>} : vector<4x4xf32>, vector<4x16xf32>, vector<4x16xf32> -> vector<4x16xf32>
    %91 = vector.broadcast %1 : vector<4x1xf32> to vector<4x16xf32>
    %92 = arith.addf %90, %91 : vector<4x16xf32>
    %cst_59 = arith.constant 0.000000e+00 : f32
    %93 = vector.broadcast %cst_59 : f32 to vector<4x16xf32>
    %94 = arith.maximumf %92, %93 : vector<4x16xf32>
    %cst_60 = arith.constant dense<0.000000e+00> : vector<8x16xf32>
    %95 = tpu.matmul %2, %94, %cst_60 {dimension_numbers = #tpu.dot_dimension_numbers<[1], [0], [0], [1], [0, 0, 1, 1], [], []>} : vector<8x4xf32>, vector<4x16xf32>, vector<8x16xf32> -> vector<8x16xf32>
    %96 = vector.broadcast %3 : vector<8x1xf32> to vector<8x16xf32>
    %97 = arith.addf %95, %96 : vector<8x16xf32>
    %98 = arith.mulf %97, %97 : vector<8x16xf32>
    %cst_61 = arith.constant dense<0.000000e+00> : vector<8xf32>
    %99 = vector.multi_reduction <add>, %98, %cst_61 [1] : vector<8x16xf32> to vector<8xf32>
    %100 = vector.shape_cast %99 : vector<8xf32> to vector<8x1xf32>
    %cst_62 = arith.constant 1.000000e-24 : f32
    %101 = vector.broadcast %cst_62 : f32 to vector<8x1xf32>
    %102 = arith.maximumf %100, %101 : vector<8x1xf32>
    %103 = math.rsqrt %102 : vector<8x1xf32>
    %104 = vector.broadcast %103 : vector<8x1xf32> to vector<8x16xf32>
    %105 = arith.mulf %97, %104 : vector<8x16xf32>
    %c0_63 = arith.constant 0 : index
    %c0_64 = arith.constant 0 : index
    %c4_65 = arith.constant 4 : index
    %c0_66 = arith.constant 0 : index
    %106 = vector.load %arg7[%c0_63, %c0_64, %c4_65, %c0_66] : memref<1x8x16x16xf32, #tpu.memory_space<vmem>>, vector<1x8x1x16xf32>
    %107 = vector.shape_cast %106 : vector<1x8x1x16xf32> to vector<8x16xf32>
    %108 = vector.shape_cast %105 : vector<8x16xf32> to vector<1x8x1x16xf32>
    tpu.vector_store %arg7[%c0_63, %c0_64, %c4_65, %c0_66], %108 {strides = array<i32>} : memref<1x8x16x16xf32, #tpu.memory_space<vmem>>, vector<1x8x1x16xf32>,
    %c0_67 = arith.constant 0 : index
    %c0_68 = arith.constant 0 : index
    %c5 = arith.constant 5 : index
    %c0_69 = arith.constant 0 : index
    %109 = vector.load %arg2[%c0_67, %c0_68, %c5, %c0_69] : memref<1x4x16x16xf32, #tpu.memory_space<vmem>>, vector<1x4x1x16xf32>
    %110 = vector.shape_cast %109 : vector<1x4x1x16xf32> to vector<4x16xf32>
    %cst_70 = arith.constant dense<0.000000e+00> : vector<4x16xf32>
    %111 = tpu.matmul %0, %110, %cst_70 {dimension_numbers = #tpu.dot_dimension_numbers<[1], [0], [0], [1], [0, 0, 1, 1], [], []>} : vector<4x4xf32>, vector<4x16xf32>, vector<4x16xf32> -> vector<4x16xf32>
    %112 = vector.broadcast %1 : vector<4x1xf32> to vector<4x16xf32>
    %113 = arith.addf %111, %112 : vector<4x16xf32>
    %cst_71 = arith.constant 0.000000e+00 : f32
    %114 = vector.broadcast %cst_71 : f32 to vector<4x16xf32>
    %115 = arith.maximumf %113, %114 : vector<4x16xf32>
    %cst_72 = arith.constant dense<0.000000e+00> : vector<8x16xf32>
    %116 = tpu.matmul %2, %115, %cst_72 {dimension_numbers = #tpu.dot_dimension_numbers<[1], [0], [0], [1], [0, 0, 1, 1], [], []>} : vector<8x4xf32>, vector<4x16xf32>, vector<8x16xf32> -> vector<8x16xf32>
    %117 = vector.broadcast %3 : vector<8x1xf32> to vector<8x16xf32>
    %118 = arith.addf %116, %117 : vector<8x16xf32>
    %119 = arith.mulf %118, %118 : vector<8x16xf32>
    %cst_73 = arith.constant dense<0.000000e+00> : vector<8xf32>
    %120 = vector.multi_reduction <add>, %119, %cst_73 [1] : vector<8x16xf32> to vector<8xf32>
    %121 = vector.shape_cast %120 : vector<8xf32> to vector<8x1xf32>
    %cst_74 = arith.constant 1.000000e-24 : f32
    %122 = vector.broadcast %cst_74 : f32 to vector<8x1xf32>
    %123 = arith.maximumf %121, %122 : vector<8x1xf32>
    %124 = math.rsqrt %123 : vector<8x1xf32>
    %125 = vector.broadcast %124 : vector<8x1xf32> to vector<8x16xf32>
    %126 = arith.mulf %118, %125 : vector<8x16xf32>
    %c0_75 = arith.constant 0 : index
    %c0_76 = arith.constant 0 : index
    %c5_77 = arith.constant 5 : index
    %c0_78 = arith.constant 0 : index
    %127 = vector.load %arg7[%c0_75, %c0_76, %c5_77, %c0_78] : memref<1x8x16x16xf32, #tpu.memory_space<vmem>>, vector<1x8x1x16xf32>
    %128 = vector.shape_cast %127 : vector<1x8x1x16xf32> to vector<8x16xf32>
    %129 = vector.shape_cast %126 : vector<8x16xf32> to vector<1x8x1x16xf32>
    tpu.vector_store %arg7[%c0_75, %c0_76, %c5_77, %c0_78], %129 {strides = array<i32>} : memref<1x8x16x16xf32, #tpu.memory_space<vmem>>, vector<1x8x1x16xf32>,
    %c0_79 = arith.constant 0 : index
    %c0_80 = arith.constant 0 : index
    %c6 = arith.constant 6 : index
    %c0_81 = arith.constant 0 : index
    %130 = vector.load %arg2[%c0_79, %c0_80, %c6, %c0_81] : memref<1x4x16x16xf32, #tpu.memory_space<vmem>>, vector<1x4x1x16xf32>
    %131 = vector.shape_cast %130 : vector<1x4x1x16xf32> to vector<4x16xf32>
    %cst_82 = arith.constant dense<0.000000e+00> : vector<4x16xf32>
    %132 = tpu.matmul %0, %131, %cst_82 {dimension_numbers = #tpu.dot_dimension_numbers<[1], [0], [0], [1], [0, 0, 1, 1], [], []>} : vector<4x4xf32>, vector<4x16xf32>, vector<4x16xf32> -> vector<4x16xf32>
    %133 = vector.broadcast %1 : vector<4x1xf32> to vector<4x16xf32>
    %134 = arith.addf %132, %133 : vector<4x16xf32>
    %cst_83 = arith.constant 0.000000e+00 : f32
    %135 = vector.broadcast %cst_83 : f32 to vector<4x16xf32>
    %136 = arith.maximumf %134, %135 : vector<4x16xf32>
    %cst_84 = arith.constant dense<0.000000e+00> : vector<8x16xf32>
    %137 = tpu.matmul %2, %136, %cst_84 {dimension_numbers = #tpu.dot_dimension_numbers<[1], [0], [0], [1], [0, 0, 1, 1], [], []>} : vector<8x4xf32>, vector<4x16xf32>, vector<8x16xf32> -> vector<8x16xf32>
    %138 = vector.broadcast %3 : vector<8x1xf32> to vector<8x16xf32>
    %139 = arith.addf %137, %138 : vector<8x16xf32>
    %140 = arith.mulf %139, %139 : vector<8x16xf32>
    %cst_85 = arith.constant dense<0.000000e+00> : vector<8xf32>
    %141 = vector.multi_reduction <add>, %140, %cst_85 [1] : vector<8x16xf32> to vector<8xf32>
    %142 = vector.shape_cast %141 : vector<8xf32> to vector<8x1xf32>
    %cst_86 = arith.constant 1.000000e-24 : f32
    %143 = vector.broadcast %cst_86 : f32 to vector<8x1xf32>
    %144 = arith.maximumf %142, %143 : vector<8x1xf32>
    %145 = math.rsqrt %144 : vector<8x1xf32>
    %146 = vector.broadcast %145 : vector<8x1xf32> to vector<8x16xf32>
    %147 = arith.mulf %139, %146 : vector<8x16xf32>
    %c0_87 = arith.constant 0 : index
    %c0_88 = arith.constant 0 : index
    %c6_89 = arith.constant 6 : index
    %c0_90 = arith.constant 0 : index
    %148 = vector.load %arg7[%c0_87, %c0_88, %c6_89, %c0_90] : memref<1x8x16x16xf32, #tpu.memory_space<vmem>>, vector<1x8x1x16xf32>
    %149 = vector.shape_cast %148 : vector<1x8x1x16xf32> to vector<8x16xf32>
    %150 = vector.shape_cast %147 : vector<8x16xf32> to vector<1x8x1x16xf32>
    tpu.vector_store %arg7[%c0_87, %c0_88, %c6_89, %c0_90], %150 {strides = array<i32>} : memref<1x8x16x16xf32, #tpu.memory_space<vmem>>, vector<1x8x1x16xf32>,
    %c0_91 = arith.constant 0 : index
    %c0_92 = arith.constant 0 : index
    %c7 = arith.constant 7 : index
    %c0_93 = arith.constant 0 : index
    %151 = vector.load %arg2[%c0_91, %c0_92, %c7, %c0_93] : memref<1x4x16x16xf32, #tpu.memory_space<vmem>>, vector<1x4x1x16xf32>
    %152 = vector.shape_cast %151 : vector<1x4x1x16xf32> to vector<4x16xf32>
    %cst_94 = arith.constant dense<0.000000e+00> : vector<4x16xf32>
    %153 = tpu.matmul %0, %152, %cst_94 {dimension_numbers = #tpu.dot_dimension_numbers<[1], [0], [0], [1], [0, 0, 1, 1], [], []>} : vector<4x4xf32>, vector<4x16xf32>, vector<4x16xf32> -> vector<4x16xf32>
    %154 = vector.broadcast %1 : vector<4x1xf32> to vector<4x16xf32>
    %155 = arith.addf %153, %154 : vector<4x16xf32>
    %cst_95 = arith.constant 0.000000e+00 : f32
    %156 = vector.broadcast %cst_95 : f32 to vector<4x16xf32>
    %157 = arith.maximumf %155, %156 : vector<4x16xf32>
    %cst_96 = arith.constant dense<0.000000e+00> : vector<8x16xf32>
    %158 = tpu.matmul %2, %157, %cst_96 {dimension_numbers = #tpu.dot_dimension_numbers<[1], [0], [0], [1], [0, 0, 1, 1], [], []>} : vector<8x4xf32>, vector<4x16xf32>, vector<8x16xf32> -> vector<8x16xf32>
    %159 = vector.broadcast %3 : vector<8x1xf32> to vector<8x16xf32>
    %160 = arith.addf %158, %159 : vector<8x16xf32>
    %161 = arith.mulf %160, %160 : vector<8x16xf32>
    %cst_97 = arith.constant dense<0.000000e+00> : vector<8xf32>
    %162 = vector.multi_reduction <add>, %161, %cst_97 [1] : vector<8x16xf32> to vector<8xf32>
    %163 = vector.shape_cast %162 : vector<8xf32> to vector<8x1xf32>
    %cst_98 = arith.constant 1.000000e-24 : f32
    %164 = vector.broadcast %cst_98 : f32 to vector<8x1xf32>
    %165 = arith.maximumf %163, %164 : vector<8x1xf32>
    %166 = math.rsqrt %165 : vector<8x1xf32>
    %167 = vector.broadcast %166 : vector<8x1xf32> to vector<8x16xf32>
    %168 = arith.mulf %160, %167 : vector<8x16xf32>
    %c0_99 = arith.constant 0 : index
    %c0_100 = arith.constant 0 : index
    %c7_101 = arith.constant 7 : index
    %c0_102 = arith.constant 0 : index
    %169 = vector.load %arg7[%c0_99, %c0_100, %c7_101, %c0_102] : memref<1x8x16x16xf32, #tpu.memory_space<vmem>>, vector<1x8x1x16xf32>
    %170 = vector.shape_cast %169 : vector<1x8x1x16xf32> to vector<8x16xf32>
    %171 = vector.shape_cast %168 : vector<8x16xf32> to vector<1x8x1x16xf32>
    tpu.vector_store %arg7[%c0_99, %c0_100, %c7_101, %c0_102], %171 {strides = array<i32>} : memref<1x8x16x16xf32, #tpu.memory_space<vmem>>, vector<1x8x1x16xf32>,
    %c0_103 = arith.constant 0 : index
    %c0_104 = arith.constant 0 : index
    %c8 = arith.constant 8 : index
    %c0_105 = arith.constant 0 : index
    %172 = vector.load %arg2[%c0_103, %c0_104, %c8, %c0_105] : memref<1x4x16x16xf32, #tpu.memory_space<vmem>>, vector<1x4x1x16xf32>
    %173 = vector.shape_cast %172 : vector<1x4x1x16xf32> to vector<4x16xf32>
    %cst_106 = arith.constant dense<0.000000e+00> : vector<4x16xf32>
    %174 = tpu.matmul %0, %173, %cst_106 {dimension_numbers = #tpu.dot_dimension_numbers<[1], [0], [0], [1], [0, 0, 1, 1], [], []>} : vector<4x4xf32>, vector<4x16xf32>, vector<4x16xf32> -> vector<4x16xf32>
    %175 = vector.broadcast %1 : vector<4x1xf32> to vector<4x16xf32>
    %176 = arith.addf %174, %175 : vector<4x16xf32>
    %cst_107 = arith.constant 0.000000e+00 : f32
    %177 = vector.broadcast %cst_107 : f32 to vector<4x16xf32>
    %178 = arith.maximumf %176, %177 : vector<4x16xf32>
    %cst_108 = arith.constant dense<0.000000e+00> : vector<8x16xf32>
    %179 = tpu.matmul %2, %178, %cst_108 {dimension_numbers = #tpu.dot_dimension_numbers<[1], [0], [0], [1], [0, 0, 1, 1], [], []>} : vector<8x4xf32>, vector<4x16xf32>, vector<8x16xf32> -> vector<8x16xf32>
    %180 = vector.broadcast %3 : vector<8x1xf32> to vector<8x16xf32>
    %181 = arith.addf %179, %180 : vector<8x16xf32>
    %182 = arith.mulf %181, %181 : vector<8x16xf32>
    %cst_109 = arith.constant dense<0.000000e+00> : vector<8xf32>
    %183 = vector.multi_reduction <add>, %182, %cst_109 [1] : vector<8x16xf32> to vector<8xf32>
    %184 = vector.shape_cast %183 : vector<8xf32> to vector<8x1xf32>
    %cst_110 = arith.constant 1.000000e-24 : f32
    %185 = vector.broadcast %cst_110 : f32 to vector<8x1xf32>
    %186 = arith.maximumf %184, %185 : vector<8x1xf32>
    %187 = math.rsqrt %186 : vector<8x1xf32>
    %188 = vector.broadcast %187 : vector<8x1xf32> to vector<8x16xf32>
    %189 = arith.mulf %181, %188 : vector<8x16xf32>
    %c0_111 = arith.constant 0 : index
    %c0_112 = arith.constant 0 : index
    %c8_113 = arith.constant 8 : index
    %c0_114 = arith.constant 0 : index
    %190 = vector.load %arg7[%c0_111, %c0_112, %c8_113, %c0_114] : memref<1x8x16x16xf32, #tpu.memory_space<vmem>>, vector<1x8x1x16xf32>
    %191 = vector.shape_cast %190 : vector<1x8x1x16xf32> to vector<8x16xf32>
    %192 = vector.shape_cast %189 : vector<8x16xf32> to vector<1x8x1x16xf32>
    tpu.vector_store %arg7[%c0_111, %c0_112, %c8_113, %c0_114], %192 {strides = array<i32>} : memref<1x8x16x16xf32, #tpu.memory_space<vmem>>, vector<1x8x1x16xf32>,
    %c0_115 = arith.constant 0 : index
    %c0_116 = arith.constant 0 : index
    %c9 = arith.constant 9 : index
    %c0_117 = arith.constant 0 : index
    %193 = vector.load %arg2[%c0_115, %c0_116, %c9, %c0_117] : memref<1x4x16x16xf32, #tpu.memory_space<vmem>>, vector<1x4x1x16xf32>
    %194 = vector.shape_cast %193 : vector<1x4x1x16xf32> to vector<4x16xf32>
    %cst_118 = arith.constant dense<0.000000e+00> : vector<4x16xf32>
    %195 = tpu.matmul %0, %194, %cst_118 {dimension_numbers = #tpu.dot_dimension_numbers<[1], [0], [0], [1], [0, 0, 1, 1], [], []>} : vector<4x4xf32>, vector<4x16xf32>, vector<4x16xf32> -> vector<4x16xf32>
    %196 = vector.broadcast %1 : vector<4x1xf32> to vector<4x16xf32>
    %197 = arith.addf %195, %196 : vector<4x16xf32>
    %cst_119 = arith.constant 0.000000e+00 : f32
    %198 = vector.broadcast %cst_119 : f32 to vector<4x16xf32>
    %199 = arith.maximumf %197, %198 : vector<4x16xf32>
    %cst_120 = arith.constant dense<0.000000e+00> : vector<8x16xf32>
    %200 = tpu.matmul %2, %199, %cst_120 {dimension_numbers = #tpu.dot_dimension_numbers<[1], [0], [0], [1], [0, 0, 1, 1], [], []>} : vector<8x4xf32>, vector<4x16xf32>, vector<8x16xf32> -> vector<8x16xf32>
    %201 = vector.broadcast %3 : vector<8x1xf32> to vector<8x16xf32>
    %202 = arith.addf %200, %201 : vector<8x16xf32>
    %203 = arith.mulf %202, %202 : vector<8x16xf32>
    %cst_121 = arith.constant dense<0.000000e+00> : vector<8xf32>
    %204 = vector.multi_reduction <add>, %203, %cst_121 [1] : vector<8x16xf32> to vector<8xf32>
    %205 = vector.shape_cast %204 : vector<8xf32> to vector<8x1xf32>
    %cst_122 = arith.constant 1.000000e-24 : f32
    %206 = vector.broadcast %cst_122 : f32 to vector<8x1xf32>
    %207 = arith.maximumf %205, %206 : vector<8x1xf32>
    %208 = math.rsqrt %207 : vector<8x1xf32>
    %209 = vector.broadcast %208 : vector<8x1xf32> to vector<8x16xf32>
    %210 = arith.mulf %202, %209 : vector<8x16xf32>
    %c0_123 = arith.constant 0 : index
    %c0_124 = arith.constant 0 : index
    %c9_125 = arith.constant 9 : index
    %c0_126 = arith.constant 0 : index
    %211 = vector.load %arg7[%c0_123, %c0_124, %c9_125, %c0_126] : memref<1x8x16x16xf32, #tpu.memory_space<vmem>>, vector<1x8x1x16xf32>
    %212 = vector.shape_cast %211 : vector<1x8x1x16xf32> to vector<8x16xf32>
    %213 = vector.shape_cast %210 : vector<8x16xf32> to vector<1x8x1x16xf32>
    tpu.vector_store %arg7[%c0_123, %c0_124, %c9_125, %c0_126], %213 {strides = array<i32>} : memref<1x8x16x16xf32, #tpu.memory_space<vmem>>, vector<1x8x1x16xf32>,
    %c0_127 = arith.constant 0 : index
    %c0_128 = arith.constant 0 : index
    %c10 = arith.constant 10 : index
    %c0_129 = arith.constant 0 : index
    %214 = vector.load %arg2[%c0_127, %c0_128, %c10, %c0_129] : memref<1x4x16x16xf32, #tpu.memory_space<vmem>>, vector<1x4x1x16xf32>
    %215 = vector.shape_cast %214 : vector<1x4x1x16xf32> to vector<4x16xf32>
    %cst_130 = arith.constant dense<0.000000e+00> : vector<4x16xf32>
    %216 = tpu.matmul %0, %215, %cst_130 {dimension_numbers = #tpu.dot_dimension_numbers<[1], [0], [0], [1], [0, 0, 1, 1], [], []>} : vector<4x4xf32>, vector<4x16xf32>, vector<4x16xf32> -> vector<4x16xf32>
    %217 = vector.broadcast %1 : vector<4x1xf32> to vector<4x16xf32>
    %218 = arith.addf %216, %217 : vector<4x16xf32>
    %cst_131 = arith.constant 0.000000e+00 : f32
    %219 = vector.broadcast %cst_131 : f32 to vector<4x16xf32>
    %220 = arith.maximumf %218, %219 : vector<4x16xf32>
    %cst_132 = arith.constant dense<0.000000e+00> : vector<8x16xf32>
    %221 = tpu.matmul %2, %220, %cst_132 {dimension_numbers = #tpu.dot_dimension_numbers<[1], [0], [0], [1], [0, 0, 1, 1], [], []>} : vector<8x4xf32>, vector<4x16xf32>, vector<8x16xf32> -> vector<8x16xf32>
    %222 = vector.broadcast %3 : vector<8x1xf32> to vector<8x16xf32>
    %223 = arith.addf %221, %222 : vector<8x16xf32>
    %224 = arith.mulf %223, %223 : vector<8x16xf32>
    %cst_133 = arith.constant dense<0.000000e+00> : vector<8xf32>
    %225 = vector.multi_reduction <add>, %224, %cst_133 [1] : vector<8x16xf32> to vector<8xf32>
    %226 = vector.shape_cast %225 : vector<8xf32> to vector<8x1xf32>
    %cst_134 = arith.constant 1.000000e-24 : f32
    %227 = vector.broadcast %cst_134 : f32 to vector<8x1xf32>
    %228 = arith.maximumf %226, %227 : vector<8x1xf32>
    %229 = math.rsqrt %228 : vector<8x1xf32>
    %230 = vector.broadcast %229 : vector<8x1xf32> to vector<8x16xf32>
    %231 = arith.mulf %223, %230 : vector<8x16xf32>
    %c0_135 = arith.constant 0 : index
    %c0_136 = arith.constant 0 : index
    %c10_137 = arith.constant 10 : index
    %c0_138 = arith.constant 0 : index
    %232 = vector.load %arg7[%c0_135, %c0_136, %c10_137, %c0_138] : memref<1x8x16x16xf32, #tpu.memory_space<vmem>>, vector<1x8x1x16xf32>
    %233 = vector.shape_cast %232 : vector<1x8x1x16xf32> to vector<8x16xf32>
    %234 = vector.shape_cast %231 : vector<8x16xf32> to vector<1x8x1x16xf32>
    tpu.vector_store %arg7[%c0_135, %c0_136, %c10_137, %c0_138], %234 {strides = array<i32>} : memref<1x8x16x16xf32, #tpu.memory_space<vmem>>, vector<1x8x1x16xf32>,
    %c0_139 = arith.constant 0 : index
    %c0_140 = arith.constant 0 : index
    %c11 = arith.constant 11 : index
    %c0_141 = arith.constant 0 : index
    %235 = vector.load %arg2[%c0_139, %c0_140, %c11, %c0_141] : memref<1x4x16x16xf32, #tpu.memory_space<vmem>>, vector<1x4x1x16xf32>
    %236 = vector.shape_cast %235 : vector<1x4x1x16xf32> to vector<4x16xf32>
    %cst_142 = arith.constant dense<0.000000e+00> : vector<4x16xf32>
    %237 = tpu.matmul %0, %236, %cst_142 {dimension_numbers = #tpu.dot_dimension_numbers<[1], [0], [0], [1], [0, 0, 1, 1], [], []>} : vector<4x4xf32>, vector<4x16xf32>, vector<4x16xf32> -> vector<4x16xf32>
    %238 = vector.broadcast %1 : vector<4x1xf32> to vector<4x16xf32>
    %239 = arith.addf %237, %238 : vector<4x16xf32>
    %cst_143 = arith.constant 0.000000e+00 : f32
    %240 = vector.broadcast %cst_143 : f32 to vector<4x16xf32>
    %241 = arith.maximumf %239, %240 : vector<4x16xf32>
    %cst_144 = arith.constant dense<0.000000e+00> : vector<8x16xf32>
    %242 = tpu.matmul %2, %241, %cst_144 {dimension_numbers = #tpu.dot_dimension_numbers<[1], [0], [0], [1], [0, 0, 1, 1], [], []>} : vector<8x4xf32>, vector<4x16xf32>, vector<8x16xf32> -> vector<8x16xf32>
    %243 = vector.broadcast %3 : vector<8x1xf32> to vector<8x16xf32>
    %244 = arith.addf %242, %243 : vector<8x16xf32>
    %245 = arith.mulf %244, %244 : vector<8x16xf32>
    %cst_145 = arith.constant dense<0.000000e+00> : vector<8xf32>
    %246 = vector.multi_reduction <add>, %245, %cst_145 [1] : vector<8x16xf32> to vector<8xf32>
    %247 = vector.shape_cast %246 : vector<8xf32> to vector<8x1xf32>
    %cst_146 = arith.constant 1.000000e-24 : f32
    %248 = vector.broadcast %cst_146 : f32 to vector<8x1xf32>
    %249 = arith.maximumf %247, %248 : vector<8x1xf32>
    %250 = math.rsqrt %249 : vector<8x1xf32>
    %251 = vector.broadcast %250 : vector<8x1xf32> to vector<8x16xf32>
    %252 = arith.mulf %244, %251 : vector<8x16xf32>
    %c0_147 = arith.constant 0 : index
    %c0_148 = arith.constant 0 : index
    %c11_149 = arith.constant 11 : index
    %c0_150 = arith.constant 0 : index
    %253 = vector.load %arg7[%c0_147, %c0_148, %c11_149, %c0_150] : memref<1x8x16x16xf32, #tpu.memory_space<vmem>>, vector<1x8x1x16xf32>
    %254 = vector.shape_cast %253 : vector<1x8x1x16xf32> to vector<8x16xf32>
    %255 = vector.shape_cast %252 : vector<8x16xf32> to vector<1x8x1x16xf32>
    tpu.vector_store %arg7[%c0_147, %c0_148, %c11_149, %c0_150], %255 {strides = array<i32>} : memref<1x8x16x16xf32, #tpu.memory_space<vmem>>, vector<1x8x1x16xf32>,
    %c0_151 = arith.constant 0 : index
    %c0_152 = arith.constant 0 : index
    %c12 = arith.constant 12 : index
    %c0_153 = arith.constant 0 : index
    %256 = vector.load %arg2[%c0_151, %c0_152, %c12, %c0_153] : memref<1x4x16x16xf32, #tpu.memory_space<vmem>>, vector<1x4x1x16xf32>
    %257 = vector.shape_cast %256 : vector<1x4x1x16xf32> to vector<4x16xf32>
    %cst_154 = arith.constant dense<0.000000e+00> : vector<4x16xf32>
    %258 = tpu.matmul %0, %257, %cst_154 {dimension_numbers = #tpu.dot_dimension_numbers<[1], [0], [0], [1], [0, 0, 1, 1], [], []>} : vector<4x4xf32>, vector<4x16xf32>, vector<4x16xf32> -> vector<4x16xf32>
    %259 = vector.broadcast %1 : vector<4x1xf32> to vector<4x16xf32>
    %260 = arith.addf %258, %259 : vector<4x16xf32>
    %cst_155 = arith.constant 0.000000e+00 : f32
    %261 = vector.broadcast %cst_155 : f32 to vector<4x16xf32>
    %262 = arith.maximumf %260, %261 : vector<4x16xf32>
    %cst_156 = arith.constant dense<0.000000e+00> : vector<8x16xf32>
    %263 = tpu.matmul %2, %262, %cst_156 {dimension_numbers = #tpu.dot_dimension_numbers<[1], [0], [0], [1], [0, 0, 1, 1], [], []>} : vector<8x4xf32>, vector<4x16xf32>, vector<8x16xf32> -> vector<8x16xf32>
    %264 = vector.broadcast %3 : vector<8x1xf32> to vector<8x16xf32>
    %265 = arith.addf %263, %264 : vector<8x16xf32>
    %266 = arith.mulf %265, %265 : vector<8x16xf32>
    %cst_157 = arith.constant dense<0.000000e+00> : vector<8xf32>
    %267 = vector.multi_reduction <add>, %266, %cst_157 [1] : vector<8x16xf32> to vector<8xf32>
    %268 = vector.shape_cast %267 : vector<8xf32> to vector<8x1xf32>
    %cst_158 = arith.constant 1.000000e-24 : f32
    %269 = vector.broadcast %cst_158 : f32 to vector<8x1xf32>
    %270 = arith.maximumf %268, %269 : vector<8x1xf32>
    %271 = math.rsqrt %270 : vector<8x1xf32>
    %272 = vector.broadcast %271 : vector<8x1xf32> to vector<8x16xf32>
    %273 = arith.mulf %265, %272 : vector<8x16xf32>
    %c0_159 = arith.constant 0 : index
    %c0_160 = arith.constant 0 : index
    %c12_161 = arith.constant 12 : index
    %c0_162 = arith.constant 0 : index
    %274 = vector.load %arg7[%c0_159, %c0_160, %c12_161, %c0_162] : memref<1x8x16x16xf32, #tpu.memory_space<vmem>>, vector<1x8x1x16xf32>
    %275 = vector.shape_cast %274 : vector<1x8x1x16xf32> to vector<8x16xf32>
    %276 = vector.shape_cast %273 : vector<8x16xf32> to vector<1x8x1x16xf32>
    tpu.vector_store %arg7[%c0_159, %c0_160, %c12_161, %c0_162], %276 {strides = array<i32>} : memref<1x8x16x16xf32, #tpu.memory_space<vmem>>, vector<1x8x1x16xf32>,
    %c0_163 = arith.constant 0 : index
    %c0_164 = arith.constant 0 : index
    %c13 = arith.constant 13 : index
    %c0_165 = arith.constant 0 : index
    %277 = vector.load %arg2[%c0_163, %c0_164, %c13, %c0_165] : memref<1x4x16x16xf32, #tpu.memory_space<vmem>>, vector<1x4x1x16xf32>
    %278 = vector.shape_cast %277 : vector<1x4x1x16xf32> to vector<4x16xf32>
    %cst_166 = arith.constant dense<0.000000e+00> : vector<4x16xf32>
    %279 = tpu.matmul %0, %278, %cst_166 {dimension_numbers = #tpu.dot_dimension_numbers<[1], [0], [0], [1], [0, 0, 1, 1], [], []>} : vector<4x4xf32>, vector<4x16xf32>, vector<4x16xf32> -> vector<4x16xf32>
    %280 = vector.broadcast %1 : vector<4x1xf32> to vector<4x16xf32>
    %281 = arith.addf %279, %280 : vector<4x16xf32>
    %cst_167 = arith.constant 0.000000e+00 : f32
    %282 = vector.broadcast %cst_167 : f32 to vector<4x16xf32>
    %283 = arith.maximumf %281, %282 : vector<4x16xf32>
    %cst_168 = arith.constant dense<0.000000e+00> : vector<8x16xf32>
    %284 = tpu.matmul %2, %283, %cst_168 {dimension_numbers = #tpu.dot_dimension_numbers<[1], [0], [0], [1], [0, 0, 1, 1], [], []>} : vector<8x4xf32>, vector<4x16xf32>, vector<8x16xf32> -> vector<8x16xf32>
    %285 = vector.broadcast %3 : vector<8x1xf32> to vector<8x16xf32>
    %286 = arith.addf %284, %285 : vector<8x16xf32>
    %287 = arith.mulf %286, %286 : vector<8x16xf32>
    %cst_169 = arith.constant dense<0.000000e+00> : vector<8xf32>
    %288 = vector.multi_reduction <add>, %287, %cst_169 [1] : vector<8x16xf32> to vector<8xf32>
    %289 = vector.shape_cast %288 : vector<8xf32> to vector<8x1xf32>
    %cst_170 = arith.constant 1.000000e-24 : f32
    %290 = vector.broadcast %cst_170 : f32 to vector<8x1xf32>
    %291 = arith.maximumf %289, %290 : vector<8x1xf32>
    %292 = math.rsqrt %291 : vector<8x1xf32>
    %293 = vector.broadcast %292 : vector<8x1xf32> to vector<8x16xf32>
    %294 = arith.mulf %286, %293 : vector<8x16xf32>
    %c0_171 = arith.constant 0 : index
    %c0_172 = arith.constant 0 : index
    %c13_173 = arith.constant 13 : index
    %c0_174 = arith.constant 0 : index
    %295 = vector.load %arg7[%c0_171, %c0_172, %c13_173, %c0_174] : memref<1x8x16x16xf32, #tpu.memory_space<vmem>>, vector<1x8x1x16xf32>
    %296 = vector.shape_cast %295 : vector<1x8x1x16xf32> to vector<8x16xf32>
    %297 = vector.shape_cast %294 : vector<8x16xf32> to vector<1x8x1x16xf32>
    tpu.vector_store %arg7[%c0_171, %c0_172, %c13_173, %c0_174], %297 {strides = array<i32>} : memref<1x8x16x16xf32, #tpu.memory_space<vmem>>, vector<1x8x1x16xf32>,
    %c0_175 = arith.constant 0 : index
    %c0_176 = arith.constant 0 : index
    %c14 = arith.constant 14 : index
    %c0_177 = arith.constant 0 : index
    %298 = vector.load %arg2[%c0_175, %c0_176, %c14, %c0_177] : memref<1x4x16x16xf32, #tpu.memory_space<vmem>>, vector<1x4x1x16xf32>
    %299 = vector.shape_cast %298 : vector<1x4x1x16xf32> to vector<4x16xf32>
    %cst_178 = arith.constant dense<0.000000e+00> : vector<4x16xf32>
    %300 = tpu.matmul %0, %299, %cst_178 {dimension_numbers = #tpu.dot_dimension_numbers<[1], [0], [0], [1], [0, 0, 1, 1], [], []>} : vector<4x4xf32>, vector<4x16xf32>, vector<4x16xf32> -> vector<4x16xf32>
    %301 = vector.broadcast %1 : vector<4x1xf32> to vector<4x16xf32>
    %302 = arith.addf %300, %301 : vector<4x16xf32>
    %cst_179 = arith.constant 0.000000e+00 : f32
    %303 = vector.broadcast %cst_179 : f32 to vector<4x16xf32>
    %304 = arith.maximumf %302, %303 : vector<4x16xf32>
    %cst_180 = arith.constant dense<0.000000e+00> : vector<8x16xf32>
    %305 = tpu.matmul %2, %304, %cst_180 {dimension_numbers = #tpu.dot_dimension_numbers<[1], [0], [0], [1], [0, 0, 1, 1], [], []>} : vector<8x4xf32>, vector<4x16xf32>, vector<8x16xf32> -> vector<8x16xf32>
    %306 = vector.broadcast %3 : vector<8x1xf32> to vector<8x16xf32>
    %307 = arith.addf %305, %306 : vector<8x16xf32>
    %308 = arith.mulf %307, %307 : vector<8x16xf32>
    %cst_181 = arith.constant dense<0.000000e+00> : vector<8xf32>
    %309 = vector.multi_reduction <add>, %308, %cst_181 [1] : vector<8x16xf32> to vector<8xf32>
    %310 = vector.shape_cast %309 : vector<8xf32> to vector<8x1xf32>
    %cst_182 = arith.constant 1.000000e-24 : f32
    %311 = vector.broadcast %cst_182 : f32 to vector<8x1xf32>
    %312 = arith.maximumf %310, %311 : vector<8x1xf32>
    %313 = math.rsqrt %312 : vector<8x1xf32>
    %314 = vector.broadcast %313 : vector<8x1xf32> to vector<8x16xf32>
    %315 = arith.mulf %307, %314 : vector<8x16xf32>
    %c0_183 = arith.constant 0 : index
    %c0_184 = arith.constant 0 : index
    %c14_185 = arith.constant 14 : index
    %c0_186 = arith.constant 0 : index
    %316 = vector.load %arg7[%c0_183, %c0_184, %c14_185, %c0_186] : memref<1x8x16x16xf32, #tpu.memory_space<vmem>>, vector<1x8x1x16xf32>
    %317 = vector.shape_cast %316 : vector<1x8x1x16xf32> to vector<8x16xf32>
    %318 = vector.shape_cast %315 : vector<8x16xf32> to vector<1x8x1x16xf32>
    tpu.vector_store %arg7[%c0_183, %c0_184, %c14_185, %c0_186], %318 {strides = array<i32>} : memref<1x8x16x16xf32, #tpu.memory_space<vmem>>, vector<1x8x1x16xf32>,
    %c0_187 = arith.constant 0 : index
    %c0_188 = arith.constant 0 : index
    %c15 = arith.constant 15 : index
    %c0_189 = arith.constant 0 : index
    %319 = vector.load %arg2[%c0_187, %c0_188, %c15, %c0_189] : memref<1x4x16x16xf32, #tpu.memory_space<vmem>>, vector<1x4x1x16xf32>
    %320 = vector.shape_cast %319 : vector<1x4x1x16xf32> to vector<4x16xf32>
    %cst_190 = arith.constant dense<0.000000e+00> : vector<4x16xf32>
    %321 = tpu.matmul %0, %320, %cst_190 {dimension_numbers = #tpu.dot_dimension_numbers<[1], [0], [0], [1], [0, 0, 1, 1], [], []>} : vector<4x4xf32>, vector<4x16xf32>, vector<4x16xf32> -> vector<4x16xf32>
    %322 = vector.broadcast %1 : vector<4x1xf32> to vector<4x16xf32>
    %323 = arith.addf %321, %322 : vector<4x16xf32>
    %cst_191 = arith.constant 0.000000e+00 : f32
    %324 = vector.broadcast %cst_191 : f32 to vector<4x16xf32>
    %325 = arith.maximumf %323, %324 : vector<4x16xf32>
    %cst_192 = arith.constant dense<0.000000e+00> : vector<8x16xf32>
    %326 = tpu.matmul %2, %325, %cst_192 {dimension_numbers = #tpu.dot_dimension_numbers<[1], [0], [0], [1], [0, 0, 1, 1], [], []>} : vector<8x4xf32>, vector<4x16xf32>, vector<8x16xf32> -> vector<8x16xf32>
    %327 = vector.broadcast %3 : vector<8x1xf32> to vector<8x16xf32>
    %328 = arith.addf %326, %327 : vector<8x16xf32>
    %329 = arith.mulf %328, %328 : vector<8x16xf32>
    %cst_193 = arith.constant dense<0.000000e+00> : vector<8xf32>
    %330 = vector.multi_reduction <add>, %329, %cst_193 [1] : vector<8x16xf32> to vector<8xf32>
    %331 = vector.shape_cast %330 : vector<8xf32> to vector<8x1xf32>
    %cst_194 = arith.constant 1.000000e-24 : f32
    %332 = vector.broadcast %cst_194 : f32 to vector<8x1xf32>
    %333 = arith.maximumf %331, %332 : vector<8x1xf32>
    %334 = math.rsqrt %333 : vector<8x1xf32>
    %335 = vector.broadcast %334 : vector<8x1xf32> to vector<8x16xf32>
    %336 = arith.mulf %328, %335 : vector<8x16xf32>
    %c0_195 = arith.constant 0 : index
    %c0_196 = arith.constant 0 : index
    %c15_197 = arith.constant 15 : index
    %c0_198 = arith.constant 0 : index
    %337 = vector.load %arg7[%c0_195, %c0_196, %c15_197, %c0_198] : memref<1x8x16x16xf32, #tpu.memory_space<vmem>>, vector<1x8x1x16xf32>
    %338 = vector.shape_cast %337 : vector<1x8x1x16xf32> to vector<8x16xf32>
    %339 = vector.shape_cast %336 : vector<8x16xf32> to vector<1x8x1x16xf32>
    tpu.vector_store %arg7[%c0_195, %c0_196, %c15_197, %c0_198], %339 {strides = array<i32>} : memref<1x8x16x16xf32, #tpu.memory_space<vmem>>, vector<1x8x1x16xf32>,
    return
  }
  func.func @transform_0(%arg0: i32, %arg1: i32) -> (i32, i32, i32, i32) {
    %c0_i32 = arith.constant 0 : i32
    %c0_i32_0 = arith.constant 0 : i32
    %c0_i32_1 = arith.constant 0 : i32
    return %arg0, %c0_i32, %arg1, %c0_i32_0 : i32, i32, i32, i32
  }
  func.func @transform_1(%arg0: i32, %arg1: i32) -> (i32, i32) {
    %c0_i32 = arith.constant 0 : i32
    %c0_i32_0 = arith.constant 0 : i32
    %c0_i32_1 = arith.constant 0 : i32
    return %c0_i32, %c0_i32_0 : i32, i32
  }
  func.func @transform_2(%arg0: i32, %arg1: i32) -> (i32, i32) {
    %c0_i32 = arith.constant 0 : i32
    %c0_i32_0 = arith.constant 0 : i32
    %c0_i32_1 = arith.constant 0 : i32
    return %c0_i32, %c0_i32_0 : i32, i32
  }
  func.func @transform_3(%arg0: i32, %arg1: i32) -> (i32, i32) {
    %c0_i32 = arith.constant 0 : i32
    %c0_i32_0 = arith.constant 0 : i32
    %c0_i32_1 = arith.constant 0 : i32
    return %c0_i32, %c0_i32_0 : i32, i32
  }
  func.func @transform_4(%arg0: i32, %arg1: i32) -> (i32, i32) {
    %c0_i32 = arith.constant 0 : i32
    %c0_i32_0 = arith.constant 0 : i32
    %c0_i32_1 = arith.constant 0 : i32
    return %c0_i32, %c0_i32_0 : i32, i32
  }
  func.func @transform_5(%arg0: i32, %arg1: i32) -> (i32, i32, i32, i32) {
    %c0_i32 = arith.constant 0 : i32
    %c0_i32_0 = arith.constant 0 : i32
    %c0_i32_1 = arith.constant 0 : i32
    return %arg0, %c0_i32, %arg1, %c0_i32_0 : i32, i32, i32, i32
  }
}

</mosaic_0001>

<llo_original>
// kernel: tpu_custom_call.1
$region0: #{tpu_custom_call.1}
  #allocation0 [shape = 'u32[]', space=smem, size = 0x4, offset = 0x4, fixed_abs, tag = 'smem constant byte address 0x4 - core index']
  #allocation1 [shape = 'u32[144,128]{1,0:T(1,128)}', space=vmem, size = 0x12000, scoped, tag = 'internal scratch']
  %s0 = inlined_call_operand.hbm [shape: f32[2,4,16,16], index: 0, kind: input, shape index: {}]
  %s1 = inlined_call_operand.vmem [shape: f32[4,4], index: 1, kind: input, shape index: {}]
  %s2 = inlined_call_operand.vmem [shape: f32[4,1], index: 2, kind: input, shape index: {}]
  %s3 = inlined_call_operand.vmem [shape: f32[8,4], index: 3, kind: input, shape index: {}]
  %s4 = inlined_call_operand.vmem [shape: f32[8,1], index: 4, kind: input, shape index: {}]
  %s5 = inlined_call_operand.hbm [shape: f32[2,8,16,16], index: 5, kind: output, shape index: {}]
  %s6 = sld [smem:[#allocation0]]
  $region57: #{tpu_custom_call.1} parent=0
    _
  %s8 = ssub.s32 1, %s6
  %s9 = scalar_select 0, %s8, %s6
  $region1: #{tpu_custom_call.1} parent=0
    #allocation2 [shape = 'u8[65536]{0}', space=vmem, size = 0x10000, scoped, tag = 'input window, operand 0']
    #allocation3 [shape = 's32[2]{0}', space=sflag, size = 0x8, scoped, tag = 'scoped memory for tpu_custom_call.1']
    #allocation4 [shape = 's32[2]{0}', space=sflag, size = 0x8, scoped, tag = 'scoped memory for tpu_custom_call.1']
    #allocation5 [shape = 'u8[131072]{0}', space=vmem, size = 0x20000, scoped, tag = 'output window, operand 0']
    %10 = vsyncpa [#allocation3], 0
    %s11 = scalar_lea.sflag [#allocation3], 1
    %12 = vsyncpa %s11, 0
    %13 = vsyncpa [#allocation4], 0
    %s14 = scalar_lea.sflag [#allocation4], 1
    %15 = vsyncpa %s14, 0
    loop: start=0, step=1, limit=4
    $region2: #{tpu_custom_call.1} parent=1 // loop_pre_header
      _
    $region3: #{tpu_custom_call.1} parent=1 // loop_header
      %s17 = sphi 0, %s21
      %p18 = scmp.ge.s32.totalorder %s17, 4
      %s24 = sphi 0, %s36
      %s25 = sphi 0, %s32
      %s26 = sphi 0, %s24
      %s27 = sphi 0, %s25
      %s28 = sphi 0, %s26
      %s29 = sphi 0, %s27
      %s41 = sphi 0, %s43
      %s44 = sphi 0, %s41
      %s45 = sphi 0, %s44
      %s61 = sphi 0, %s45
      %s65 = sphi 0, %s65
      %s67 = sphi 0, %s65
      %s68 = sphi 0, %s67
      %s82 = sphi 0, %s68
      %s86 = sphi 0, %s86
      %s88 = sphi 0, %s86
      %s89 = sphi 0, %s88
      %s103 = sphi 0, %s89
      %s107 = sphi 0, %s107
      %s109 = sphi 0, %s107
      %s110 = sphi 0, %s109
      %s124 = sphi 0, %s110
      %s128 = sphi 0, %s128
      %s130 = sphi 0, %s128
      %s131 = sphi 0, %s130
      %s145 = sphi 0, %s131
      %s153 = sphi 0, %s155
      %s156 = sphi 0, %s153
      %s157 = sphi 0, %s156
      %s173 = sphi 0, %s157
    $region4: #{tpu_custom_call.1} parent=1 // loop_header_branch
      %20 = sbr.rel (%p18) target = $region8
    $region5: #{tpu_custom_call.1} parent=1 // loop_body
      %s22 = ssub.s32 %s17, 1
      %s23 = ssub.s32 %s17, 2
      %s30 = sadd.s32 1, %s25
      %p31 = scmp.ge.s32.totalorder %s30, 1
      %s32 = scalar_select %p31, 0, %s30
      %s33 = sadd.s32 1, %s24
      %s34 = scalar_select %p31, %s33, %s24
      %p35 = scmp.ge.s32.totalorder %s34, 2
      %s36 = scalar_select %p35, 0, %s34
      %s37 = ssub.s32 %s24, %s36
      %s38 = ssub.s32 %s25, %s32
      %s39 = sor.u32 %s37, %s38
      %p40 = scmp.eq.s32.totalorder %s39, 0
      %s42 = sadd.s32 %s41, 1
      %s43 = scalar_select %p40, %s41, %s42
      %p46 = pneg %p40
      %p47 = scmp.eq.s32.totalorder %s17, 1
      %p48 = por %p46, %p47
      %p49 = scmp.ne.s32.totalorder %s41, %s44
      %p50 = scmp.eq.s32.totalorder %s17, 0
      %p51 = por %p49, %p50
      %p52 = scmp.ne.s32.totalorder %s41, %s44
      %p53 = scmp.eq.s32.totalorder %s22, 1
      %p54 = por %p52, %p53
      %p55 = scmp.ne.s32.totalorder %s44, %s45
      %p56 = scmp.eq.s32.totalorder %s22, 0
      %p57 = por %p55, %p56
      %p58 = scmp.ne.s32.totalorder %s44, %s45
      %p59 = scmp.eq.s32.totalorder %s23, 1
      %p60 = por %p58, %p59
      %p62 = scmp.ne.s32.totalorder %s45, %s61
      %p63 = scmp.eq.s32.totalorder %s23, 0
      %p64 = por %p62, %p63
      %s66 = sadd.s32 %s65, 1
      %p69 = scmp.eq.s32.totalorder %s17, 1
      %p70 = scmp.ne.s32.totalorder %s65, %s67
      %p71 = scmp.eq.s32.totalorder %s17, 0
      %p72 = por %p70, %p71
      %p73 = scmp.ne.s32.totalorder %s65, %s67
      %p74 = scmp.eq.s32.totalorder %s22, 1
      %p75 = por %p73, %p74
      %p76 = scmp.ne.s32.totalorder %s67, %s68
      %p77 = scmp.eq.s32.totalorder %s22, 0
      %p78 = por %p76, %p77
      %p79 = scmp.ne.s32.totalorder %s67, %s68
      %p80 = scmp.eq.s32.totalorder %s23, 1
      %p81 = por %p79, %p80
      %p83 = scmp.ne.s32.totalorder %s68, %s82
      %p84 = scmp.eq.s32.totalorder %s23, 0
      %p85 = por %p83, %p84
      %s87 = sadd.s32 %s86, 1
      %p90 = scmp.eq.s32.totalorder %s17, 1
      %p91 = scmp.ne.s32.totalorder %s86, %s88
      %p92 = scmp.eq.s32.totalorder %s17, 0
      %p93 = por %p91, %p92
      %p94 = scmp.ne.s32.totalorder %s86, %s88
      %p95 = scmp.eq.s32.totalorder %s22, 1
      %p96 = por %p94, %p95
      %p97 = scmp.ne.s32.totalorder %s88, %s89
      %p98 = scmp.eq.s32.totalorder %s22, 0
      %p99 = por %p97, %p98
      %p100 = scmp.ne.s32.totalorder %s88, %s89
      %p101 = scmp.eq.s32.totalorder %s23, 1
      %p102 = por %p100, %p101
      %p104 = scmp.ne.s32.totalorder %s89, %s103
      %p105 = scmp.eq.s32.totalorder %s23, 0
      %p106 = por %p104, %p105
      %s108 = sadd.s32 %s107, 1
      %p111 = scmp.eq.s32.totalorder %s17, 1
      %p112 = scmp.ne.s32.totalorder %s107, %s109
      %p113 = scmp.eq.s32.totalorder %s17, 0
      %p114 = por %p112, %p113
      %p115 = scmp.ne.s32.totalorder %s107, %s109
      %p116 = scmp.eq.s32.totalorder %s22, 1
      %p117 = por %p115, %p116
      %p118 = scmp.ne.s32.totalorder %s109, %s110
      %p119 = scmp.eq.s32.totalorder %s22, 0
      %p120 = por %p118, %p119
      %p121 = scmp.ne.s32.totalorder %s109, %s110
      %p122 = scmp.eq.s32.totalorder %s23, 1
      %p123 = por %p121, %p122
      %p125 = scmp.ne.s32.totalorder %s110, %s124
      %p126 = scmp.eq.s32.totalorder %s23, 0
      %p127 = por %p125, %p126
      %s129 = sadd.s32 %s128, 1
      %p132 = scmp.eq.s32.totalorder %s17, 1
      %p133 = scmp.ne.s32.totalorder %s128, %s130
      %p134 = scmp.eq.s32.totalorder %s17, 0
      %p135 = por %p133, %p134
      %p136 = scmp.ne.s32.totalorder %s128, %s130
      %p137 = scmp.eq.s32.totalorder %s22, 1
      %p138 = por %p136, %p137
      %p139 = scmp.ne.s32.totalorder %s130, %s131
      %p140 = scmp.eq.s32.totalorder %s22, 0
      %p141 = por %p139, %p140
      %p142 = scmp.ne.s32.totalorder %s130, %s131
      %p143 = scmp.eq.s32.totalorder %s23, 1
      %p144 = por %p142, %p143
      %p146 = scmp.ne.s32.totalorder %s131, %s145
      %p147 = scmp.eq.s32.totalorder %s23, 0
      %p148 = por %p146, %p147
      %s149 = ssub.s32 %s24, %s36
      %s150 = ssub.s32 %s25, %s32
      %s151 = sor.u32 %s149, %s150
      %p152 = scmp.eq.s32.totalorder %s151, 0
      %s154 = sadd.s32 %s153, 1
      %s155 = scalar_select %p152, %s153, %s154
      %p158 = pneg %p152
      %p159 = scmp.eq.s32.totalorder %s17, 1
      %p160 = por %p158, %p159
      %p161 = scmp.ne.s32.totalorder %s153, %s156
      %p162 = scmp.eq.s32.totalorder %s17, 0
      %p163 = por %p161, %p162
      %p164 = scmp.ne.s32.totalorder %s153, %s156
      %p165 = scmp.eq.s32.totalorder %s22, 1
      %p166 = por %p164, %p165
      %p167 = scmp.ne.s32.totalorder %s156, %s157
      %p168 = scmp.eq.s32.totalorder %s22, 0
      %p169 = por %p167, %p168
      %p170 = scmp.ne.s32.totalorder %s156, %s157
      %p171 = scmp.eq.s32.totalorder %s23, 1
      %p172 = por %p170, %p171
      %p174 = scmp.ne.s32.totalorder %s157, %s173
      %p175 = scmp.eq.s32.totalorder %s23, 0
      %p176 = por %p174, %p175
      %p177 = scmp.le.s32.totalorder 1, %s17
      %p178 = scmp.lt.s32.totalorder %s17, 3
      %p179 = pnand %p177, %p178
      %p180 = pneg %p179
      // Predicated region
      $region9: #{tpu_custom_call.1} parent=5 // pred_check
        _
      $region10: #{tpu_custom_call.1} parent=5 // pred_check_branch
        %182 = sbr.rel (%p179) target = $region12
      $region11: #{tpu_custom_call.1} parent=5 // pred_region
        %s183 = ssub.s32 %s17, 1
        // Predicated region
        $region13: #{tpu_custom_call.1} parent=11 // pred_check
          %p184 = pneg %p78
        $region14: #{tpu_custom_call.1} parent=11 // pred_check_branch
          %186 = sbr.rel (%p184) target = $region16
        $region15: #{tpu_custom_call.1} parent=11 // pred_region
          _
        $region16: #{tpu_custom_call.1} parent=11 // pred_fallthru
          _
        // Predicated region
        $region17: #{tpu_custom_call.1} parent=11 // pred_check
          %p187 = pneg %p99
        $region18: #{tpu_custom_call.1} parent=11 // pred_check_branch
          %189 = sbr.rel (%p187) target = $region20
        $region19: #{tpu_custom_call.1} parent=11 // pred_region
          _
        $region20: #{tpu_custom_call.1} parent=11 // pred_fallthru
          _
        // Predicated region
        $region21: #{tpu_custom_call.1} parent=11 // pred_check
          %p190 = pneg %p120
        $region22: #{tpu_custom_call.1} parent=11 // pred_check_branch
          %192 = sbr.rel (%p190) target = $region24
        $region23: #{tpu_custom_call.1} parent=11 // pred_region
          _
        $region24: #{tpu_custom_call.1} parent=11 // pred_fallthru
          _
        // Predicated region
        $region25: #{tpu_custom_call.1} parent=11 // pred_check
          %p193 = pneg %p141
        $region26: #{tpu_custom_call.1} parent=11 // pred_check_branch
          %195 = sbr.rel (%p193) target = $region28
        $region27: #{tpu_custom_call.1} parent=11 // pred_region
          _
        $region28: #{tpu_custom_call.1} parent=11 // pred_fallthru
          _
      $region12: #{tpu_custom_call.1} parent=5 // pred_fallthru
        _
      %p196 = scmp.lt.s32.totalorder %s17, 2
      // Predicated region
      $region29: #{tpu_custom_call.1} parent=5 // pred_check
        %p197 = pneg %p196
      $region30: #{tpu_custom_call.1} parent=5 // pred_check_branch
        %199 = sbr.rel (%p197) target = $region32
      $region31: #{tpu_custom_call.1} parent=5 // pred_region
        // Predicated region
        $region33: #{tpu_custom_call.1} parent=31 // pred_check
          %p200 = pneg %p51
        $region34: #{tpu_custom_call.1} parent=31 // pred_check_branch
          %202 = sbr.rel (%p200) target = $region36
        $region35: #{tpu_custom_call.1} parent=31 // pred_region
          %s203 = sand.u32 %s41, 1
          %s204 = scalar_lea.sflag [#allocation3], %s203
          %s205 = sand.u32 %s41, 1
          %s206 = smul.addr %s205, 64
          %s207 = scalar_lea.vmem [#allocation2], %s206
          %s208 = smul.u32 2, %s25
          %s210 = ssub.s32 1024, 1024
          %211 = vsyncadd %s204, %s210
          %s212 = smul.addr %s24, 8
          %s213 = sadd.s32 %s208, %s212
          %s214 = smul.addr %s213, 128
          %s215 = scalar_lea.hbm %s0, %s214
          %s216 = sshll.u32 %s207, 4
          %s217 = int_to_ptr.vmem [resolvable:$true] %s216
          %222 = dma.hbm_to_vmem [thread:$0]  %s215, 1024, %s217, %s204, 128, 128, 8
        $region36: #{tpu_custom_call.1} parent=31 // pred_fallthru
          _
      $region32: #{tpu_custom_call.1} parent=5 // pred_fallthru
        _
      %p223 = scmp.le.s32.totalorder 1, %s17
      %p224 = scmp.lt.s32.totalorder %s17, 3
      %p225 = pnand %p223, %p224
      %p226 = pneg %p225
      // Predicated region
      $region37: #{tpu_custom_call.1} parent=5 // pred_check
        _
      $region38: #{tpu_custom_call.1} parent=5 // pred_check_branch
        %228 = sbr.rel (%p225) target = $region40
      $region39: #{tpu_custom_call.1} parent=5 // pred_region
        %s229 = ssub.s32 %s17, 1
        %s230 = sand.u32 %s44, 1
        %s231 = scalar_lea.sflag [#allocation3], %s230
        %s232 = sand.u32 %s44, 1
        %s233 = smul.addr %s232, 64
        %s234 = scalar_lea.vmem [#allocation2], %s233
        // Predicated region
        $region41: #{tpu_custom_call.1} parent=39 // pred_check
          %p235 = pneg %p57
        $region42: #{tpu_custom_call.1} parent=39 // pred_check_branch
          %237 = sbr.rel (%p235) target = $region44
        $region43: #{tpu_custom_call.1} parent=39 // pred_region
          %238 = dma.done %s231, 1024
        $region44: #{tpu_custom_call.1} parent=39 // pred_fallthru
          _
        %s239 = sand.u32 %s44, 1
        %s240 = scalar_lea.sflag [#allocation3], %s239
        %s241 = sand.u32 %s44, 1
        %s242 = smul.addr %s241, 64
        %s243 = scalar_lea.vmem [#allocation2], %s242
        %p244 = pneg %p57
        %p245 = pneg %p54
        %p246 = pneg %p78
        %p247 = pneg %p75
        %p248 = pneg %p99
        %p249 = pneg %p96
        %p250 = pneg %p120
        %p251 = pneg %p117
        %p252 = pneg %p141
        %p253 = pneg %p138
        %p254 = pneg %p169
        %p255 = pneg %p166
        %s256 = sand.u32 %s156, 1
        %s257 = scalar_lea.sflag [#allocation4], %s256
        %s258 = sand.u32 %s156, 1
        %s259 = smul.addr %s258, 128
        %s260 = scalar_lea.vmem [#allocation5], %s259
        %s261 = smul.u32 2, %s27
        %s262 = smul.u32 2, %s27
        %v263 = vld [vmem:[%s1] sm:$0xf]
        %v264 = vld [vmem:[%s2] sm:$0xf]
        %v265 = vld [vmem:[%s3] sm:$0xff]
        %v266 = vld [vmem:[%s4] sm:$0xff]
        %v267 = vld [vmem:[%s234] sm:$0x1]
        %v268 = vld [vmem:[%s234 + $0x10] sm:$0x1]
        %v269 = vld [vmem:[%s234 + $0x20] sm:$0x1]
        %v270 = vld [vmem:[%s234 + $0x30] sm:$0x1]
        %272 = vset.pattern.permute.xlu0 0
        %273 = vperm.xlu0 %272, %v264
        %v274 = vpop.permute.xlu0 %273
        %v280 = vrot.slane %v268, 7
        %vm281 = vcmask 1041409
        %v282 = vsel %vm281, %v280, %v267
        %v283 = vrot.slane %v269, 6
        %vm284 = vcmask 1042434
        %v285 = vsel %vm284, %v283, %v282
        %v286 = vrot.slane %v270, 5
        %vm287 = vcmask 1043459
        %v288 = vsel %vm287, %v286, %v285
        %vm289 = vcmask 31744
        %v291 = vsel %vm289, %v263, 0
        %vm293 = vcmask 1043456
        %v294 = vsel %vm293, %v288, 0
        %296 = vmatprep.subr.mxu0 0.0
        %297 = vmatpush1.msra.mxu0 0.0
        %298 = vmatprep.subr.mxu0 0.0
        %299 = vmatpush1.msra.mxu0 0.0
        %300 = vmatprep.subr.mxu0 0.0
        %301 = vmatpush1.msra.mxu0 0.0
        %302 = vmatprep.subr.mxu0 0.0
        %303 = vmatpush1.msra.mxu0 0.0
        %304 = vmatprep.subr.mxu0 0.0
        %305 = vmatpush1.msra.mxu0 0.0
        %306 = vmatprep.subr.mxu0 0.0
        %307 = vmatpush1.msra.mxu0 0.0
        %308 = vmatprep.subr.mxu0 0.0
        %309 = vmatpush1.msra.mxu0 0.0
        %310 = vmatprep.subr.mxu0 0.0
        %311 = vmatpush1.msra.mxu0 0.0
        %312 = vmatprep.subr.mxu0 0.0
        %313 = vmatpush1.msra.mxu0 0.0
        %314 = vmatprep.subr.mxu0 0.0
        %315 = vmatpush1.msra.mxu0 0.0
        %316 = vmatprep.subr.mxu0 0.0
        %317 = vmatpush1.msra.mxu0 0.0
        %318 = vmatprep.subr.mxu0 0.0
        %319 = vmatpush1.msra.mxu0 0.0
        %320 = vmatprep.subr.mxu0 0.0
        %321 = vmatpush1.msra.mxu0 0.0
        %322 = vmatprep.subr.mxu0 0.0
        %323 = vmatpush1.msra.mxu0 0.0
        %324 = vmatprep.subr.mxu0 0.0
        %325 = vmatpush1.msra.mxu0 0.0
        %326 = vmatprep.subr.mxu0 0.0
        %327 = vmatpush1.msra.mxu0 %v294
        %328 = vmatprep.subr.mxu0 0.0
        %329 = vmatpush2.msra.mxu0 0.0
        %330 = vmatprep.subr.mxu0 0.0
        %331 = vmatpush2.msra.mxu0 0.0
        %332 = vmatprep.subr.mxu0 0.0
        %333 = vmatpush2.msra.mxu0 0.0
        %334 = vmatprep.subr.mxu0 0.0
        %335 = vmatpush2.msra.mxu0 0.0
        %336 = vmatprep.subr.mxu0 0.0
        %337 = vmatpush2.msra.mxu0 0.0
        %338 = vmatprep.subr.mxu0 0.0
        %339 = vmatpush2.msra.mxu0 0.0
        %340 = vmatprep.subr.mxu0 0.0
        %341 = vmatpush2.msra.mxu0 0.0
        %342 = vmatprep.subr.mxu0 0.0
        %343 = vmatpush2.msra.mxu0 0.0
        %344 = vmatprep.subr.mxu0 0.0
        %345 = vmatpush2.msra.mxu0 0.0
        %346 = vmatprep.subr.mxu0 0.0
        %347 = vmatpush2.msra.mxu0 0.0
        %348 = vmatprep.subr.mxu0 0.0
        %349 = vmatpush2.msra.mxu0 0.0
        %350 = vmatprep.subr.mxu0 0.0
        %351 = vmatpush2.msra.mxu0 0.0
        %352 = vmatprep.subr.mxu0 0.0
        %353 = vmatpush2.msra.mxu0 0.0
        %354 = vmatprep.subr.mxu0 0.0
        %355 = vmatpush2.msra.mxu0 0.0
        %356 = vmatprep.subr.mxu0 0.0
        %357 = vmatpush2.msra.mxu0 0.0
        %358 = vmatprep.subr.mxu0 0.0
        %359 = vmatpush2.msra.mxu0 0.0
        %360 = vmatprep.mubr.f32.mxu0 0.0
        %361 = vmatmul.mubr.f32.gmra.mxu0 %v291
        %v362 = vpop.f32.mrf.mxu0
        %v363 = vadd.f32 %v274, %v362
        %v364 = vpop.f32.mrf.mxu0
        %365 = vdwg.mxu0
        %v366 = vmax.f32 %v363, 0.0
        %368 = vset.pattern.permute.xlu0 0
        %369 = vperm.xlu0 %368, %v266
        %v370 = vpop.permute.xlu0 %369
        %v373 = vsel %vm289, %v265, 0
        %v376 = vsel %vm293, %v366, 0
        %378 = vmatprep.subr.mxu0 0.0
        %379 = vmatpush1.msra.mxu0 0.0
        %380 = vmatprep.subr.mxu0 0.0
        %381 = vmatpush1.msra.mxu0 0.0
        %382 = vmatprep.subr.mxu0 0.0
        %383 = vmatpush1.msra.mxu0 0.0
        %384 = vmatprep.subr.mxu0 0.0
        %385 = vmatpush1.msra.mxu0 0.0
        %386 = vmatprep.subr.mxu0 0.0
        %387 = vmatpush1.msra.mxu0 0.0
        %388 = vmatprep.subr.mxu0 0.0
        %389 = vmatpush1.msra.mxu0 0.0
        %390 = vmatprep.subr.mxu0 0.0
        %391 = vmatpush1.msra.mxu0 0.0
        %392 = vmatprep.subr.mxu0 0.0
        %393 = vmatpush1.msra.mxu0 0.0
        %394 = vmatprep.subr.mxu0 0.0
        %395 = vmatpush1.msra.mxu0 0.0
        %396 = vmatprep.subr.mxu0 0.0
        %397 = vmatpush1.msra.mxu0 0.0
        %398 = vmatprep.subr.mxu0 0.0
        %399 = vmatpush1.msra.mxu0 0.0
        %400 = vmatprep.subr.mxu0 0.0
        %401 = vmatpush1.msra.mxu0 0.0
        %402 = vmatprep.subr.mxu0 0.0
        %403 = vmatpush1.msra.mxu0 0.0
        %404 = vmatprep.subr.mxu0 0.0
        %405 = vmatpush1.msra.mxu0 0.0
        %406 = vmatprep.subr.mxu0 0.0
        %407 = vmatpush1.msra.mxu0 0.0
        %408 = vmatprep.subr.mxu0 0.0
        %409 = vmatpush1.msra.mxu0 %v376
        %410 = vmatprep.subr.mxu0 0.0
        %411 = vmatpush2.msra.mxu0 0.0
        %412 = vmatprep.subr.mxu0 0.0
        %413 = vmatpush2.msra.mxu0 0.0
        %414 = vmatprep.subr.mxu0 0.0
        %415 = vmatpush2.msra.mxu0 0.0
        %416 = vmatprep.subr.mxu0 0.0
        %417 = vmatpush2.msra.mxu0 0.0
        %418 = vmatprep.subr.mxu0 0.0
        %419 = vmatpush2.msra.mxu0 0.0
        %420 = vmatprep.subr.mxu0 0.0
        %421 = vmatpush2.msra.mxu0 0.0
        %422 = vmatprep.subr.mxu0 0.0
        %423 = vmatpush2.msra.mxu0 0.0
        %424 = vmatprep.subr.mxu0 0.0
        %425 = vmatpush2.msra.mxu0 0.0
        %426 = vmatprep.subr.mxu0 0.0
        %427 = vmatpush2.msra.mxu0 0.0
        %428 = vmatprep.subr.mxu0 0.0
        %429 = vmatpush2.msra.mxu0 0.0
        %430 = vmatprep.subr.mxu0 0.0
        %431 = vmatpush2.msra.mxu0 0.0
        %432 = vmatprep.subr.mxu0 0.0
        %433 = vmatpush2.msra.mxu0 0.0
        %434 = vmatprep.subr.mxu0 0.0
        %435 = vmatpush2.msra.mxu0 0.0
        %436 = vmatprep.subr.mxu0 0.0
        %437 = vmatpush2.msra.mxu0 0.0
        %438 = vmatprep.subr.mxu0 0.0
        %439 = vmatpush2.msra.mxu0 0.0
        %440 = vmatprep.subr.mxu0 0.0
        %441 = vmatpush2.msra.mxu0 0.0
        %442 = vmatprep.mubr.f32.mxu0 0.0
        %443 = vmatmul.mubr.f32.gmra.mxu0 %v373
        %v444 = vpop.f32.mrf.mxu0
        %v445 = vadd.f32 %v370, %v444
        %v446 = vpop.f32.mrf.mxu0
        %447 = vdwg.mxu0
        %v448 = vmul.f32 %v445, %v445
        %vm449 = vcmask 130048
        %v450 = vsel %vm449, %v448, 0.0
        %451 = vadd.xlane.f32.xlu0 %v450
        %v452 = vpop.xlane.xlu0 %451
        %v453 = vmax.f32 %v452, 1e-24
        %v454 = vrsqrt.pop %v453
        %v455 = vmul.f32 %v445, %v454
        %v457 = vcombine.high %v455, %v455
        %v459 = vunpack.c.l.s4 1966171168
        %v460 = vunpack.c.0.s8 %v459
        %v461 = vlaneseq
        %v462 = vshrl.u32 %v461, 7
        %v463 = vsub.s32 %v460, %v462
        %v464 = vrot.slane %v455, %v463
        %v466 = vunpack.c.l.s4 1966171168
        %v467 = vunpack.c.0.s8 %v466
        %v468 = vlaneseq
        %v469 = vshrl.u32 %v468, 7
        %v470 = vsub.s32 %v467, %v469
        %v471 = vrot.slane %v457, %v470
        %v472 = vcombine.high %v464, %v464
        %v473 = vcombine.high %v471, %v471
        %v475 = vunpack.c.l.s4 1966171168
        %v476 = vunpack.c.0.s8 %v475
        %v477 = vlaneseq
        %v478 = vshrl.u32 %v477, 7
        %v479 = vsub.s32 %v476, %v478
        %v480 = vrot.slane %v464, %v479
        %v482 = vunpack.c.l.s4 1966171168
        %v483 = vunpack.c.0.s8 %v482
        %v484 = vlaneseq
        %v485 = vshrl.u32 %v484, 7
        %v486 = vsub.s32 %v483, %v485
        %v487 = vrot.slane %v471, %v486
        %v489 = vunpack.c.l.s4 1966171168
        %v490 = vunpack.c.0.s8 %v489
        %v491 = vlaneseq
        %v492 = vshrl.u32 %v491, 7
        %v493 = vsub.s32 %v490, %v492
        %v494 = vrot.slane %v472, %v493
        %v496 = vunpack.c.l.s4 1966171168
        %v497 = vunpack.c.0.s8 %v496
        %v498 = vlaneseq
        %v499 = vshrl.u32 %v498, 7
        %v500 = vsub.s32 %v497, %v499
        %v501 = vrot.slane %v473, %v500
        %v502 = vcombine.high %v480, %v480
        %v503 = vcombine.high %v487, %v487
        %v504 = vcombine.high %v494, %v494
        %v505 = vcombine.high %v501, %v501
        %vm514 = vcmask 122880
        %515 = vst.msk [vmem:[%s260] sm:$0x1] %vm514, %v480
        %516 = vst.msk [vmem:[%s260 + $0x10] sm:$0x1] %vm514, %v494
        %517 = vst.msk [vmem:[%s260 + $0x20] sm:$0x1] %vm514, %v502
        %518 = vst.msk [vmem:[%s260 + $0x30] sm:$0x1] %vm514, %v504
        %519 = vst.msk [vmem:[%s260 + $0x40] sm:$0x1] %vm514, %v487
        %520 = vst.msk [vmem:[%s260 + $0x50] sm:$0x1] %vm514, %v501
        %521 = vst.msk [vmem:[%s260 + $0x60] sm:$0x1] %vm514, %v503
        %522 = vst.msk [vmem:[%s260 + $0x70] sm:$0x1] %vm514, %v505
        %v523 = vld [vmem:[%s234 + $0x1] sm:$0x1]
        %v524 = vld [vmem:[%s234 + $0x11] sm:$0x1]
        %v525 = vld [vmem:[%s234 + $0x21] sm:$0x1]
        %v526 = vld [vmem:[%s234 + $0x31] sm:$0x1]
        %v531 = vrot.slane %v524, 7
        %v532 = vsel %vm281, %v531, %v523
        %v533 = vrot.slane %v525, 6
        %v534 = vsel %vm284, %v533, %v532
        %v535 = vrot.slane %v526, 5
        %v536 = vsel %vm287, %v535, %v534
        %v537 = vsel %vm293, %v536, 0
        %539 = vmatprep.subr.mxu0 0.0
        %540 = vmatpush1.msra.mxu0 0.0
        %541 = vmatprep.subr.mxu0 0.0
        %542 = vmatpush1.msra.mxu0 0.0
        %543 = vmatprep.subr.mxu0 0.0
        %544 = vmatpush1.msra.mxu0 0.0
        %545 = vmatprep.subr.mxu0 0.0
        %546 = vmatpush1.msra.mxu0 0.0
        %547 = vmatprep.subr.mxu0 0.0
        %548 = vmatpush1.msra.mxu0 0.0
        %549 = vmatprep.subr.mxu0 0.0
        %550 = vmatpush1.msra.mxu0 0.0
        %551 = vmatprep.subr.mxu0 0.0
        %552 = vmatpush1.msra.mxu0 0.0
        %553 = vmatprep.subr.mxu0 0.0
        %554 = vmatpush1.msra.mxu0 0.0
        %555 = vmatprep.subr.mxu0 0.0
        %556 = vmatpush1.msra.mxu0 0.0
        %557 = vmatprep.subr.mxu0 0.0
        %558 = vmatpush1.msra.mxu0 0.0
        %559 = vmatprep.subr.mxu0 0.0
        %560 = vmatpush1.msra.mxu0 0.0
        %561 = vmatprep.subr.mxu0 0.0
        %562 = vmatpush1.msra.mxu0 0.0
        %563 = vmatprep.subr.mxu0 0.0
        %564 = vmatpush1.msra.mxu0 0.0
        %565 = vmatprep.subr.mxu0 0.0
        %566 = vmatpush1.msra.mxu0 0.0
        %567 = vmatprep.subr.mxu0 0.0
        %568 = vmatpush1.msra.mxu0 0.0
        %569 = vmatprep.subr.mxu0 0.0
        %570 = vmatpush1.msra.mxu0 %v537
        %571 = vmatprep.subr.mxu0 0.0
        %572 = vmatpush2.msra.mxu0 0.0
        %573 = vmatprep.subr.mxu0 0.0
        %574 = vmatpush2.msra.mxu0 0.0
        %575 = vmatprep.subr.mxu0 0.0
        %576 = vmatpush2.msra.mxu0 0.0
        %577 = vmatprep.subr.mxu0 0.0
        %578 = vmatpush2.msra.mxu0 0.0
        %579 = vmatprep.subr.mxu0 0.0
        %580 = vmatpush2.msra.mxu0 0.0
        %581 = vmatprep.subr.mxu0 0.0
        %582 = vmatpush2.msra.mxu0 0.0
        %583 = vmatprep.subr.mxu0 0.0
        %584 = vmatpush2.msra.mxu0 0.0
        %585 = vmatprep.subr.mxu0 0.0
        %586 = vmatpush2.msra.mxu0 0.0
        %587 = vmatprep.subr.mxu0 0.0
        %588 = vmatpush2.msra.mxu0 0.0
        %589 = vmatprep.subr.mxu0 0.0
        %590 = vmatpush2.msra.mxu0 0.0
        %591 = vmatprep.subr.mxu0 0.0
        %592 = vmatpush2.msra.mxu0 0.0
        %593 = vmatprep.subr.mxu0 0.0
        %594 = vmatpush2.msra.mxu0 0.0
        %595 = vmatprep.subr.mxu0 0.0
        %596 = vmatpush2.msra.mxu0 0.0
        %597 = vmatprep.subr.mxu0 0.0
        %598 = vmatpush2.msra.mxu0 0.0
        %599 = vmatprep.subr.mxu0 0.0
        %600 = vmatpush2.msra.mxu0 0.0
        %601 = vmatprep.subr.mxu0 0.0
        %602 = vmatpush2.msra.mxu0 0.0
        %603 = vmatprep.mubr.f32.mxu0 0.0
        %604 = vmatmul.mubr.f32.gmra.mxu0 %v291
        %v605 = vpop.f32.mrf.mxu0
        %v606 = vadd.f32 %v274, %v605
        %v607 = vpop.f32.mrf.mxu0
        %608 = vdwg.mxu0
        %v609 = vmax.f32 %v606, 0.0
        %v611 = vsel %vm293, %v609, 0
        %613 = vmatprep.subr.mxu0 0.0
        %614 = vmatpush1.msra.mxu0 0.0
        %615 = vmatprep.subr.mxu0 0.0
        %616 = vmatpush1.msra.mxu0 0.0
        %617 = vmatprep.subr.mxu0 0.0
        %618 = vmatpush1.msra.mxu0 0.0
        %619 = vmatprep.subr.mxu0 0.0
        %620 = vmatpush1.msra.mxu0 0.0
        %621 = vmatprep.subr.mxu0 0.0
        %622 = vmatpush1.msra.mxu0 0.0
        %623 = vmatprep.subr.mxu0 0.0
        %624 = vmatpush1.msra.mxu0 0.0
        %625 = vmatprep.subr.mxu0 0.0
        %626 = vmatpush1.msra.mxu0 0.0
        %627 = vmatprep.subr.mxu0 0.0
        %628 = vmatpush1.msra.mxu0 0.0
        %629 = vmatprep.subr.mxu0 0.0
        %630 = vmatpush1.msra.mxu0 0.0
        %631 = vmatprep.subr.mxu0 0.0
        %632 = vmatpush1.msra.mxu0 0.0
        %633 = vmatprep.subr.mxu0 0.0
        %634 = vmatpush1.msra.mxu0 0.0
        %635 = vmatprep.subr.mxu0 0.0
        %636 = vmatpush1.msra.mxu0 0.0
        %637 = vmatprep.subr.mxu0 0.0
        %638 = vmatpush1.msra.mxu0 0.0
        %639 = vmatprep.subr.mxu0 0.0
        %640 = vmatpush1.msra.mxu0 0.0
        %641 = vmatprep.subr.mxu0 0.0
        %642 = vmatpush1.msra.mxu0 0.0
        %643 = vmatprep.subr.mxu0 0.0
        %644 = vmatpush1.msra.mxu0 %v611
        %645 = vmatprep.subr.mxu0 0.0
        %646 = vmatpush2.msra.mxu0 0.0
        %647 = vmatprep.subr.mxu0 0.0
        %648 = vmatpush2.msra.mxu0 0.0
        %649 = vmatprep.subr.mxu0 0.0
        %650 = vmatpush2.msra.mxu0 0.0
        %651 = vmatprep.subr.mxu0 0.0
        %652 = vmatpush2.msra.mxu0 0.0
        %653 = vmatprep.subr.mxu0 0.0
        %654 = vmatpush2.msra.mxu0 0.0
        %655 = vmatprep.subr.mxu0 0.0
        %656 = vmatpush2.msra.mxu0 0.0
        %657 = vmatprep.subr.mxu0 0.0
        %658 = vmatpush2.msra.mxu0 0.0
        %659 = vmatprep.subr.mxu0 0.0
        %660 = vmatpush2.msra.mxu0 0.0
        %661 = vmatprep.subr.mxu0 0.0
        %662 = vmatpush2.msra.mxu0 0.0
        %663 = vmatprep.subr.mxu0 0.0
        %664 = vmatpush2.msra.mxu0 0.0
        %665 = vmatprep.subr.mxu0 0.0
        %666 = vmatpush2.msra.mxu0 0.0
        %667 = vmatprep.subr.mxu0 0.0
        %668 = vmatpush2.msra.mxu0 0.0
        %669 = vmatprep.subr.mxu0 0.0
        %670 = vmatpush2.msra.mxu0 0.0
        %671 = vmatprep.subr.mxu0 0.0
        %672 = vmatpush2.msra.mxu0 0.0
        %673 = vmatprep.subr.mxu0 0.0
        %674 = vmatpush2.msra.mxu0 0.0
        %675 = vmatprep.subr.mxu0 0.0
        %676 = vmatpush2.msra.mxu0 0.0
        %677 = vmatprep.mubr.f32.mxu0 0.0
        %678 = vmatmul.mubr.f32.gmra.mxu0 %v373
        %v679 = vpop.f32.mrf.mxu0
        %v680 = vadd.f32 %v370, %v679
        %v681 = vpop.f32.mrf.mxu0
        %682 = vdwg.mxu0
        %v683 = vmul.f32 %v680, %v680
        %v684 = vsel %vm449, %v683, 0.0
        %685 = vadd.xlane.f32.xlu0 %v684
        %v686 = vpop.xlane.xlu0 %685
        %v687 = vmax.f32 %v686, 1e-24
        %v688 = vrsqrt.pop %v687
        %v689 = vmul.f32 %v680, %v688
        %v691 = vcombine.high %v689, %v689
        %v693 = vunpack.c.l.s4 1966171168
        %v694 = vunpack.c.0.s8 %v693
        %v695 = vlaneseq
        %v696 = vshrl.u32 %v695, 7
        %v697 = vsub.s32 %v694, %v696
        %v698 = vrot.slane %v689, %v697
        %v700 = vunpack.c.l.s4 1966171168
        %v701 = vunpack.c.0.s8 %v700
        %v702 = vlaneseq
        %v703 = vshrl.u32 %v702, 7
        %v704 = vsub.s32 %v701, %v703
        %v705 = vrot.slane %v691, %v704
        %v706 = vcombine.high %v698, %v698
        %v707 = vcombine.high %v705, %v705
        %v709 = vunpack.c.l.s4 1966171168
        %v710 = vunpack.c.0.s8 %v709
        %v711 = vlaneseq
        %v712 = vshrl.u32 %v711, 7
        %v713 = vsub.s32 %v710, %v712
        %v714 = vrot.slane %v698, %v713
        %v716 = vunpack.c.l.s4 1966171168
        %v717 = vunpack.c.0.s8 %v716
        %v718 = vlaneseq
        %v719 = vshrl.u32 %v718, 7
        %v720 = vsub.s32 %v717, %v719
        %v721 = vrot.slane %v705, %v720
        %v723 = vunpack.c.l.s4 1966171168
        %v724 = vunpack.c.0.s8 %v723
        %v725 = vlaneseq
        %v726 = vshrl.u32 %v725, 7
        %v727 = vsub.s32 %v724, %v726
        %v728 = vrot.slane %v706, %v727
        %v730 = vunpack.c.l.s4 1966171168
        %v731 = vunpack.c.0.s8 %v730
        %v732 = vlaneseq
        %v733 = vshrl.u32 %v732, 7
        %v734 = vsub.s32 %v731, %v733
        %v735 = vrot.slane %v707, %v734
        %v736 = vcombine.high %v714, %v714
        %v737 = vcombine.high %v721, %v721
        %v738 = vcombine.high %v728, %v728
        %v739 = vcombine.high %v735, %v735
        %748 = vst.msk [vmem:[%s260 + $0x1] sm:$0x1] %vm514, %v714
        %749 = vst.msk [vmem:[%s260 + $0x11] sm:$0x1] %vm514, %v728
        %750 = vst.msk [vmem:[%s260 + $0x21] sm:$0x1] %vm514, %v736
        %751 = vst.msk [vmem:[%s260 + $0x31] sm:$0x1] %vm514, %v738
        %752 = vst.msk [vmem:[%s260 + $0x41] sm:$0x1] %vm514, %v721
        %753 = vst.msk [vmem:[%s260 + $0x51] sm:$0x1] %vm514, %v735
        %754 = vst.msk [vmem:[%s260 + $0x61] sm:$0x1] %vm514, %v737
        %755 = vst.msk [vmem:[%s260 + $0x71] sm:$0x1] %vm514, %v739
        %v756 = vld [vmem:[%s234 + $0x2] sm:$0x1]
        %v757 = vld [vmem:[%s234 + $0x12] sm:$0x1]
        %v758 = vld [vmem:[%s234 + $0x22] sm:$0x1]
        %v759 = vld [vmem:[%s234 + $0x32] sm:$0x1]
        %v764 = vrot.slane %v757, 7
        %v765 = vsel %vm281, %v764, %v756
        %v766 = vrot.slane %v758, 6
        %v767 = vsel %vm284, %v766, %v765
        %v768 = vrot.slane %v759, 5
        %v769 = vsel %vm287, %v768, %v767
        %v770 = vsel %vm293, %v769, 0
        %772 = vmatprep.subr.mxu0 0.0
        %773 = vmatpush1.msra.mxu0 0.0
        %774 = vmatprep.subr.mxu0 0.0
        %775 = vmatpush1.msra.mxu0 0.0
        %776 = vmatprep.subr.mxu0 0.0
        %777 = vmatpush1.msra.mxu0 0.0
        %778 = vmatprep.subr.mxu0 0.0
        %779 = vmatpush1.msra.mxu0 0.0
        %780 = vmatprep.subr.mxu0 0.0
        %781 = vmatpush1.msra.mxu0 0.0
        %782 = vmatprep.subr.mxu0 0.0
        %783 = vmatpush1.msra.mxu0 0.0
        %784 = vmatprep.subr.mxu0 0.0
        %785 = vmatpush1.msra.mxu0 0.0
        %786 = vmatprep.subr.mxu0 0.0
        %787 = vmatpush1.msra.mxu0 0.0
        %788 = vmatprep.subr.mxu0 0.0
        %789 = vmatpush1.msra.mxu0 0.0
        %790 = vmatprep.subr.mxu0 0.0
        %791 = vmatpush1.msra.mxu0 0.0
        %792 = vmatprep.subr.mxu0 0.0
        %793 = vmatpush1.msra.mxu0 0.0
        %794 = vmatprep.subr.mxu0 0.0
        %795 = vmatpush1.msra.mxu0 0.0
        %796 = vmatprep.subr.mxu0 0.0
        %797 = vmatpush1.msra.mxu0 0.0
        %798 = vmatprep.subr.mxu0 0.0
        %799 = vmatpush1.msra.mxu0 0.0
        %800 = vmatprep.subr.mxu0 0.0
        %801 = vmatpush1.msra.mxu0 0.0
        %802 = vmatprep.subr.mxu0 0.0
        %803 = vmatpush1.msra.mxu0 %v770
        %804 = vmatprep.subr.mxu0 0.0
        %805 = vmatpush2.msra.mxu0 0.0
        %806 = vmatprep.subr.mxu0 0.0
        %807 = vmatpush2.msra.mxu0 0.0
        %808 = vmatprep.subr.mxu0 0.0
        %809 = vmatpush2.msra.mxu0 0.0
        %810 = vmatprep.subr.mxu0 0.0
        %811 = vmatpush2.msra.mxu0 0.0
        %812 = vmatprep.subr.mxu0 0.0
        %813 = vmatpush2.msra.mxu0 0.0
        %814 = vmatprep.subr.mxu0 0.0
        %815 = vmatpush2.msra.mxu0 0.0
        %816 = vmatprep.subr.mxu0 0.0
        %817 = vmatpush2.msra.mxu0 0.0
        %818 = vmatprep.subr.mxu0 0.0
        %819 = vmatpush2.msra.mxu0 0.0
        %820 = vmatprep.subr.mxu0 0.0
        %821 = vmatpush2.msra.mxu0 0.0
        %822 = vmatprep.subr.mxu0 0.0
        %823 = vmatpush2.msra.mxu0 0.0
        %824 = vmatprep.subr.mxu0 0.0
        %825 = vmatpush2.msra.mxu0 0.0
        %826 = vmatprep.subr.mxu0 0.0
        %827 = vmatpush2.msra.mxu0 0.0
        %828 = vmatprep.subr.mxu0 0.0
        %829 = vmatpush2.msra.mxu0 0.0
        %830 = vmatprep.subr.mxu0 0.0
        %831 = vmatpush2.msra.mxu0 0.0
        %832 = vmatprep.subr.mxu0 0.0
        %833 = vmatpush2.msra.mxu0 0.0
        %834 = vmatprep.subr.mxu0 0.0
        %835 = vmatpush2.msra.mxu0 0.0
        %836 = vmatprep.mubr.f32.mxu0 0.0
        %837 = vmatmul.mubr.f32.gmra.mxu0 %v291
        %v838 = vpop.f32.mrf.mxu0
        %v839 = vadd.f32 %v274, %v838
        %v840 = vpop.f32.mrf.mxu0
        %841 = vdwg.mxu0
        %v842 = vmax.f32 %v839, 0.0
        %v844 = vsel %vm293, %v842, 0
        %846 = vmatprep.subr.mxu0 0.0
        %847 = vmatpush1.msra.mxu0 0.0
        %848 = vmatprep.subr.mxu0 0.0
        %849 = vmatpush1.msra.mxu0 0.0
        %850 = vmatprep.subr.mxu0 0.0
        %851 = vmatpush1.msra.mxu0 0.0
        %852 = vmatprep.subr.mxu0 0.0
        %853 = vmatpush1.msra.mxu0 0.0
        %854 = vmatprep.subr.mxu0 0.0
        %855 = vmatpush1.msra.mxu0 0.0
        %856 = vmatprep.subr.mxu0 0.0
        %857 = vmatpush1.msra.mxu0 0.0
        %858 = vmatprep.subr.mxu0 0.0
        %859 = vmatpush1.msra.mxu0 0.0
        %860 = vmatprep.subr.mxu0 0.0
        %861 = vmatpush1.msra.mxu0 0.0
        %862 = vmatprep.subr.mxu0 0.0
        %863 = vmatpush1.msra.mxu0 0.0
        %864 = vmatprep.subr.mxu0 0.0
        %865 = vmatpush1.msra.mxu0 0.0
        %866 = vmatprep.subr.mxu0 0.0
        %867 = vmatpush1.msra.mxu0 0.0
        %868 = vmatprep.subr.mxu0 0.0
        %869 = vmatpush1.msra.mxu0 0.0
        %870 = vmatprep.subr.mxu0 0.0
        %871 = vmatpush1.msra.mxu0 0.0
        %872 = vmatprep.subr.mxu0 0.0
        %873 = vmatpush1.msra.mxu0 0.0
        %874 = vmatprep.subr.mxu0 0.0
        %875 = vmatpush1.msra.mxu0 0.0
        %876 = vmatprep.subr.mxu0 0.0
        %877 = vmatpush1.msra.mxu0 %v844
        %878 = vmatprep.subr.mxu0 0.0
        %879 = vmatpush2.msra.mxu0 0.0
        %880 = vmatprep.subr.mxu0 0.0
        %881 = vmatpush2.msra.mxu0 0.0
        %882 = vmatprep.subr.mxu0 0.0
        %883 = vmatpush2.msra.mxu0 0.0
        %884 = vmatprep.subr.mxu0 0.0
        %885 = vmatpush2.msra.mxu0 0.0
        %886 = vmatprep.subr.mxu0 0.0
        %887 = vmatpush2.msra.mxu0 0.0
        %888 = vmatprep.subr.mxu0 0.0
        %889 = vmatpush2.msra.mxu0 0.0
        %890 = vmatprep.subr.mxu0 0.0
        %891 = vmatpush2.msra.mxu0 0.0
        %892 = vmatprep.subr.mxu0 0.0
        %893 = vmatpush2.msra.mxu0 0.0
        %894 = vmatprep.subr.mxu0 0.0
        %895 = vmatpush2.msra.mxu0 0.0
        %896 = vmatprep.subr.mxu0 0.0
        %897 = vmatpush2.msra.mxu0 0.0
        %898 = vmatprep.subr.mxu0 0.0
        %899 = vmatpush2.msra.mxu0 0.0
        %900 = vmatprep.subr.mxu0 0.0
        %901 = vmatpush2.msra.mxu0 0.0
        %902 = vmatprep.subr.mxu0 0.0
        %903 = vmatpush2.msra.mxu0 0.0
        %904 = vmatprep.subr.mxu0 0.0
        %905 = vmatpush2.msra.mxu0 0.0
        %906 = vmatprep.subr.mxu0 0.0
        %907 = vmatpush2.msra.mxu0 0.0
        %908 = vmatprep.subr.mxu0 0.0
        %909 = vmatpush2.msra.mxu0 0.0
        %910 = vmatprep.mubr.f32.mxu0 0.0
        %911 = vmatmul.mubr.f32.gmra.mxu0 %v373
        %v912 = vpop.f32.mrf.mxu0
        %v913 = vadd.f32 %v370, %v912
        %v914 = vpop.f32.mrf.mxu0
        %915 = vdwg.mxu0
        %v916 = vmul.f32 %v913, %v913
        %v917 = vsel %vm449, %v916, 0.0
        %918 = vadd.xlane.f32.xlu0 %v917
        %v919 = vpop.xlane.xlu0 %918
        %v920 = vmax.f32 %v919, 1e-24
        %v921 = vrsqrt.pop %v920
        %v922 = vmul.f32 %v913, %v921
        %v924 = vcombine.high %v922, %v922
        %v926 = vunpack.c.l.s4 1966171168
        %v927 = vunpack.c.0.s8 %v926
        %v928 = vlaneseq
        %v929 = vshrl.u32 %v928, 7
        %v930 = vsub.s32 %v927, %v929
        %v931 = vrot.slane %v922, %v930
        %v933 = vunpack.c.l.s4 1966171168
        %v934 = vunpack.c.0.s8 %v933
        %v935 = vlaneseq
        %v936 = vshrl.u32 %v935, 7
        %v937 = vsub.s32 %v934, %v936
        %v938 = vrot.slane %v924, %v937
        %v939 = vcombine.high %v931, %v931
        %v940 = vcombine.high %v938, %v938
        %v942 = vunpack.c.l.s4 1966171168
        %v943 = vunpack.c.0.s8 %v942
        %v944 = vlaneseq
        %v945 = vshrl.u32 %v944, 7
        %v946 = vsub.s32 %v943, %v945
        %v947 = vrot.slane %v931, %v946
        %v949 = vunpack.c.l.s4 1966171168
        %v950 = vunpack.c.0.s8 %v949
        %v951 = vlaneseq
        %v952 = vshrl.u32 %v951, 7
        %v953 = vsub.s32 %v950, %v952
        %v954 = vrot.slane %v938, %v953
        %v956 = vunpack.c.l.s4 1966171168
        %v957 = vunpack.c.0.s8 %v956
        %v958 = vlaneseq
        %v959 = vshrl.u32 %v958, 7
        %v960 = vsub.s32 %v957, %v959
        %v961 = vrot.slane %v939, %v960
        %v963 = vunpack.c.l.s4 1966171168
        %v964 = vunpack.c.0.s8 %v963
        %v965 = vlaneseq
        %v966 = vshrl.u32 %v965, 7
        %v967 = vsub.s32 %v964, %v966
        %v968 = vrot.slane %v940, %v967
        %v969 = vcombine.high %v947, %v947
        %v970 = vcombine.high %v954, %v954
        %v971 = vcombine.high %v961, %v961
        %v972 = vcombine.high %v968, %v968
        %981 = vst.msk [vmem:[%s260 + $0x2] sm:$0x1] %vm514, %v947
        %982 = vst.msk [vmem:[%s260 + $0x12] sm:$0x1] %vm514, %v961
        %983 = vst.msk [vmem:[%s260 + $0x22] sm:$0x1] %vm514, %v969
        %984 = vst.msk [vmem:[%s260 + $0x32] sm:$0x1] %vm514, %v971
        %985 = vst.msk [vmem:[%s260 + $0x42] sm:$0x1] %vm514, %v954
        %986 = vst.msk [vmem:[%s260 + $0x52] sm:$0x1] %vm514, %v968
        %987 = vst.msk [vmem:[%s260 + $0x62] sm:$0x1] %vm514, %v970
        %988 = vst.msk [vmem:[%s260 + $0x72] sm:$0x1] %vm514, %v972
        %v989 = vld [vmem:[%s234 + $0x3] sm:$0x1]
        %v990 = vld [vmem:[%s234 + $0x13] sm:$0x1]
        %v991 = vld [vmem:[%s234 + $0x23] sm:$0x1]
        %v992 = vld [vmem:[%s234 + $0x33] sm:$0x1]
        %v997 = vrot.slane %v990, 7
        %v998 = vsel %vm281, %v997, %v989
        %v999 = vrot.slane %v991, 6
        %v1000 = vsel %vm284, %v999, %v998
        %v1001 = vrot.slane %v992, 5
        %v1002 = vsel %vm287, %v1001, %v1000
        %v1003 = vsel %vm293, %v1002, 0
        %1005 = vmatprep.subr.mxu0 0.0
        %1006 = vmatpush1.msra.mxu0 0.0
        %1007 = vmatprep.subr.mxu0 0.0
        %1008 = vmatpush1.msra.mxu0 0.0
        %1009 = vmatprep.subr.mxu0 0.0
        %1010 = vmatpush1.msra.mxu0 0.0
        %1011 = vmatprep.subr.mxu0 0.0
        %1012 = vmatpush1.msra.mxu0 0.0
        %1013 = vmatprep.subr.mxu0 0.0
        %1014 = vmatpush1.msra.mxu0 0.0
        %1015 = vmatprep.subr.mxu0 0.0
        %1016 = vmatpush1.msra.mxu0 0.0
        %1017 = vmatprep.subr.mxu0 0.0
        %1018 = vmatpush1.msra.mxu0 0.0
        %1019 = vmatprep.subr.mxu0 0.0
        %1020 = vmatpush1.msra.mxu0 0.0
        %1021 = vmatprep.subr.mxu0 0.0
        %1022 = vmatpush1.msra.mxu0 0.0
        %1023 = vmatprep.subr.mxu0 0.0
        %1024 = vmatpush1.msra.mxu0 0.0
        %1025 = vmatprep.subr.mxu0 0.0
        %1026 = vmatpush1.msra.mxu0 0.0
        %1027 = vmatprep.subr.mxu0 0.0
        %1028 = vmatpush1.msra.mxu0 0.0
        %1029 = vmatprep.subr.mxu0 0.0
        %1030 = vmatpush1.msra.mxu0 0.0
        %1031 = vmatprep.subr.mxu0 0.0
        %1032 = vmatpush1.msra.mxu0 0.0
        %1033 = vmatprep.subr.mxu0 0.0
        %1034 = vmatpush1.msra.mxu0 0.0
        %1035 = vmatprep.subr.mxu0 0.0
        %1036 = vmatpush1.msra.mxu0 %v1003
        %1037 = vmatprep.subr.mxu0 0.0
        %1038 = vmatpush2.msra.mxu0 0.0
        %1039 = vmatprep.subr.mxu0 0.0
        %1040 = vmatpush2.msra.mxu0 0.0
        %1041 = vmatprep.subr.mxu0 0.0
        %1042 = vmatpush2.msra.mxu0 0.0
        %1043 = vmatprep.subr.mxu0 0.0
        %1044 = vmatpush2.msra.mxu0 0.0
        %1045 = vmatprep.subr.mxu0 0.0
        %1046 = vmatpush2.msra.mxu0 0.0
        %1047 = vmatprep.subr.mxu0 0.0
        %1048 = vmatpush2.msra.mxu0 0.0
        %1049 = vmatprep.subr.mxu0 0.0
        %1050 = vmatpush2.msra.mxu0 0.0
        %1051 = vmatprep.subr.mxu0 0.0
        %1052 = vmatpush2.msra.mxu0 0.0
        %1053 = vmatprep.subr.mxu0 0.0
        %1054 = vmatpush2.msra.mxu0 0.0
        %1055 = vmatprep.subr.mxu0 0.0
        %1056 = vmatpush2.msra.mxu0 0.0
        %1057 = vmatprep.subr.mxu0 0.0
        %1058 = vmatpush2.msra.mxu0 0.0
        %1059 = vmatprep.subr.mxu0 0.0
        %1060 = vmatpush2.msra.mxu0 0.0
        %1061 = vmatprep.subr.mxu0 0.0
        %1062 = vmatpush2.msra.mxu0 0.0
        %1063 = vmatprep.subr.mxu0 0.0
        %1064 = vmatpush2.msra.mxu0 0.0
        %1065 = vmatprep.subr.mxu0 0.0
        %1066 = vmatpush2.msra.mxu0 0.0
        %1067 = vmatprep.subr.mxu0 0.0
        %1068 = vmatpush2.msra.mxu0 0.0
        %1069 = vmatprep.mubr.f32.mxu0 0.0
        %1070 = vmatmul.mubr.f32.gmra.mxu0 %v291
        %v1071 = vpop.f32.mrf.mxu0
        %v1072 = vadd.f32 %v274, %v1071
        %v1073 = vpop.f32.mrf.mxu0
        %1074 = vdwg.mxu0
        %v1075 = vmax.f32 %v1072, 0.0
        %v1077 = vsel %vm293, %v1075, 0
        %1079 = vmatprep.subr.mxu0 0.0
        %1080 = vmatpush1.msra.mxu0 0.0
        %1081 = vmatprep.subr.mxu0 0.0
        %1082 = vmatpush1.msra.mxu0 0.0
        %1083 = vmatprep.subr.mxu0 0.0
        %1084 = vmatpush1.msra.mxu0 0.0
        %1085 = vmatprep.subr.mxu0 0.0
        %1086 = vmatpush1.msra.mxu0 0.0
        %1087 = vmatprep.subr.mxu0 0.0
        %1088 = vmatpush1.msra.mxu0 0.0
        %1089 = vmatprep.subr.mxu0 0.0
        %1090 = vmatpush1.msra.mxu0 0.0
        %1091 = vmatprep.subr.mxu0 0.0
        %1092 = vmatpush1.msra.mxu0 0.0
        %1093 = vmatprep.subr.mxu0 0.0
        %1094 = vmatpush1.msra.mxu0 0.0
        %1095 = vmatprep.subr.mxu0 0.0
        %1096 = vmatpush1.msra.mxu0 0.0
        %1097 = vmatprep.subr.mxu0 0.0
        %1098 = vmatpush1.msra.mxu0 0.0
        %1099 = vmatprep.subr.mxu0 0.0
        %1100 = vmatpush1.msra.mxu0 0.0
        %1101 = vmatprep.subr.mxu0 0.0
        %1102 = vmatpush1.msra.mxu0 0.0
        %1103 = vmatprep.subr.mxu0 0.0
        %1104 = vmatpush1.msra.mxu0 0.0
        %1105 = vmatprep.subr.mxu0 0.0
        %1106 = vmatpush1.msra.mxu0 0.0
        %1107 = vmatprep.subr.mxu0 0.0
        %1108 = vmatpush1.msra.mxu0 0.0
        %1109 = vmatprep.subr.mxu0 0.0
        %1110 = vmatpush1.msra.mxu0 %v1077
        %1111 = vmatprep.subr.mxu0 0.0
        %1112 = vmatpush2.msra.mxu0 0.0
        %1113 = vmatprep.subr.mxu0 0.0
        %1114 = vmatpush2.msra.mxu0 0.0
        %1115 = vmatprep.subr.mxu0 0.0
        %1116 = vmatpush2.msra.mxu0 0.0
        %1117 = vmatprep.subr.mxu0 0.0
        %1118 = vmatpush2.msra.mxu0 0.0
        %1119 = vmatprep.subr.mxu0 0.0
        %1120 = vmatpush2.msra.mxu0 0.0
        %1121 = vmatprep.subr.mxu0 0.0
        %1122 = vmatpush2.msra.mxu0 0.0
        %1123 = vmatprep.subr.mxu0 0.0
        %1124 = vmatpush2.msra.mxu0 0.0
        %1125 = vmatprep.subr.mxu0 0.0
        %1126 = vmatpush2.msra.mxu0 0.0
        %1127 = vmatprep.subr.mxu0 0.0
        %1128 = vmatpush2.msra.mxu0 0.0
        %1129 = vmatprep.subr.mxu0 0.0
        %1130 = vmatpush2.msra.mxu0 0.0
        %1131 = vmatprep.subr.mxu0 0.0
        %1132 = vmatpush2.msra.mxu0 0.0
        %1133 = vmatprep.subr.mxu0 0.0
        %1134 = vmatpush2.msra.mxu0 0.0
        %1135 = vmatprep.subr.mxu0 0.0
        %1136 = vmatpush2.msra.mxu0 0.0
        %1137 = vmatprep.subr.mxu0 0.0
        %1138 = vmatpush2.msra.mxu0 0.0
        %1139 = vmatprep.subr.mxu0 0.0
        %1140 = vmatpush2.msra.mxu0 0.0
        %1141 = vmatprep.subr.mxu0 0.0
        %1142 = vmatpush2.msra.mxu0 0.0
        %1143 = vmatprep.mubr.f32.mxu0 0.0
        %1144 = vmatmul.mubr.f32.gmra.mxu0 %v373
        %v1145 = vpop.f32.mrf.mxu0
        %v1146 = vadd.f32 %v370, %v1145
        %v1147 = vpop.f32.mrf.mxu0
        %1148 = vdwg.mxu0
        %v1149 = vmul.f32 %v1146, %v1146
        %v1150 = vsel %vm449, %v1149, 0.0
        %1151 = vadd.xlane.f32.xlu0 %v1150
        %v1152 = vpop.xlane.xlu0 %1151
        %v1153 = vmax.f32 %v1152, 1e-24
        %v1154 = vrsqrt.pop %v1153
        %v1155 = vmul.f32 %v1146, %v1154
        %v1157 = vcombine.high %v1155, %v1155
        %v1159 = vunpack.c.l.s4 1966171168
        %v1160 = vunpack.c.0.s8 %v1159
        %v1161 = vlaneseq
        %v1162 = vshrl.u32 %v1161, 7
        %v1163 = vsub.s32 %v1160, %v1162
        %v1164 = vrot.slane %v1155, %v1163
        %v1166 = vunpack.c.l.s4 1966171168
        %v1167 = vunpack.c.0.s8 %v1166
        %v1168 = vlaneseq
        %v1169 = vshrl.u32 %v1168, 7
        %v1170 = vsub.s32 %v1167, %v1169
        %v1171 = vrot.slane %v1157, %v1170
        %v1172 = vcombine.high %v1164, %v1164
        %v1173 = vcombine.high %v1171, %v1171
        %v1175 = vunpack.c.l.s4 1966171168
        %v1176 = vunpack.c.0.s8 %v1175
        %v1177 = vlaneseq
        %v1178 = vshrl.u32 %v1177, 7
        %v1179 = vsub.s32 %v1176, %v1178
        %v1180 = vrot.slane %v1164, %v1179
        %v1182 = vunpack.c.l.s4 1966171168
        %v1183 = vunpack.c.0.s8 %v1182
        %v1184 = vlaneseq
        %v1185 = vshrl.u32 %v1184, 7
        %v1186 = vsub.s32 %v1183, %v1185
        %v1187 = vrot.slane %v1171, %v1186
        %v1189 = vunpack.c.l.s4 1966171168
        %v1190 = vunpack.c.0.s8 %v1189
        %v1191 = vlaneseq
        %v1192 = vshrl.u32 %v1191, 7
        %v1193 = vsub.s32 %v1190, %v1192
        %v1194 = vrot.slane %v1172, %v1193
        %v1196 = vunpack.c.l.s4 1966171168
        %v1197 = vunpack.c.0.s8 %v1196
        %v1198 = vlaneseq
        %v1199 = vshrl.u32 %v1198, 7
        %v1200 = vsub.s32 %v1197, %v1199
        %v1201 = vrot.slane %v1173, %v1200
        %v1202 = vcombine.high %v1180, %v1180
        %v1203 = vcombine.high %v1187, %v1187
        %v1204 = vcombine.high %v1194, %v1194
        %v1205 = vcombine.high %v1201, %v1201
        %1214 = vst.msk [vmem:[%s260 + $0x3] sm:$0x1] %vm514, %v1180
        %1215 = vst.msk [vmem:[%s260 + $0x13] sm:$0x1] %vm514, %v1194
        %1216 = vst.msk [vmem:[%s260 + $0x23] sm:$0x1] %vm514, %v1202
        %1217 = vst.msk [vmem:[%s260 + $0x33] sm:$0x1] %vm514, %v1204
        %1218 = vst.msk [vmem:[%s260 + $0x43] sm:$0x1] %vm514, %v1187
        %1219 = vst.msk [vmem:[%s260 + $0x53] sm:$0x1] %vm514, %v1201
        %1220 = vst.msk [vmem:[%s260 + $0x63] sm:$0x1] %vm514, %v1203
        %1221 = vst.msk [vmem:[%s260 + $0x73] sm:$0x1] %vm514, %v1205
        %v1222 = vld [vmem:[%s234 + $0x4] sm:$0x1]
        %v1223 = vld [vmem:[%s234 + $0x14] sm:$0x1]
        %v1224 = vld [vmem:[%s234 + $0x24] sm:$0x1]
        %v1225 = vld [vmem:[%s234 + $0x34] sm:$0x1]
        %v1230 = vrot.slane %v1223, 7
        %v1231 = vsel %vm281, %v1230, %v1222
        %v1232 = vrot.slane %v1224, 6
        %v1233 = vsel %vm284, %v1232, %v1231
        %v1234 = vrot.slane %v1225, 5
        %v1235 = vsel %vm287, %v1234, %v1233
        %v1236 = vsel %vm293, %v1235, 0
        %1238 = vmatprep.subr.mxu0 0.0
        %1239 = vmatpush1.msra.mxu0 0.0
        %1240 = vmatprep.subr.mxu0 0.0
        %1241 = vmatpush1.msra.mxu0 0.0
        %1242 = vmatprep.subr.mxu0 0.0
        %1243 = vmatpush1.msra.mxu0 0.0
        %1244 = vmatprep.subr.mxu0 0.0
        %1245 = vmatpush1.msra.mxu0 0.0
        %1246 = vmatprep.subr.mxu0 0.0
        %1247 = vmatpush1.msra.mxu0 0.0
        %1248 = vmatprep.subr.mxu0 0.0
        %1249 = vmatpush1.msra.mxu0 0.0
        %1250 = vmatprep.subr.mxu0 0.0
        %1251 = vmatpush1.msra.mxu0 0.0
        %1252 = vmatprep.subr.mxu0 0.0
        %1253 = vmatpush1.msra.mxu0 0.0
        %1254 = vmatprep.subr.mxu0 0.0
        %1255 = vmatpush1.msra.mxu0 0.0
        %1256 = vmatprep.subr.mxu0 0.0
        %1257 = vmatpush1.msra.mxu0 0.0
        %1258 = vmatprep.subr.mxu0 0.0
        %1259 = vmatpush1.msra.mxu0 0.0
        %1260 = vmatprep.subr.mxu0 0.0
        %1261 = vmatpush1.msra.mxu0 0.0
        %1262 = vmatprep.subr.mxu0 0.0
        %1263 = vmatpush1.msra.mxu0 0.0
        %1264 = vmatprep.subr.mxu0 0.0
        %1265 = vmatpush1.msra.mxu0 0.0
        %1266 = vmatprep.subr.mxu0 0.0
        %1267 = vmatpush1.msra.mxu0 0.0
        %1268 = vmatprep.subr.mxu0 0.0
        %1269 = vmatpush1.msra.mxu0 %v1236
        %1270 = vmatprep.subr.mxu0 0.0
        %1271 = vmatpush2.msra.mxu0 0.0
        %1272 = vmatprep.subr.mxu0 0.0
        %1273 = vmatpush2.msra.mxu0 0.0
        %1274 = vmatprep.subr.mxu0 0.0
        %1275 = vmatpush2.msra.mxu0 0.0
        %1276 = vmatprep.subr.mxu0 0.0
        %1277 = vmatpush2.msra.mxu0 0.0
        %1278 = vmatprep.subr.mxu0 0.0
        %1279 = vmatpush2.msra.mxu0 0.0
        %1280 = vmatprep.subr.mxu0 0.0
        %1281 = vmatpush2.msra.mxu0 0.0
        %1282 = vmatprep.subr.mxu0 0.0
        %1283 = vmatpush2.msra.mxu0 0.0
        %1284 = vmatprep.subr.mxu0 0.0
        %1285 = vmatpush2.msra.mxu0 0.0
        %1286 = vmatprep.subr.mxu0 0.0
        %1287 = vmatpush2.msra.mxu0 0.0
        %1288 = vmatprep.subr.mxu0 0.0
        %1289 = vmatpush2.msra.mxu0 0.0
        %1290 = vmatprep.subr.mxu0 0.0
        %1291 = vmatpush2.msra.mxu0 0.0
        %1292 = vmatprep.subr.mxu0 0.0
        %1293 = vmatpush2.msra.mxu0 0.0
        %1294 = vmatprep.subr.mxu0 0.0
        %1295 = vmatpush2.msra.mxu0 0.0
        %1296 = vmatprep.subr.mxu0 0.0
        %1297 = vmatpush2.msra.mxu0 0.0
        %1298 = vmatprep.subr.mxu0 0.0
        %1299 = vmatpush2.msra.mxu0 0.0
        %1300 = vmatprep.subr.mxu0 0.0
        %1301 = vmatpush2.msra.mxu0 0.0
        %1302 = vmatprep.mubr.f32.mxu0 0.0
        %1303 = vmatmul.mubr.f32.gmra.mxu0 %v291
        %v1304 = vpop.f32.mrf.mxu0
        %v1305 = vadd.f32 %v274, %v1304
        %v1306 = vpop.f32.mrf.mxu0
        %1307 = vdwg.mxu0
        %v1308 = vmax.f32 %v1305, 0.0
        %v1310 = vsel %vm293, %v1308, 0
        %1312 = vmatprep.subr.mxu0 0.0
        %1313 = vmatpush1.msra.mxu0 0.0
        %1314 = vmatprep.subr.mxu0 0.0
        %1315 = vmatpush1.msra.mxu0 0.0
        %1316 = vmatprep.subr.mxu0 0.0
        %1317 = vmatpush1.msra.mxu0 0.0
        %1318 = vmatprep.subr.mxu0 0.0
        %1319 = vmatpush1.msra.mxu0 0.0
        %1320 = vmatprep.subr.mxu0 0.0
        %1321 = vmatpush1.msra.mxu0 0.0
        %1322 = vmatprep.subr.mxu0 0.0
        %1323 = vmatpush1.msra.mxu0 0.0
        %1324 = vmatprep.subr.mxu0 0.0
        %1325 = vmatpush1.msra.mxu0 0.0
        %1326 = vmatprep.subr.mxu0 0.0
        %1327 = vmatpush1.msra.mxu0 0.0
        %1328 = vmatprep.subr.mxu0 0.0
        %1329 = vmatpush1.msra.mxu0 0.0
        %1330 = vmatprep.subr.mxu0 0.0
        %1331 = vmatpush1.msra.mxu0 0.0
        %1332 = vmatprep.subr.mxu0 0.0
        %1333 = vmatpush1.msra.mxu0 0.0
        %1334 = vmatprep.subr.mxu0 0.0
        %1335 = vmatpush1.msra.mxu0 0.0
        %1336 = vmatprep.subr.mxu0 0.0
        %1337 = vmatpush1.msra.mxu0 0.0
        %1338 = vmatprep.subr.mxu0 0.0
        %1339 = vmatpush1.msra.mxu0 0.0
        %1340 = vmatprep.subr.mxu0 0.0
        %1341 = vmatpush1.msra.mxu0 0.0
        %1342 = vmatprep.subr.mxu0 0.0
        %1343 = vmatpush1.msra.mxu0 %v1310
        %1344 = vmatprep.subr.mxu0 0.0
        %1345 = vmatpush2.msra.mxu0 0.0
        %1346 = vmatprep.subr.mxu0 0.0
        %1347 = vmatpush2.msra.mxu0 0.0
        %1348 = vmatprep.subr.mxu0 0.0
        %1349 = vmatpush2.msra.mxu0 0.0
        %1350 = vmatprep.subr.mxu0 0.0
        %1351 = vmatpush2.msra.mxu0 0.0
        %1352 = vmatprep.subr.mxu0 0.0
        %1353 = vmatpush2.msra.mxu0 0.0
        %1354 = vmatprep.subr.mxu0 0.0
        %1355 = vmatpush2.msra.mxu0 0.0
        %1356 = vmatprep.subr.mxu0 0.0
        %1357 = vmatpush2.msra.mxu0 0.0
        %1358 = vmatprep.subr.mxu0 0.0
        %1359 = vmatpush2.msra.mxu0 0.0
        %1360 = vmatprep.subr.mxu0 0.0
        %1361 = vmatpush2.msra.mxu0 0.0
        %1362 = vmatprep.subr.mxu0 0.0
        %1363 = vmatpush2.msra.mxu0 0.0
        %1364 = vmatprep.subr.mxu0 0.0
        %1365 = vmatpush2.msra.mxu0 0.0
        %1366 = vmatprep.subr.mxu0 0.0
        %1367 = vmatpush2.msra.mxu0 0.0
        %1368 = vmatprep.subr.mxu0 0.0
        %1369 = vmatpush2.msra.mxu0 0.0
        %1370 = vmatprep.subr.mxu0 0.0
        %1371 = vmatpush2.msra.mxu0 0.0
        %1372 = vmatprep.subr.mxu0 0.0
        %1373 = vmatpush2.msra.mxu0 0.0
        %1374 = vmatprep.subr.mxu0 0.0
        %1375 = vmatpush2.msra.mxu0 0.0
        %1376 = vmatprep.mubr.f32.mxu0 0.0
        %1377 = vmatmul.mubr.f32.gmra.mxu0 %v373
        %v1378 = vpop.f32.mrf.mxu0
        %v1379 = vadd.f32 %v370, %v1378
        %v1380 = vpop.f32.mrf.mxu0
        %1381 = vdwg.mxu0
        %v1382 = vmul.f32 %v1379, %v1379
        %v1383 = vsel %vm449, %v1382, 0.0
        %1384 = vadd.xlane.f32.xlu0 %v1383
        %v1385 = vpop.xlane.xlu0 %1384
        %v1386 = vmax.f32 %v1385, 1e-24
        %v1387 = vrsqrt.pop %v1386
        %v1388 = vmul.f32 %v1379, %v1387
        %v1390 = vcombine.high %v1388, %v1388
        %v1392 = vunpack.c.l.s4 1966171168
        %v1393 = vunpack.c.0.s8 %v1392
        %v1394 = vlaneseq
        %v1395 = vshrl.u32 %v1394, 7
        %v1396 = vsub.s32 %v1393, %v1395
        %v1397 = vrot.slane %v1388, %v1396
        %v1399 = vunpack.c.l.s4 1966171168
        %v1400 = vunpack.c.0.s8 %v1399
        %v1401 = vlaneseq
        %v1402 = vshrl.u32 %v1401, 7
        %v1403 = vsub.s32 %v1400, %v1402
        %v1404 = vrot.slane %v1390, %v1403
        %v1405 = vcombine.high %v1397, %v1397
        %v1406 = vcombine.high %v1404, %v1404
        %v1408 = vunpack.c.l.s4 1966171168
        %v1409 = vunpack.c.0.s8 %v1408
        %v1410 = vlaneseq
        %v1411 = vshrl.u32 %v1410, 7
        %v1412 = vsub.s32 %v1409, %v1411
        %v1413 = vrot.slane %v1397, %v1412
        %v1415 = vunpack.c.l.s4 1966171168
        %v1416 = vunpack.c.0.s8 %v1415
        %v1417 = vlaneseq
        %v1418 = vshrl.u32 %v1417, 7
        %v1419 = vsub.s32 %v1416, %v1418
        %v1420 = vrot.slane %v1404, %v1419
        %v1422 = vunpack.c.l.s4 1966171168
        %v1423 = vunpack.c.0.s8 %v1422
        %v1424 = vlaneseq
        %v1425 = vshrl.u32 %v1424, 7
        %v1426 = vsub.s32 %v1423, %v1425
        %v1427 = vrot.slane %v1405, %v1426
        %v1429 = vunpack.c.l.s4 1966171168
        %v1430 = vunpack.c.0.s8 %v1429
        %v1431 = vlaneseq
        %v1432 = vshrl.u32 %v1431, 7
        %v1433 = vsub.s32 %v1430, %v1432
        %v1434 = vrot.slane %v1406, %v1433
        %v1435 = vcombine.high %v1413, %v1413
        %v1436 = vcombine.high %v1420, %v1420
        %v1437 = vcombine.high %v1427, %v1427
        %v1438 = vcombine.high %v1434, %v1434
        %1447 = vst.msk [vmem:[%s260 + $0x4] sm:$0x1] %vm514, %v1413
        %1448 = vst.msk [vmem:[%s260 + $0x14] sm:$0x1] %vm514, %v1427
        %1449 = vst.msk [vmem:[%s260 + $0x24] sm:$0x1] %vm514, %v1435
        %1450 = vst.msk [vmem:[%s260 + $0x34] sm:$0x1] %vm514, %v1437
        %1451 = vst.msk [vmem:[%s260 + $0x44] sm:$0x1] %vm514, %v1420
        %1452 = vst.msk [vmem:[%s260 + $0x54] sm:$0x1] %vm514, %v1434
        %1453 = vst.msk [vmem:[%s260 + $0x64] sm:$0x1] %vm514, %v1436
        %1454 = vst.msk [vmem:[%s260 + $0x74] sm:$0x1] %vm514, %v1438
        %v1455 = vld [vmem:[%s234 + $0x5] sm:$0x1]
        %v1456 = vld [vmem:[%s234 + $0x15] sm:$0x1]
        %v1457 = vld [vmem:[%s234 + $0x25] sm:$0x1]
        %v1458 = vld [vmem:[%s234 + $0x35] sm:$0x1]
        %v1463 = vrot.slane %v1456, 7
        %v1464 = vsel %vm281, %v1463, %v1455
        %v1465 = vrot.slane %v1457, 6
        %v1466 = vsel %vm284, %v1465, %v1464
        %v1467 = vrot.slane %v1458, 5
        %v1468 = vsel %vm287, %v1467, %v1466
        %v1469 = vsel %vm293, %v1468, 0
        %1471 = vmatprep.subr.mxu0 0.0
        %1472 = vmatpush1.msra.mxu0 0.0
        %1473 = vmatprep.subr.mxu0 0.0
        %1474 = vmatpush1.msra.mxu0 0.0
        %1475 = vmatprep.subr.mxu0 0.0
        %1476 = vmatpush1.msra.mxu0 0.0
        %1477 = vmatprep.subr.mxu0 0.0
        %1478 = vmatpush1.msra.mxu0 0.0
        %1479 = vmatprep.subr.mxu0 0.0
        %1480 = vmatpush1.msra.mxu0 0.0
        %1481 = vmatprep.subr.mxu0 0.0
        %1482 = vmatpush1.msra.mxu0 0.0
        %1483 = vmatprep.subr.mxu0 0.0
        %1484 = vmatpush1.msra.mxu0 0.0
        %1485 = vmatprep.subr.mxu0 0.0
        %1486 = vmatpush1.msra.mxu0 0.0
        %1487 = vmatprep.subr.mxu0 0.0
        %1488 = vmatpush1.msra.mxu0 0.0
        %1489 = vmatprep.subr.mxu0 0.0
        %1490 = vmatpush1.msra.mxu0 0.0
        %1491 = vmatprep.subr.mxu0 0.0
        %1492 = vmatpush1.msra.mxu0 0.0
        %1493 = vmatprep.subr.mxu0 0.0
        %1494 = vmatpush1.msra.mxu0 0.0
        %1495 = vmatprep.subr.mxu0 0.0
        %1496 = vmatpush1.msra.mxu0 0.0
        %1497 = vmatprep.subr.mxu0 0.0
        %1498 = vmatpush1.msra.mxu0 0.0
        %1499 = vmatprep.subr.mxu0 0.0
        %1500 = vmatpush1.msra.mxu0 0.0
        %1501 = vmatprep.subr.mxu0 0.0
        %1502 = vmatpush1.msra.mxu0 %v1469
        %1503 = vmatprep.subr.mxu0 0.0
        %1504 = vmatpush2.msra.mxu0 0.0
        %1505 = vmatprep.subr.mxu0 0.0
        %1506 = vmatpush2.msra.mxu0 0.0
        %1507 = vmatprep.subr.mxu0 0.0
        %1508 = vmatpush2.msra.mxu0 0.0
        %1509 = vmatprep.subr.mxu0 0.0
        %1510 = vmatpush2.msra.mxu0 0.0
        %1511 = vmatprep.subr.mxu0 0.0
        %1512 = vmatpush2.msra.mxu0 0.0
        %1513 = vmatprep.subr.mxu0 0.0
        %1514 = vmatpush2.msra.mxu0 0.0
        %1515 = vmatprep.subr.mxu0 0.0
        %1516 = vmatpush2.msra.mxu0 0.0
        %1517 = vmatprep.subr.mxu0 0.0
        %1518 = vmatpush2.msra.mxu0 0.0
        %1519 = vmatprep.subr.mxu0 0.0
        %1520 = vmatpush2.msra.mxu0 0.0
        %1521 = vmatprep.subr.mxu0 0.0
        %1522 = vmatpush2.msra.mxu0 0.0
        %1523 = vmatprep.subr.mxu0 0.0
        %1524 = vmatpush2.msra.mxu0 0.0
        %1525 = vmatprep.subr.mxu0 0.0
        %1526 = vmatpush2.msra.mxu0 0.0
        %1527 = vmatprep.subr.mxu0 0.0
        %1528 = vmatpush2.msra.mxu0 0.0
        %1529 = vmatprep.subr.mxu0 0.0
        %1530 = vmatpush2.msra.mxu0 0.0
        %1531 = vmatprep.subr.mxu0 0.0
        %1532 = vmatpush2.msra.mxu0 0.0
        %1533 = vmatprep.subr.mxu0 0.0
        %1534 = vmatpush2.msra.mxu0 0.0
        %1535 = vmatprep.mubr.f32.mxu0 0.0
        %1536 = vmatmul.mubr.f32.gmra.mxu0 %v291
        %v1537 = vpop.f32.mrf.mxu0
        %v1538 = vadd.f32 %v274, %v1537
        %v1539 = vpop.f32.mrf.mxu0
        %1540 = vdwg.mxu0
        %v1541 = vmax.f32 %v1538, 0.0
        %v1543 = vsel %vm293, %v1541, 0
        %1545 = vmatprep.subr.mxu0 0.0
        %1546 = vmatpush1.msra.mxu0 0.0
        %1547 = vmatprep.subr.mxu0 0.0
        %1548 = vmatpush1.msra.mxu0 0.0
        %1549 = vmatprep.subr.mxu0 0.0
        %1550 = vmatpush1.msra.mxu0 0.0
        %1551 = vmatprep.subr.mxu0 0.0
        %1552 = vmatpush1.msra.mxu0 0.0
        %1553 = vmatprep.subr.mxu0 0.0
        %1554 = vmatpush1.msra.mxu0 0.0
        %1555 = vmatprep.subr.mxu0 0.0
        %1556 = vmatpush1.msra.mxu0 0.0
        %1557 = vmatprep.subr.mxu0 0.0
        %1558 = vmatpush1.msra.mxu0 0.0
        %1559 = vmatprep.subr.mxu0 0.0
        %1560 = vmatpush1.msra.mxu0 0.0
        %1561 = vmatprep.subr.mxu0 0.0
        %1562 = vmatpush1.msra.mxu0 0.0
        %1563 = vmatprep.subr.mxu0 0.0
        %1564 = vmatpush1.msra.mxu0 0.0
        %1565 = vmatprep.subr.mxu0 0.0
        %1566 = vmatpush1.msra.mxu0 0.0
        %1567 = vmatprep.subr.mxu0 0.0
        %1568 = vmatpush1.msra.mxu0 0.0
        %1569 = vmatprep.subr.mxu0 0.0
        %1570 = vmatpush1.msra.mxu0 0.0
        %1571 = vmatprep.subr.mxu0 0.0
        %1572 = vmatpush1.msra.mxu0 0.0
        %1573 = vmatprep.subr.mxu0 0.0
        %1574 = vmatpush1.msra.mxu0 0.0
        %1575 = vmatprep.subr.mxu0 0.0
        %1576 = vmatpush1.msra.mxu0 %v1543
        %1577 = vmatprep.subr.mxu0 0.0
        %1578 = vmatpush2.msra.mxu0 0.0
        %1579 = vmatprep.subr.mxu0 0.0
        %1580 = vmatpush2.msra.mxu0 0.0
        %1581 = vmatprep.subr.mxu0 0.0
        %1582 = vmatpush2.msra.mxu0 0.0
        %1583 = vmatprep.subr.mxu0 0.0
        %1584 = vmatpush2.msra.mxu0 0.0
        %1585 = vmatprep.subr.mxu0 0.0
        %1586 = vmatpush2.msra.mxu0 0.0
        %1587 = vmatprep.subr.mxu0 0.0
        %1588 = vmatpush2.msra.mxu0 0.0
        %1589 = vmatprep.subr.mxu0 0.0
        %1590 = vmatpush2.msra.mxu0 0.0
        %1591 = vmatprep.subr.mxu0 0.0
        %1592 = vmatpush2.msra.mxu0 0.0
        %1593 = vmatprep.subr.mxu0 0.0
        %1594 = vmatpush2.msra.mxu0 0.0
        %1595 = vmatprep.subr.mxu0 0.0
        %1596 = vmatpush2.msra.mxu0 0.0
        %1597 = vmatprep.subr.mxu0 0.0
        %1598 = vmatpush2.msra.mxu0 0.0
        %1599 = vmatprep.subr.mxu0 0.0
        %1600 = vmatpush2.msra.mxu0 0.0
        %1601 = vmatprep.subr.mxu0 0.0
        %1602 = vmatpush2.msra.mxu0 0.0
        %1603 = vmatprep.subr.mxu0 0.0
        %1604 = vmatpush2.msra.mxu0 0.0
        %1605 = vmatprep.subr.mxu0 0.0
        %1606 = vmatpush2.msra.mxu0 0.0
        %1607 = vmatprep.subr.mxu0 0.0
        %1608 = vmatpush2.msra.mxu0 0.0
        %1609 = vmatprep.mubr.f32.mxu0 0.0
        %1610 = vmatmul.mubr.f32.gmra.mxu0 %v373
        %v1611 = vpop.f32.mrf.mxu0
        %v1612 = vadd.f32 %v370, %v1611
        %v1613 = vpop.f32.mrf.mxu0
        %1614 = vdwg.mxu0
        %v1615 = vmul.f32 %v1612, %v1612
        %v1616 = vsel %vm449, %v1615, 0.0
        %1617 = vadd.xlane.f32.xlu0 %v1616
        %v1618 = vpop.xlane.xlu0 %1617
        %v1619 = vmax.f32 %v1618, 1e-24
        %v1620 = vrsqrt.pop %v1619
        %v1621 = vmul.f32 %v1612, %v1620
        %v1623 = vcombine.high %v1621, %v1621
        %v1625 = vunpack.c.l.s4 1966171168
        %v1626 = vunpack.c.0.s8 %v1625
        %v1627 = vlaneseq
        %v1628 = vshrl.u32 %v1627, 7
        %v1629 = vsub.s32 %v1626, %v1628
        %v1630 = vrot.slane %v1621, %v1629
        %v1632 = vunpack.c.l.s4 1966171168
        %v1633 = vunpack.c.0.s8 %v1632
        %v1634 = vlaneseq
        %v1635 = vshrl.u32 %v1634, 7
        %v1636 = vsub.s32 %v1633, %v1635
        %v1637 = vrot.slane %v1623, %v1636
        %v1638 = vcombine.high %v1630, %v1630
        %v1639 = vcombine.high %v1637, %v1637
        %v1641 = vunpack.c.l.s4 1966171168
        %v1642 = vunpack.c.0.s8 %v1641
        %v1643 = vlaneseq
        %v1644 = vshrl.u32 %v1643, 7
        %v1645 = vsub.s32 %v1642, %v1644
        %v1646 = vrot.slane %v1630, %v1645
        %v1648 = vunpack.c.l.s4 1966171168
        %v1649 = vunpack.c.0.s8 %v1648
        %v1650 = vlaneseq
        %v1651 = vshrl.u32 %v1650, 7
        %v1652 = vsub.s32 %v1649, %v1651
        %v1653 = vrot.slane %v1637, %v1652
        %v1655 = vunpack.c.l.s4 1966171168
        %v1656 = vunpack.c.0.s8 %v1655
        %v1657 = vlaneseq
        %v1658 = vshrl.u32 %v1657, 7
        %v1659 = vsub.s32 %v1656, %v1658
        %v1660 = vrot.slane %v1638, %v1659
        %v1662 = vunpack.c.l.s4 1966171168
        %v1663 = vunpack.c.0.s8 %v1662
        %v1664 = vlaneseq
        %v1665 = vshrl.u32 %v1664, 7
        %v1666 = vsub.s32 %v1663, %v1665
        %v1667 = vrot.slane %v1639, %v1666
        %v1668 = vcombine.high %v1646, %v1646
        %v1669 = vcombine.high %v1653, %v1653
        %v1670 = vcombine.high %v1660, %v1660
        %v1671 = vcombine.high %v1667, %v1667
        %1680 = vst.msk [vmem:[%s260 + $0x5] sm:$0x1] %vm514, %v1646
        %1681 = vst.msk [vmem:[%s260 + $0x15] sm:$0x1] %vm514, %v1660
        %1682 = vst.msk [vmem:[%s260 + $0x25] sm:$0x1] %vm514, %v1668
        %1683 = vst.msk [vmem:[%s260 + $0x35] sm:$0x1] %vm514, %v1670
        %1684 = vst.msk [vmem:[%s260 + $0x45] sm:$0x1] %vm514, %v1653
        %1685 = vst.msk [vmem:[%s260 + $0x55] sm:$0x1] %vm514, %v1667
        %1686 = vst.msk [vmem:[%s260 + $0x65] sm:$0x1] %vm514, %v1669
        %1687 = vst.msk [vmem:[%s260 + $0x75] sm:$0x1] %vm514, %v1671
        %v1688 = vld [vmem:[%s234 + $0x6] sm:$0x1]
        %v1689 = vld [vmem:[%s234 + $0x16] sm:$0x1]
        %v1690 = vld [vmem:[%s234 + $0x26] sm:$0x1]
        %v1691 = vld [vmem:[%s234 + $0x36] sm:$0x1]
        %v1696 = vrot.slane %v1689, 7
        %v1697 = vsel %vm281, %v1696, %v1688
        %v1698 = vrot.slane %v1690, 6
        %v1699 = vsel %vm284, %v1698, %v1697
        %v1700 = vrot.slane %v1691, 5
        %v1701 = vsel %vm287, %v1700, %v1699
        %v1702 = vsel %vm293, %v1701, 0
        %1704 = vmatprep.subr.mxu0 0.0
        %1705 = vmatpush1.msra.mxu0 0.0
        %1706 = vmatprep.subr.mxu0 0.0
        %1707 = vmatpush1.msra.mxu0 0.0
        %1708 = vmatprep.subr.mxu0 0.0
        %1709 = vmatpush1.msra.mxu0 0.0
        %1710 = vmatprep.subr.mxu0 0.0
        %1711 = vmatpush1.msra.mxu0 0.0
        %1712 = vmatprep.subr.mxu0 0.0
        %1713 = vmatpush1.msra.mxu0 0.0
        %1714 = vmatprep.subr.mxu0 0.0
        %1715 = vmatpush1.msra.mxu0 0.0
        %1716 = vmatprep.subr.mxu0 0.0
        %1717 = vmatpush1.msra.mxu0 0.0
        %1718 = vmatprep.subr.mxu0 0.0
        %1719 = vmatpush1.msra.mxu0 0.0
        %1720 = vmatprep.subr.mxu0 0.0
        %1721 = vmatpush1.msra.mxu0 0.0
        %1722 = vmatprep.subr.mxu0 0.0
        %1723 = vmatpush1.msra.mxu0 0.0
        %1724 = vmatprep.subr.mxu0 0.0
        %1725 = vmatpush1.msra.mxu0 0.0
        %1726 = vmatprep.subr.mxu0 0.0
        %1727 = vmatpush1.msra.mxu0 0.0
        %1728 = vmatprep.subr.mxu0 0.0
        %1729 = vmatpush1.msra.mxu0 0.0
        %1730 = vmatprep.subr.mxu0 0.0
        %1731 = vmatpush1.msra.mxu0 0.0
        %1732 = vmatprep.subr.mxu0 0.0
        %1733 = vmatpush1.msra.mxu0 0.0
        %1734 = vmatprep.subr.mxu0 0.0
        %1735 = vmatpush1.msra.mxu0 %v1702
        %1736 = vmatprep.subr.mxu0 0.0
        %1737 = vmatpush2.msra.mxu0 0.0
        %1738 = vmatprep.subr.mxu0 0.0
        %1739 = vmatpush2.msra.mxu0 0.0
        %1740 = vmatprep.subr.mxu0 0.0
        %1741 = vmatpush2.msra.mxu0 0.0
        %1742 = vmatprep.subr.mxu0 0.0
        %1743 = vmatpush2.msra.mxu0 0.0
        %1744 = vmatprep.subr.mxu0 0.0
        %1745 = vmatpush2.msra.mxu0 0.0
        %1746 = vmatprep.subr.mxu0 0.0
        %1747 = vmatpush2.msra.mxu0 0.0
        %1748 = vmatprep.subr.mxu0 0.0
        %1749 = vmatpush2.msra.mxu0 0.0
        %1750 = vmatprep.subr.mxu0 0.0
        %1751 = vmatpush2.msra.mxu0 0.0
        %1752 = vmatprep.subr.mxu0 0.0
        %1753 = vmatpush2.msra.mxu0 0.0
        %1754 = vmatprep.subr.mxu0 0.0
        %1755 = vmatpush2.msra.mxu0 0.0
        %1756 = vmatprep.subr.mxu0 0.0
        %1757 = vmatpush2.msra.mxu0 0.0
        %1758 = vmatprep.subr.mxu0 0.0
        %1759 = vmatpush2.msra.mxu0 0.0
        %1760 = vmatprep.subr.mxu0 0.0
        %1761 = vmatpush2.msra.mxu0 0.0
        %1762 = vmatprep.subr.mxu0 0.0
        %1763 = vmatpush2.msra.mxu0 0.0
        %1764 = vmatprep.subr.mxu0 0.0
        %1765 = vmatpush2.msra.mxu0 0.0
        %1766 = vmatprep.subr.mxu0 0.0
        %1767 = vmatpush2.msra.mxu0 0.0
        %1768 = vmatprep.mubr.f32.mxu0 0.0
        %1769 = vmatmul.mubr.f32.gmra.mxu0 %v291
        %v1770 = vpop.f32.mrf.mxu0
        %v1771 = vadd.f32 %v274, %v1770
        %v1772 = vpop.f32.mrf.mxu0
        %1773 = vdwg.mxu0
        %v1774 = vmax.f32 %v1771, 0.0
        %v1776 = vsel %vm293, %v1774, 0
        %1778 = vmatprep.subr.mxu0 0.0
        %1779 = vmatpush1.msra.mxu0 0.0
        %1780 = vmatprep.subr.mxu0 0.0
        %1781 = vmatpush1.msra.mxu0 0.0
        %1782 = vmatprep.subr.mxu0 0.0
        %1783 = vmatpush1.msra.mxu0 0.0
        %1784 = vmatprep.subr.mxu0 0.0
        %1785 = vmatpush1.msra.mxu0 0.0
        %1786 = vmatprep.subr.mxu0 0.0
        %1787 = vmatpush1.msra.mxu0 0.0
        %1788 = vmatprep.subr.mxu0 0.0
        %1789 = vmatpush1.msra.mxu0 0.0
        %1790 = vmatprep.subr.mxu0 0.0
        %1791 = vmatpush1.msra.mxu0 0.0
        %1792 = vmatprep.subr.mxu0 0.0
        %1793 = vmatpush1.msra.mxu0 0.0
        %1794 = vmatprep.subr.mxu0 0.0
        %1795 = vmatpush1.msra.mxu0 0.0
        %1796 = vmatprep.subr.mxu0 0.0
        %1797 = vmatpush1.msra.mxu0 0.0
        %1798 = vmatprep.subr.mxu0 0.0
        %1799 = vmatpush1.msra.mxu0 0.0
        %1800 = vmatprep.subr.mxu0 0.0
        %1801 = vmatpush1.msra.mxu0 0.0
        %1802 = vmatprep.subr.mxu0 0.0
        %1803 = vmatpush1.msra.mxu0 0.0
        %1804 = vmatprep.subr.mxu0 0.0
        %1805 = vmatpush1.msra.mxu0 0.0
        %1806 = vmatprep.subr.mxu0 0.0
        %1807 = vmatpush1.msra.mxu0 0.0
        %1808 = vmatprep.subr.mxu0 0.0
        %1809 = vmatpush1.msra.mxu0 %v1776
        %1810 = vmatprep.subr.mxu0 0.0
        %1811 = vmatpush2.msra.mxu0 0.0
        %1812 = vmatprep.subr.mxu0 0.0
        %1813 = vmatpush2.msra.mxu0 0.0
        %1814 = vmatprep.subr.mxu0 0.0
        %1815 = vmatpush2.msra.mxu0 0.0
        %1816 = vmatprep.subr.mxu0 0.0
        %1817 = vmatpush2.msra.mxu0 0.0
        %1818 = vmatprep.subr.mxu0 0.0
        %1819 = vmatpush2.msra.mxu0 0.0
        %1820 = vmatprep.subr.mxu0 0.0
        %1821 = vmatpush2.msra.mxu0 0.0
        %1822 = vmatprep.subr.mxu0 0.0
        %1823 = vmatpush2.msra.mxu0 0.0
        %1824 = vmatprep.subr.mxu0 0.0
        %1825 = vmatpush2.msra.mxu0 0.0
        %1826 = vmatprep.subr.mxu0 0.0
        %1827 = vmatpush2.msra.mxu0 0.0
        %1828 = vmatprep.subr.mxu0 0.0
        %1829 = vmatpush2.msra.mxu0 0.0
        %1830 = vmatprep.subr.mxu0 0.0
        %1831 = vmatpush2.msra.mxu0 0.0
        %1832 = vmatprep.subr.mxu0 0.0
        %1833 = vmatpush2.msra.mxu0 0.0
        %1834 = vmatprep.subr.mxu0 0.0
        %1835 = vmatpush2.msra.mxu0 0.0
        %1836 = vmatprep.subr.mxu0 0.0
        %1837 = vmatpush2.msra.mxu0 0.0
        %1838 = vmatprep.subr.mxu0 0.0
        %1839 = vmatpush2.msra.mxu0 0.0
        %1840 = vmatprep.subr.mxu0 0.0
        %1841 = vmatpush2.msra.mxu0 0.0
        %1842 = vmatprep.mubr.f32.mxu0 0.0
        %1843 = vmatmul.mubr.f32.gmra.mxu0 %v373
        %v1844 = vpop.f32.mrf.mxu0
        %v1845 = vadd.f32 %v370, %v1844
        %v1846 = vpop.f32.mrf.mxu0
        %1847 = vdwg.mxu0
        %v1848 = vmul.f32 %v1845, %v1845
        %v1849 = vsel %vm449, %v1848, 0.0
        %1850 = vadd.xlane.f32.xlu0 %v1849
        %v1851 = vpop.xlane.xlu0 %1850
        %v1852 = vmax.f32 %v1851, 1e-24
        %v1853 = vrsqrt.pop %v1852
        %v1854 = vmul.f32 %v1845, %v1853
        %v1856 = vcombine.high %v1854, %v1854
        %v1858 = vunpack.c.l.s4 1966171168
        %v1859 = vunpack.c.0.s8 %v1858
        %v1860 = vlaneseq
        %v1861 = vshrl.u32 %v1860, 7
        %v1862 = vsub.s32 %v1859, %v1861
        %v1863 = vrot.slane %v1854, %v1862
        %v1865 = vunpack.c.l.s4 1966171168
        %v1866 = vunpack.c.0.s8 %v1865
        %v1867 = vlaneseq
        %v1868 = vshrl.u32 %v1867, 7
        %v1869 = vsub.s32 %v1866, %v1868
        %v1870 = vrot.slane %v1856, %v1869
        %v1871 = vcombine.high %v1863, %v1863
        %v1872 = vcombine.high %v1870, %v1870
        %v1874 = vunpack.c.l.s4 1966171168
        %v1875 = vunpack.c.0.s8 %v1874
        %v1876 = vlaneseq
        %v1877 = vshrl.u32 %v1876, 7
        %v1878 = vsub.s32 %v1875, %v1877
        %v1879 = vrot.slane %v1863, %v1878
        %v1881 = vunpack.c.l.s4 1966171168
        %v1882 = vunpack.c.0.s8 %v1881
        %v1883 = vlaneseq
        %v1884 = vshrl.u32 %v1883, 7
        %v1885 = vsub.s32 %v1882, %v1884
        %v1886 = vrot.slane %v1870, %v1885
        %v1888 = vunpack.c.l.s4 1966171168
        %v1889 = vunpack.c.0.s8 %v1888
        %v1890 = vlaneseq
        %v1891 = vshrl.u32 %v1890, 7
        %v1892 = vsub.s32 %v1889, %v1891
        %v1893 = vrot.slane %v1871, %v1892
        %v1895 = vunpack.c.l.s4 1966171168
        %v1896 = vunpack.c.0.s8 %v1895
        %v1897 = vlaneseq
        %v1898 = vshrl.u32 %v1897, 7
        %v1899 = vsub.s32 %v1896, %v1898
        %v1900 = vrot.slane %v1872, %v1899
        %v1901 = vcombine.high %v1879, %v1879
        %v1902 = vcombine.high %v1886, %v1886
        %v1903 = vcombine.high %v1893, %v1893
        %v1904 = vcombine.high %v1900, %v1900
        %1913 = vst.msk [vmem:[%s260 + $0x6] sm:$0x1] %vm514, %v1879
        %1914 = vst.msk [vmem:[%s260 + $0x16] sm:$0x1] %vm514, %v1893
        %1915 = vst.msk [vmem:[%s260 + $0x26] sm:$0x1] %vm514, %v1901
        %1916 = vst.msk [vmem:[%s260 + $0x36] sm:$0x1] %vm514, %v1903
        %1917 = vst.msk [vmem:[%s260 + $0x46] sm:$0x1] %vm514, %v1886
        %1918 = vst.msk [vmem:[%s260 + $0x56] sm:$0x1] %vm514, %v1900
        %1919 = vst.msk [vmem:[%s260 + $0x66] sm:$0x1] %vm514, %v1902
        %1920 = vst.msk [vmem:[%s260 + $0x76] sm:$0x1] %vm514, %v1904
        %v1921 = vld [vmem:[%s234 + $0x7] sm:$0x1]
        %v1922 = vld [vmem:[%s234 + $0x17] sm:$0x1]
        %v1923 = vld [vmem:[%s234 + $0x27] sm:$0x1]
        %v1924 = vld [vmem:[%s234 + $0x37] sm:$0x1]
        %v1929 = vrot.slane %v1922, 7
        %v1930 = vsel %vm281, %v1929, %v1921
        %v1931 = vrot.slane %v1923, 6
        %v1932 = vsel %vm284, %v1931, %v1930
        %v1933 = vrot.slane %v1924, 5
        %v1934 = vsel %vm287, %v1933, %v1932
        %v1935 = vsel %vm293, %v1934, 0
        %1937 = vmatprep.subr.mxu0 0.0
        %1938 = vmatpush1.msra.mxu0 0.0
        %1939 = vmatprep.subr.mxu0 0.0
        %1940 = vmatpush1.msra.mxu0 0.0
        %1941 = vmatprep.subr.mxu0 0.0
        %1942 = vmatpush1.msra.mxu0 0.0
        %1943 = vmatprep.subr.mxu0 0.0
        %1944 = vmatpush1.msra.mxu0 0.0
        %1945 = vmatprep.subr.mxu0 0.0
        %1946 = vmatpush1.msra.mxu0 0.0
        %1947 = vmatprep.subr.mxu0 0.0
        %1948 = vmatpush1.msra.mxu0 0.0
        %1949 = vmatprep.subr.mxu0 0.0
        %1950 = vmatpush1.msra.mxu0 0.0
        %1951 = vmatprep.subr.mxu0 0.0
        %1952 = vmatpush1.msra.mxu0 0.0
        %1953 = vmatprep.subr.mxu0 0.0
        %1954 = vmatpush1.msra.mxu0 0.0
        %1955 = vmatprep.subr.mxu0 0.0
        %1956 = vmatpush1.msra.mxu0 0.0
        %1957 = vmatprep.subr.mxu0 0.0
        %1958 = vmatpush1.msra.mxu0 0.0
        %1959 = vmatprep.subr.mxu0 0.0
        %1960 = vmatpush1.msra.mxu0 0.0
        %1961 = vmatprep.subr.mxu0 0.0
        %1962 = vmatpush1.msra.mxu0 0.0
        %1963 = vmatprep.subr.mxu0 0.0
        %1964 = vmatpush1.msra.mxu0 0.0
        %1965 = vmatprep.subr.mxu0 0.0
        %1966 = vmatpush1.msra.mxu0 0.0
        %1967 = vmatprep.subr.mxu0 0.0
        %1968 = vmatpush1.msra.mxu0 %v1935
        %1969 = vmatprep.subr.mxu0 0.0
        %1970 = vmatpush2.msra.mxu0 0.0
        %1971 = vmatprep.subr.mxu0 0.0
        %1972 = vmatpush2.msra.mxu0 0.0
        %1973 = vmatprep.subr.mxu0 0.0
        %1974 = vmatpush2.msra.mxu0 0.0
        %1975 = vmatprep.subr.mxu0 0.0
        %1976 = vmatpush2.msra.mxu0 0.0
        %1977 = vmatprep.subr.mxu0 0.0
        %1978 = vmatpush2.msra.mxu0 0.0
        %1979 = vmatprep.subr.mxu0 0.0
        %1980 = vmatpush2.msra.mxu0 0.0
        %1981 = vmatprep.subr.mxu0 0.0
        %1982 = vmatpush2.msra.mxu0 0.0
        %1983 = vmatprep.subr.mxu0 0.0
        %1984 = vmatpush2.msra.mxu0 0.0
        %1985 = vmatprep.subr.mxu0 0.0
        %1986 = vmatpush2.msra.mxu0 0.0
        %1987 = vmatprep.subr.mxu0 0.0
        %1988 = vmatpush2.msra.mxu0 0.0
        %1989 = vmatprep.subr.mxu0 0.0
        %1990 = vmatpush2.msra.mxu0 0.0
        %1991 = vmatprep.subr.mxu0 0.0
        %1992 = vmatpush2.msra.mxu0 0.0
        %1993 = vmatprep.subr.mxu0 0.0
        %1994 = vmatpush2.msra.mxu0 0.0
        %1995 = vmatprep.subr.mxu0 0.0
        %1996 = vmatpush2.msra.mxu0 0.0
        %1997 = vmatprep.subr.mxu0 0.0
        %1998 = vmatpush2.msra.mxu0 0.0
        %1999 = vmatprep.subr.mxu0 0.0
        %2000 = vmatpush2.msra.mxu0 0.0
        %2001 = vmatprep.mubr.f32.mxu0 0.0
        %2002 = vmatmul.mubr.f32.gmra.mxu0 %v291
        %v2003 = vpop.f32.mrf.mxu0
        %v2004 = vadd.f32 %v274, %v2003
        %v2005 = vpop.f32.mrf.mxu0
        %2006 = vdwg.mxu0
        %v2007 = vmax.f32 %v2004, 0.0
        %v2009 = vsel %vm293, %v2007, 0
        %2011 = vmatprep.subr.mxu0 0.0
        %2012 = vmatpush1.msra.mxu0 0.0
        %2013 = vmatprep.subr.mxu0 0.0
        %2014 = vmatpush1.msra.mxu0 0.0
        %2015 = vmatprep.subr.mxu0 0.0
        %2016 = vmatpush1.msra.mxu0 0.0
        %2017 = vmatprep.subr.mxu0 0.0
        %2018 = vmatpush1.msra.mxu0 0.0
        %2019 = vmatprep.subr.mxu0 0.0
        %2020 = vmatpush1.msra.mxu0 0.0
        %2021 = vmatprep.subr.mxu0 0.0
        %2022 = vmatpush1.msra.mxu0 0.0
        %2023 = vmatprep.subr.mxu0 0.0
        %2024 = vmatpush1.msra.mxu0 0.0
        %2025 = vmatprep.subr.mxu0 0.0
        %2026 = vmatpush1.msra.mxu0 0.0
        %2027 = vmatprep.subr.mxu0 0.0
        %2028 = vmatpush1.msra.mxu0 0.0
        %2029 = vmatprep.subr.mxu0 0.0
        %2030 = vmatpush1.msra.mxu0 0.0
        %2031 = vmatprep.subr.mxu0 0.0
        %2032 = vmatpush1.msra.mxu0 0.0
        %2033 = vmatprep.subr.mxu0 0.0
        %2034 = vmatpush1.msra.mxu0 0.0
        %2035 = vmatprep.subr.mxu0 0.0
        %2036 = vmatpush1.msra.mxu0 0.0
        %2037 = vmatprep.subr.mxu0 0.0
        %2038 = vmatpush1.msra.mxu0 0.0
        %2039 = vmatprep.subr.mxu0 0.0
        %2040 = vmatpush1.msra.mxu0 0.0
        %2041 = vmatprep.subr.mxu0 0.0
        %2042 = vmatpush1.msra.mxu0 %v2009
        %2043 = vmatprep.subr.mxu0 0.0
        %2044 = vmatpush2.msra.mxu0 0.0
        %2045 = vmatprep.subr.mxu0 0.0
        %2046 = vmatpush2.msra.mxu0 0.0
        %2047 = vmatprep.subr.mxu0 0.0
        %2048 = vmatpush2.msra.mxu0 0.0
        %2049 = vmatprep.subr.mxu0 0.0
        %2050 = vmatpush2.msra.mxu0 0.0
        %2051 = vmatprep.subr.mxu0 0.0
        %2052 = vmatpush2.msra.mxu0 0.0
        %2053 = vmatprep.subr.mxu0 0.0
        %2054 = vmatpush2.msra.mxu0 0.0
        %2055 = vmatprep.subr.mxu0 0.0
        %2056 = vmatpush2.msra.mxu0 0.0
        %2057 = vmatprep.subr.mxu0 0.0
        %2058 = vmatpush2.msra.mxu0 0.0
        %2059 = vmatprep.subr.mxu0 0.0
        %2060 = vmatpush2.msra.mxu0 0.0
        %2061 = vmatprep.subr.mxu0 0.0
        %2062 = vmatpush2.msra.mxu0 0.0
        %2063 = vmatprep.subr.mxu0 0.0
        %2064 = vmatpush2.msra.mxu0 0.0
        %2065 = vmatprep.subr.mxu0 0.0
        %2066 = vmatpush2.msra.mxu0 0.0
        %2067 = vmatprep.subr.mxu0 0.0
        %2068 = vmatpush2.msra.mxu0 0.0
        %2069 = vmatprep.subr.mxu0 0.0
        %2070 = vmatpush2.msra.mxu0 0.0
        %2071 = vmatprep.subr.mxu0 0.0
        %2072 = vmatpush2.msra.mxu0 0.0
        %2073 = vmatprep.subr.mxu0 0.0
        %2074 = vmatpush2.msra.mxu0 0.0
        %2075 = vmatprep.mubr.f32.mxu0 0.0
        %2076 = vmatmul.mubr.f32.gmra.mxu0 %v373
        %v2077 = vpop.f32.mrf.mxu0
        %v2078 = vadd.f32 %v370, %v2077
        %v2079 = vpop.f32.mrf.mxu0
        %2080 = vdwg.mxu0
        %v2081 = vmul.f32 %v2078, %v2078
        %v2082 = vsel %vm449, %v2081, 0.0
        %2083 = vadd.xlane.f32.xlu0 %v2082
        %v2084 = vpop.xlane.xlu0 %2083
        %v2085 = vmax.f32 %v2084, 1e-24
        %v2086 = vrsqrt.pop %v2085
        %v2087 = vmul.f32 %v2078, %v2086
        %v2089 = vcombine.high %v2087, %v2087
        %v2091 = vunpack.c.l.s4 1966171168
        %v2092 = vunpack.c.0.s8 %v2091
        %v2093 = vlaneseq
        %v2094 = vshrl.u32 %v2093, 7
        %v2095 = vsub.s32 %v2092, %v2094
        %v2096 = vrot.slane %v2087, %v2095
        %v2098 = vunpack.c.l.s4 1966171168
        %v2099 = vunpack.c.0.s8 %v2098
        %v2100 = vlaneseq
        %v2101 = vshrl.u32 %v2100, 7
        %v2102 = vsub.s32 %v2099, %v2101
        %v2103 = vrot.slane %v2089, %v2102
        %v2104 = vcombine.high %v2096, %v2096
        %v2105 = vcombine.high %v2103, %v2103
        %v2107 = vunpack.c.l.s4 1966171168
        %v2108 = vunpack.c.0.s8 %v2107
        %v2109 = vlaneseq
        %v2110 = vshrl.u32 %v2109, 7
        %v2111 = vsub.s32 %v2108, %v2110
        %v2112 = vrot.slane %v2096, %v2111
        %v2114 = vunpack.c.l.s4 1966171168
        %v2115 = vunpack.c.0.s8 %v2114
        %v2116 = vlaneseq
        %v2117 = vshrl.u32 %v2116, 7
        %v2118 = vsub.s32 %v2115, %v2117
        %v2119 = vrot.slane %v2103, %v2118
        %v2121 = vunpack.c.l.s4 1966171168
        %v2122 = vunpack.c.0.s8 %v2121
        %v2123 = vlaneseq
        %v2124 = vshrl.u32 %v2123, 7
        %v2125 = vsub.s32 %v2122, %v2124
        %v2126 = vrot.slane %v2104, %v2125
        %v2128 = vunpack.c.l.s4 1966171168
        %v2129 = vunpack.c.0.s8 %v2128
        %v2130 = vlaneseq
        %v2131 = vshrl.u32 %v2130, 7
        %v2132 = vsub.s32 %v2129, %v2131
        %v2133 = vrot.slane %v2105, %v2132
        %v2134 = vcombine.high %v2112, %v2112
        %v2135 = vcombine.high %v2119, %v2119
        %v2136 = vcombine.high %v2126, %v2126
        %v2137 = vcombine.high %v2133, %v2133
        %2146 = vst.msk [vmem:[%s260 + $0x7] sm:$0x1] %vm514, %v2112
        %2147 = vst.msk [vmem:[%s260 + $0x17] sm:$0x1] %vm514, %v2126
        %2148 = vst.msk [vmem:[%s260 + $0x27] sm:$0x1] %vm514, %v2134
        %2149 = vst.msk [vmem:[%s260 + $0x37] sm:$0x1] %vm514, %v2136
        %2150 = vst.msk [vmem:[%s260 + $0x47] sm:$0x1] %vm514, %v2119
        %2151 = vst.msk [vmem:[%s260 + $0x57] sm:$0x1] %vm514, %v2133
        %2152 = vst.msk [vmem:[%s260 + $0x67] sm:$0x1] %vm514, %v2135
        %2153 = vst.msk [vmem:[%s260 + $0x77] sm:$0x1] %vm514, %v2137
        %v2154 = vld [vmem:[%s234 + $0x8] sm:$0x1]
        %v2155 = vld [vmem:[%s234 + $0x18] sm:$0x1]
        %v2156 = vld [vmem:[%s234 + $0x28] sm:$0x1]
        %v2157 = vld [vmem:[%s234 + $0x38] sm:$0x1]
        %v2162 = vrot.slane %v2155, 7
        %v2163 = vsel %vm281, %v2162, %v2154
        %v2164 = vrot.slane %v2156, 6
        %v2165 = vsel %vm284, %v2164, %v2163
        %v2166 = vrot.slane %v2157, 5
        %v2167 = vsel %vm287, %v2166, %v2165
        %v2168 = vsel %vm293, %v2167, 0
        %2170 = vmatprep.subr.mxu0 0.0
        %2171 = vmatpush1.msra.mxu0 0.0
        %2172 = vmatprep.subr.mxu0 0.0
        %2173 = vmatpush1.msra.mxu0 0.0
        %2174 = vmatprep.subr.mxu0 0.0
        %2175 = vmatpush1.msra.mxu0 0.0
        %2176 = vmatprep.subr.mxu0 0.0
        %2177 = vmatpush1.msra.mxu0 0.0
        %2178 = vmatprep.subr.mxu0 0.0
        %2179 = vmatpush1.msra.mxu0 0.0
        %2180 = vmatprep.subr.mxu0 0.0
        %2181 = vmatpush1.msra.mxu0 0.0
        %2182 = vmatprep.subr.mxu0 0.0
        %2183 = vmatpush1.msra.mxu0 0.0
        %2184 = vmatprep.subr.mxu0 0.0
        %2185 = vmatpush1.msra.mxu0 0.0
        %2186 = vmatprep.subr.mxu0 0.0
        %2187 = vmatpush1.msra.mxu0 0.0
        %2188 = vmatprep.subr.mxu0 0.0
        %2189 = vmatpush1.msra.mxu0 0.0
        %2190 = vmatprep.subr.mxu0 0.0
        %2191 = vmatpush1.msra.mxu0 0.0
        %2192 = vmatprep.subr.mxu0 0.0
        %2193 = vmatpush1.msra.mxu0 0.0
        %2194 = vmatprep.subr.mxu0 0.0
        %2195 = vmatpush1.msra.mxu0 0.0
        %2196 = vmatprep.subr.mxu0 0.0
        %2197 = vmatpush1.msra.mxu0 0.0
        %2198 = vmatprep.subr.mxu0 0.0
        %2199 = vmatpush1.msra.mxu0 0.0
        %2200 = vmatprep.subr.mxu0 0.0
        %2201 = vmatpush1.msra.mxu0 %v2168
        %2202 = vmatprep.subr.mxu0 0.0
        %2203 = vmatpush2.msra.mxu0 0.0
        %2204 = vmatprep.subr.mxu0 0.0
        %2205 = vmatpush2.msra.mxu0 0.0
        %2206 = vmatprep.subr.mxu0 0.0
        %2207 = vmatpush2.msra.mxu0 0.0
        %2208 = vmatprep.subr.mxu0 0.0
        %2209 = vmatpush2.msra.mxu0 0.0
        %2210 = vmatprep.subr.mxu0 0.0
        %2211 = vmatpush2.msra.mxu0 0.0
        %2212 = vmatprep.subr.mxu0 0.0
        %2213 = vmatpush2.msra.mxu0 0.0
        %2214 = vmatprep.subr.mxu0 0.0
        %2215 = vmatpush2.msra.mxu0 0.0
        %2216 = vmatprep.subr.mxu0 0.0
        %2217 = vmatpush2.msra.mxu0 0.0
        %2218 = vmatprep.subr.mxu0 0.0
        %2219 = vmatpush2.msra.mxu0 0.0
        %2220 = vmatprep.subr.mxu0 0.0
        %2221 = vmatpush2.msra.mxu0 0.0
        %2222 = vmatprep.subr.mxu0 0.0
        %2223 = vmatpush2.msra.mxu0 0.0
        %2224 = vmatprep.subr.mxu0 0.0
        %2225 = vmatpush2.msra.mxu0 0.0
        %2226 = vmatprep.subr.mxu0 0.0
        %2227 = vmatpush2.msra.mxu0 0.0
        %2228 = vmatprep.subr.mxu0 0.0
        %2229 = vmatpush2.msra.mxu0 0.0
        %2230 = vmatprep.subr.mxu0 0.0
        %2231 = vmatpush2.msra.mxu0 0.0
        %2232 = vmatprep.subr.mxu0 0.0
        %2233 = vmatpush2.msra.mxu0 0.0
        %2234 = vmatprep.mubr.f32.mxu0 0.0
        %2235 = vmatmul.mubr.f32.gmra.mxu0 %v291
        %v2236 = vpop.f32.mrf.mxu0
        %v2237 = vadd.f32 %v274, %v2236
        %v2238 = vpop.f32.mrf.mxu0
        %2239 = vdwg.mxu0
        %v2240 = vmax.f32 %v2237, 0.0
        %v2242 = vsel %vm293, %v2240, 0
        %2244 = vmatprep.subr.mxu0 0.0
        %2245 = vmatpush1.msra.mxu0 0.0
        %2246 = vmatprep.subr.mxu0 0.0
        %2247 = vmatpush1.msra.mxu0 0.0
        %2248 = vmatprep.subr.mxu0 0.0
        %2249 = vmatpush1.msra.mxu0 0.0
        %2250 = vmatprep.subr.mxu0 0.0
        %2251 = vmatpush1.msra.mxu0 0.0
        %2252 = vmatprep.subr.mxu0 0.0
        %2253 = vmatpush1.msra.mxu0 0.0
        %2254 = vmatprep.subr.mxu0 0.0
        %2255 = vmatpush1.msra.mxu0 0.0
        %2256 = vmatprep.subr.mxu0 0.0
        %2257 = vmatpush1.msra.mxu0 0.0
        %2258 = vmatprep.subr.mxu0 0.0
        %2259 = vmatpush1.msra.mxu0 0.0
        %2260 = vmatprep.subr.mxu0 0.0
        %2261 = vmatpush1.msra.mxu0 0.0
        %2262 = vmatprep.subr.mxu0 0.0
        %2263 = vmatpush1.msra.mxu0 0.0
        %2264 = vmatprep.subr.mxu0 0.0
        %2265 = vmatpush1.msra.mxu0 0.0
        %2266 = vmatprep.subr.mxu0 0.0
        %2267 = vmatpush1.msra.mxu0 0.0
        %2268 = vmatprep.subr.mxu0 0.0
        %2269 = vmatpush1.msra.mxu0 0.0
        %2270 = vmatprep.subr.mxu0 0.0
        %2271 = vmatpush1.msra.mxu0 0.0
        %2272 = vmatprep.subr.mxu0 0.0
        %2273 = vmatpush1.msra.mxu0 0.0
        %2274 = vmatprep.subr.mxu0 0.0
        %2275 = vmatpush1.msra.mxu0 %v2242
        %2276 = vmatprep.subr.mxu0 0.0
        %2277 = vmatpush2.msra.mxu0 0.0
        %2278 = vmatprep.subr.mxu0 0.0
        %2279 = vmatpush2.msra.mxu0 0.0
        %2280 = vmatprep.subr.mxu0 0.0
        %2281 = vmatpush2.msra.mxu0 0.0
        %2282 = vmatprep.subr.mxu0 0.0
        %2283 = vmatpush2.msra.mxu0 0.0
        %2284 = vmatprep.subr.mxu0 0.0
        %2285 = vmatpush2.msra.mxu0 0.0
        %2286 = vmatprep.subr.mxu0 0.0
        %2287 = vmatpush2.msra.mxu0 0.0
        %2288 = vmatprep.subr.mxu0 0.0
        %2289 = vmatpush2.msra.mxu0 0.0
        %2290 = vmatprep.subr.mxu0 0.0
        %2291 = vmatpush2.msra.mxu0 0.0
        %2292 = vmatprep.subr.mxu0 0.0
        %2293 = vmatpush2.msra.mxu0 0.0
        %2294 = vmatprep.subr.mxu0 0.0
        %2295 = vmatpush2.msra.mxu0 0.0
        %2296 = vmatprep.subr.mxu0 0.0
        %2297 = vmatpush2.msra.mxu0 0.0
        %2298 = vmatprep.subr.mxu0 0.0
        %2299 = vmatpush2.msra.mxu0 0.0
        %2300 = vmatprep.subr.mxu0 0.0
        %2301 = vmatpush2.msra.mxu0 0.0
        %2302 = vmatprep.subr.mxu0 0.0
        %2303 = vmatpush2.msra.mxu0 0.0
        %2304 = vmatprep.subr.mxu0 0.0
        %2305 = vmatpush2.msra.mxu0 0.0
        %2306 = vmatprep.subr.mxu0 0.0
        %2307 = vmatpush2.msra.mxu0 0.0
        %2308 = vmatprep.mubr.f32.mxu0 0.0
        %2309 = vmatmul.mubr.f32.gmra.mxu0 %v373
        %v2310 = vpop.f32.mrf.mxu0
        %v2311 = vadd.f32 %v370, %v2310
        %v2312 = vpop.f32.mrf.mxu0
        %2313 = vdwg.mxu0
        %v2314 = vmul.f32 %v2311, %v2311
        %v2315 = vsel %vm449, %v2314, 0.0
        %2316 = vadd.xlane.f32.xlu0 %v2315
        %v2317 = vpop.xlane.xlu0 %2316
        %v2318 = vmax.f32 %v2317, 1e-24
        %v2319 = vrsqrt.pop %v2318
        %v2320 = vmul.f32 %v2311, %v2319
        %v2322 = vcombine.high %v2320, %v2320
        %v2324 = vunpack.c.l.s4 1966171168
        %v2325 = vunpack.c.0.s8 %v2324
        %v2326 = vlaneseq
        %v2327 = vshrl.u32 %v2326, 7
        %v2328 = vsub.s32 %v2325, %v2327
        %v2329 = vrot.slane %v2320, %v2328
        %v2331 = vunpack.c.l.s4 1966171168
        %v2332 = vunpack.c.0.s8 %v2331
        %v2333 = vlaneseq
        %v2334 = vshrl.u32 %v2333, 7
        %v2335 = vsub.s32 %v2332, %v2334
        %v2336 = vrot.slane %v2322, %v2335
        %v2337 = vcombine.high %v2329, %v2329
        %v2338 = vcombine.high %v2336, %v2336
        %v2340 = vunpack.c.l.s4 1966171168
        %v2341 = vunpack.c.0.s8 %v2340
        %v2342 = vlaneseq
        %v2343 = vshrl.u32 %v2342, 7
        %v2344 = vsub.s32 %v2341, %v2343
        %v2345 = vrot.slane %v2329, %v2344
        %v2347 = vunpack.c.l.s4 1966171168
        %v2348 = vunpack.c.0.s8 %v2347
        %v2349 = vlaneseq
        %v2350 = vshrl.u32 %v2349, 7
        %v2351 = vsub.s32 %v2348, %v2350
        %v2352 = vrot.slane %v2336, %v2351
        %v2354 = vunpack.c.l.s4 1966171168
        %v2355 = vunpack.c.0.s8 %v2354
        %v2356 = vlaneseq
        %v2357 = vshrl.u32 %v2356, 7
        %v2358 = vsub.s32 %v2355, %v2357
        %v2359 = vrot.slane %v2337, %v2358
        %v2361 = vunpack.c.l.s4 1966171168
        %v2362 = vunpack.c.0.s8 %v2361
        %v2363 = vlaneseq
        %v2364 = vshrl.u32 %v2363, 7
        %v2365 = vsub.s32 %v2362, %v2364
        %v2366 = vrot.slane %v2338, %v2365
        %v2367 = vcombine.high %v2345, %v2345
        %v2368 = vcombine.high %v2352, %v2352
        %v2369 = vcombine.high %v2359, %v2359
        %v2370 = vcombine.high %v2366, %v2366
        %2379 = vst.msk [vmem:[%s260 + $0x8] sm:$0x1] %vm514, %v2345
        %2380 = vst.msk [vmem:[%s260 + $0x18] sm:$0x1] %vm514, %v2359
        %2381 = vst.msk [vmem:[%s260 + $0x28] sm:$0x1] %vm514, %v2367
        %2382 = vst.msk [vmem:[%s260 + $0x38] sm:$0x1] %vm514, %v2369
        %2383 = vst.msk [vmem:[%s260 + $0x48] sm:$0x1] %vm514, %v2352
        %2384 = vst.msk [vmem:[%s260 + $0x58] sm:$0x1] %vm514, %v2366
        %2385 = vst.msk [vmem:[%s260 + $0x68] sm:$0x1] %vm514, %v2368
        %2386 = vst.msk [vmem:[%s260 + $0x78] sm:$0x1] %vm514, %v2370
        %v2387 = vld [vmem:[%s234 + $0x9] sm:$0x1]
        %v2388 = vld [vmem:[%s234 + $0x19] sm:$0x1]
        %v2389 = vld [vmem:[%s234 + $0x29] sm:$0x1]
        %v2390 = vld [vmem:[%s234 + $0x39] sm:$0x1]
        %v2395 = vrot.slane %v2388, 7
        %v2396 = vsel %vm281, %v2395, %v2387
        %v2397 = vrot.slane %v2389, 6
        %v2398 = vsel %vm284, %v2397, %v2396
        %v2399 = vrot.slane %v2390, 5
        %v2400 = vsel %vm287, %v2399, %v2398
        %v2401 = vsel %vm293, %v2400, 0
        %2403 = vmatprep.subr.mxu0 0.0
        %2404 = vmatpush1.msra.mxu0 0.0
        %2405 = vmatprep.subr.mxu0 0.0
        %2406 = vmatpush1.msra.mxu0 0.0
        %2407 = vmatprep.subr.mxu0 0.0
        %2408 = vmatpush1.msra.mxu0 0.0
        %2409 = vmatprep.subr.mxu0 0.0
        %2410 = vmatpush1.msra.mxu0 0.0
        %2411 = vmatprep.subr.mxu0 0.0
        %2412 = vmatpush1.msra.mxu0 0.0
        %2413 = vmatprep.subr.mxu0 0.0
        %2414 = vmatpush1.msra.mxu0 0.0
        %2415 = vmatprep.subr.mxu0 0.0
        %2416 = vmatpush1.msra.mxu0 0.0
        %2417 = vmatprep.subr.mxu0 0.0
        %2418 = vmatpush1.msra.mxu0 0.0
        %2419 = vmatprep.subr.mxu0 0.0
        %2420 = vmatpush1.msra.mxu0 0.0
        %2421 = vmatprep.subr.mxu0 0.0
        %2422 = vmatpush1.msra.mxu0 0.0
        %2423 = vmatprep.subr.mxu0 0.0
        %2424 = vmatpush1.msra.mxu0 0.0
        %2425 = vmatprep.subr.mxu0 0.0
        %2426 = vmatpush1.msra.mxu0 0.0
        %2427 = vmatprep.subr.mxu0 0.0
        %2428 = vmatpush1.msra.mxu0 0.0
        %2429 = vmatprep.subr.mxu0 0.0
        %2430 = vmatpush1.msra.mxu0 0.0
        %2431 = vmatprep.subr.mxu0 0.0
        %2432 = vmatpush1.msra.mxu0 0.0
        %2433 = vmatprep.subr.mxu0 0.0
        %2434 = vmatpush1.msra.mxu0 %v2401
        %2435 = vmatprep.subr.mxu0 0.0
        %2436 = vmatpush2.msra.mxu0 0.0
        %2437 = vmatprep.subr.mxu0 0.0
        %2438 = vmatpush2.msra.mxu0 0.0
        %2439 = vmatprep.subr.mxu0 0.0
        %2440 = vmatpush2.msra.mxu0 0.0
        %2441 = vmatprep.subr.mxu0 0.0
        %2442 = vmatpush2.msra.mxu0 0.0
        %2443 = vmatprep.subr.mxu0 0.0
        %2444 = vmatpush2.msra.mxu0 0.0
        %2445 = vmatprep.subr.mxu0 0.0
        %2446 = vmatpush2.msra.mxu0 0.0
        %2447 = vmatprep.subr.mxu0 0.0
        %2448 = vmatpush2.msra.mxu0 0.0
        %2449 = vmatprep.subr.mxu0 0.0
        %2450 = vmatpush2.msra.mxu0 0.0
        %2451 = vmatprep.subr.mxu0 0.0
        %2452 = vmatpush2.msra.mxu0 0.0
        %2453 = vmatprep.subr.mxu0 0.0
        %2454 = vmatpush2.msra.mxu0 0.0
        %2455 = vmatprep.subr.mxu0 0.0
        %2456 = vmatpush2.msra.mxu0 0.0
        %2457 = vmatprep.subr.mxu0 0.0
        %2458 = vmatpush2.msra.mxu0 0.0
        %2459 = vmatprep.subr.mxu0 0.0
        %2460 = vmatpush2.msra.mxu0 0.0
        %2461 = vmatprep.subr.mxu0 0.0
        %2462 = vmatpush2.msra.mxu0 0.0
        %2463 = vmatprep.subr.mxu0 0.0
        %2464 = vmatpush2.msra.mxu0 0.0
        %2465 = vmatprep.subr.mxu0 0.0
        %2466 = vmatpush2.msra.mxu0 0.0
        %2467 = vmatprep.mubr.f32.mxu0 0.0
        %2468 = vmatmul.mubr.f32.gmra.mxu0 %v291
        %v2469 = vpop.f32.mrf.mxu0
        %v2470 = vadd.f32 %v274, %v2469
        %v2471 = vpop.f32.mrf.mxu0
        %2472 = vdwg.mxu0
        %v2473 = vmax.f32 %v2470, 0.0
        %v2475 = vsel %vm293, %v2473, 0
        %2477 = vmatprep.subr.mxu0 0.0
        %2478 = vmatpush1.msra.mxu0 0.0
        %2479 = vmatprep.subr.mxu0 0.0
        %2480 = vmatpush1.msra.mxu0 0.0
        %2481 = vmatprep.subr.mxu0 0.0
        %2482 = vmatpush1.msra.mxu0 0.0
        %2483 = vmatprep.subr.mxu0 0.0
        %2484 = vmatpush1.msra.mxu0 0.0
        %2485 = vmatprep.subr.mxu0 0.0
        %2486 = vmatpush1.msra.mxu0 0.0
        %2487 = vmatprep.subr.mxu0 0.0
        %2488 = vmatpush1.msra.mxu0 0.0
        %2489 = vmatprep.subr.mxu0 0.0
        %2490 = vmatpush1.msra.mxu0 0.0
        %2491 = vmatprep.subr.mxu0 0.0
        %2492 = vmatpush1.msra.mxu0 0.0
        %2493 = vmatprep.subr.mxu0 0.0
        %2494 = vmatpush1.msra.mxu0 0.0
        %2495 = vmatprep.subr.mxu0 0.0
        %2496 = vmatpush1.msra.mxu0 0.0
        %2497 = vmatprep.subr.mxu0 0.0
        %2498 = vmatpush1.msra.mxu0 0.0
        %2499 = vmatprep.subr.mxu0 0.0
        %2500 = vmatpush1.msra.mxu0 0.0
        %2501 = vmatprep.subr.mxu0 0.0
        %2502 = vmatpush1.msra.mxu0 0.0
        %2503 = vmatprep.subr.mxu0 0.0
        %2504 = vmatpush1.msra.mxu0 0.0
        %2505 = vmatprep.subr.mxu0 0.0
        %2506 = vmatpush1.msra.mxu0 0.0
        %2507 = vmatprep.subr.mxu0 0.0
        %2508 = vmatpush1.msra.mxu0 %v2475
        %2509 = vmatprep.subr.mxu0 0.0
        %2510 = vmatpush2.msra.mxu0 0.0
        %2511 = vmatprep.subr.mxu0 0.0
        %2512 = vmatpush2.msra.mxu0 0.0
        %2513 = vmatprep.subr.mxu0 0.0
        %2514 = vmatpush2.msra.mxu0 0.0
        %2515 = vmatprep.subr.mxu0 0.0
        %2516 = vmatpush2.msra.mxu0 0.0
        %2517 = vmatprep.subr.mxu0 0.0
        %2518 = vmatpush2.msra.mxu0 0.0
        %2519 = vmatprep.subr.mxu0 0.0
        %2520 = vmatpush2.msra.mxu0 0.0
        %2521 = vmatprep.subr.mxu0 0.0
        %2522 = vmatpush2.msra.mxu0 0.0
        %2523 = vmatprep.subr.mxu0 0.0
        %2524 = vmatpush2.msra.mxu0 0.0
        %2525 = vmatprep.subr.mxu0 0.0
        %2526 = vmatpush2.msra.mxu0 0.0
        %2527 = vmatprep.subr.mxu0 0.0
        %2528 = vmatpush2.msra.mxu0 0.0
        %2529 = vmatprep.subr.mxu0 0.0
        %2530 = vmatpush2.msra.mxu0 0.0
        %2531 = vmatprep.subr.mxu0 0.0
        %2532 = vmatpush2.msra.mxu0 0.0
        %2533 = vmatprep.subr.mxu0 0.0
        %2534 = vmatpush2.msra.mxu0 0.0
        %2535 = vmatprep.subr.mxu0 0.0
        %2536 = vmatpush2.msra.mxu0 0.0
        %2537 = vmatprep.subr.mxu0 0.0
        %2538 = vmatpush2.msra.mxu0 0.0
        %2539 = vmatprep.subr.mxu0 0.0
        %2540 = vmatpush2.msra.mxu0 0.0
        %2541 = vmatprep.mubr.f32.mxu0 0.0
        %2542 = vmatmul.mubr.f32.gmra.mxu0 %v373
        %v2543 = vpop.f32.mrf.mxu0
        %v2544 = vadd.f32 %v370, %v2543
        %v2545 = vpop.f32.mrf.mxu0
        %2546 = vdwg.mxu0
        %v2547 = vmul.f32 %v2544, %v2544
        %v2548 = vsel %vm449, %v2547, 0.0
        %2549 = vadd.xlane.f32.xlu0 %v2548
        %v2550 = vpop.xlane.xlu0 %2549
        %v2551 = vmax.f32 %v2550, 1e-24
        %v2552 = vrsqrt.pop %v2551
        %v2553 = vmul.f32 %v2544, %v2552
        %v2555 = vcombine.high %v2553, %v2553
        %v2557 = vunpack.c.l.s4 1966171168
        %v2558 = vunpack.c.0.s8 %v2557
        %v2559 = vlaneseq
        %v2560 = vshrl.u32 %v2559, 7
        %v2561 = vsub.s32 %v2558, %v2560
        %v2562 = vrot.slane %v2553, %v2561
        %v2564 = vunpack.c.l.s4 1966171168
        %v2565 = vunpack.c.0.s8 %v2564
        %v2566 = vlaneseq
        %v2567 = vshrl.u32 %v2566, 7
        %v2568 = vsub.s32 %v2565, %v2567
        %v2569 = vrot.slane %v2555, %v2568
        %v2570 = vcombine.high %v2562, %v2562
        %v2571 = vcombine.high %v2569, %v2569
        %v2573 = vunpack.c.l.s4 1966171168
        %v2574 = vunpack.c.0.s8 %v2573
        %v2575 = vlaneseq
        %v2576 = vshrl.u32 %v2575, 7
        %v2577 = vsub.s32 %v2574, %v2576
        %v2578 = vrot.slane %v2562, %v2577
        %v2580 = vunpack.c.l.s4 1966171168
        %v2581 = vunpack.c.0.s8 %v2580
        %v2582 = vlaneseq
        %v2583 = vshrl.u32 %v2582, 7
        %v2584 = vsub.s32 %v2581, %v2583
        %v2585 = vrot.slane %v2569, %v2584
        %v2587 = vunpack.c.l.s4 1966171168
        %v2588 = vunpack.c.0.s8 %v2587
        %v2589 = vlaneseq
        %v2590 = vshrl.u32 %v2589, 7
        %v2591 = vsub.s32 %v2588, %v2590
        %v2592 = vrot.slane %v2570, %v2591
        %v2594 = vunpack.c.l.s4 1966171168
        %v2595 = vunpack.c.0.s8 %v2594
        %v2596 = vlaneseq
        %v2597 = vshrl.u32 %v2596, 7
        %v2598 = vsub.s32 %v2595, %v2597
        %v2599 = vrot.slane %v2571, %v2598
        %v2600 = vcombine.high %v2578, %v2578
        %v2601 = vcombine.high %v2585, %v2585
        %v2602 = vcombine.high %v2592, %v2592
        %v2603 = vcombine.high %v2599, %v2599
        %2612 = vst.msk [vmem:[%s260 + $0x9] sm:$0x1] %vm514, %v2578
        %2613 = vst.msk [vmem:[%s260 + $0x19] sm:$0x1] %vm514, %v2592
        %2614 = vst.msk [vmem:[%s260 + $0x29] sm:$0x1] %vm514, %v2600
        %2615 = vst.msk [vmem:[%s260 + $0x39] sm:$0x1] %vm514, %v2602
        %2616 = vst.msk [vmem:[%s260 + $0x49] sm:$0x1] %vm514, %v2585
        %2617 = vst.msk [vmem:[%s260 + $0x59] sm:$0x1] %vm514, %v2599
        %2618 = vst.msk [vmem:[%s260 + $0x69] sm:$0x1] %vm514, %v2601
        %2619 = vst.msk [vmem:[%s260 + $0x79] sm:$0x1] %vm514, %v2603
        %v2620 = vld [vmem:[%s234 + $0xa] sm:$0x1]
        %v2621 = vld [vmem:[%s234 + $0x1a] sm:$0x1]
        %v2622 = vld [vmem:[%s234 + $0x2a] sm:$0x1]
        %v2623 = vld [vmem:[%s234 + $0x3a] sm:$0x1]
        %v2628 = vrot.slane %v2621, 7
        %v2629 = vsel %vm281, %v2628, %v2620
        %v2630 = vrot.slane %v2622, 6
        %v2631 = vsel %vm284, %v2630, %v2629
        %v2632 = vrot.slane %v2623, 5
        %v2633 = vsel %vm287, %v2632, %v2631
        %v2634 = vsel %vm293, %v2633, 0
        %2636 = vmatprep.subr.mxu0 0.0
        %2637 = vmatpush1.msra.mxu0 0.0
        %2638 = vmatprep.subr.mxu0 0.0
        %2639 = vmatpush1.msra.mxu0 0.0
        %2640 = vmatprep.subr.mxu0 0.0
        %2641 = vmatpush1.msra.mxu0 0.0
        %2642 = vmatprep.subr.mxu0 0.0
        %2643 = vmatpush1.msra.mxu0 0.0
        %2644 = vmatprep.subr.mxu0 0.0
        %2645 = vmatpush1.msra.mxu0 0.0
        %2646 = vmatprep.subr.mxu0 0.0
        %2647 = vmatpush1.msra.mxu0 0.0
        %2648 = vmatprep.subr.mxu0 0.0
        %2649 = vmatpush1.msra.mxu0 0.0
        %2650 = vmatprep.subr.mxu0 0.0
        %2651 = vmatpush1.msra.mxu0 0.0
        %2652 = vmatprep.subr.mxu0 0.0
        %2653 = vmatpush1.msra.mxu0 0.0
        %2654 = vmatprep.subr.mxu0 0.0
        %2655 = vmatpush1.msra.mxu0 0.0
        %2656 = vmatprep.subr.mxu0 0.0
        %2657 = vmatpush1.msra.mxu0 0.0
        %2658 = vmatprep.subr.mxu0 0.0
        %2659 = vmatpush1.msra.mxu0 0.0
        %2660 = vmatprep.subr.mxu0 0.0
        %2661 = vmatpush1.msra.mxu0 0.0
        %2662 = vmatprep.subr.mxu0 0.0
        %2663 = vmatpush1.msra.mxu0 0.0
        %2664 = vmatprep.subr.mxu0 0.0
        %2665 = vmatpush1.msra.mxu0 0.0
        %2666 = vmatprep.subr.mxu0 0.0
        %2667 = vmatpush1.msra.mxu0 %v2634
        %2668 = vmatprep.subr.mxu0 0.0
        %2669 = vmatpush2.msra.mxu0 0.0
        %2670 = vmatprep.subr.mxu0 0.0
        %2671 = vmatpush2.msra.mxu0 0.0
        %2672 = vmatprep.subr.mxu0 0.0
        %2673 = vmatpush2.msra.mxu0 0.0
        %2674 = vmatprep.subr.mxu0 0.0
        %2675 = vmatpush2.msra.mxu0 0.0
        %2676 = vmatprep.subr.mxu0 0.0
        %2677 = vmatpush2.msra.mxu0 0.0
        %2678 = vmatprep.subr.mxu0 0.0
        %2679 = vmatpush2.msra.mxu0 0.0
        %2680 = vmatprep.subr.mxu0 0.0
        %2681 = vmatpush2.msra.mxu0 0.0
        %2682 = vmatprep.subr.mxu0 0.0
        %2683 = vmatpush2.msra.mxu0 0.0
        %2684 = vmatprep.subr.mxu0 0.0
        %2685 = vmatpush2.msra.mxu0 0.0
        %2686 = vmatprep.subr.mxu0 0.0
        %2687 = vmatpush2.msra.mxu0 0.0
        %2688 = vmatprep.subr.mxu0 0.0
        %2689 = vmatpush2.msra.mxu0 0.0
        %2690 = vmatprep.subr.mxu0 0.0
        %2691 = vmatpush2.msra.mxu0 0.0
        %2692 = vmatprep.subr.mxu0 0.0
        %2693 = vmatpush2.msra.mxu0 0.0
        %2694 = vmatprep.subr.mxu0 0.0
        %2695 = vmatpush2.msra.mxu0 0.0
        %2696 = vmatprep.subr.mxu0 0.0
        %2697 = vmatpush2.msra.mxu0 0.0
        %2698 = vmatprep.subr.mxu0 0.0
        %2699 = vmatpush2.msra.mxu0 0.0
        %2700 = vmatprep.mubr.f32.mxu0 0.0
        %2701 = vmatmul.mubr.f32.gmra.mxu0 %v291
        %v2702 = vpop.f32.mrf.mxu0
        %v2703 = vadd.f32 %v274, %v2702
        %v2704 = vpop.f32.mrf.mxu0
        %2705 = vdwg.mxu0
        %v2706 = vmax.f32 %v2703, 0.0
        %v2708 = vsel %vm293, %v2706, 0
        %2710 = vmatprep.subr.mxu0 0.0
        %2711 = vmatpush1.msra.mxu0 0.0
        %2712 = vmatprep.subr.mxu0 0.0
        %2713 = vmatpush1.msra.mxu0 0.0
        %2714 = vmatprep.subr.mxu0 0.0
        %2715 = vmatpush1.msra.mxu0 0.0
        %2716 = vmatprep.subr.mxu0 0.0
        %2717 = vmatpush1.msra.mxu0 0.0
        %2718 = vmatprep.subr.mxu0 0.0
        %2719 = vmatpush1.msra.mxu0 0.0
        %2720 = vmatprep.subr.mxu0 0.0
        %2721 = vmatpush1.msra.mxu0 0.0
        %2722 = vmatprep.subr.mxu0 0.0
        %2723 = vmatpush1.msra.mxu0 0.0
        %2724 = vmatprep.subr.mxu0 0.0
        %2725 = vmatpush1.msra.mxu0 0.0
        %2726 = vmatprep.subr.mxu0 0.0
        %2727 = vmatpush1.msra.mxu0 0.0
        %2728 = vmatprep.subr.mxu0 0.0
        %2729 = vmatpush1.msra.mxu0 0.0
        %2730 = vmatprep.subr.mxu0 0.0
        %2731 = vmatpush1.msra.mxu0 0.0
        %2732 = vmatprep.subr.mxu0 0.0
        %2733 = vmatpush1.msra.mxu0 0.0
        %2734 = vmatprep.subr.mxu0 0.0
        %2735 = vmatpush1.msra.mxu0 0.0
        %2736 = vmatprep.subr.mxu0 0.0
        %2737 = vmatpush1.msra.mxu0 0.0
        %2738 = vmatprep.subr.mxu0 0.0
        %2739 = vmatpush1.msra.mxu0 0.0
        %2740 = vmatprep.subr.mxu0 0.0
        %2741 = vmatpush1.msra.mxu0 %v2708
        %2742 = vmatprep.subr.mxu0 0.0
        %2743 = vmatpush2.msra.mxu0 0.0
        %2744 = vmatprep.subr.mxu0 0.0
        %2745 = vmatpush2.msra.mxu0 0.0
        %2746 = vmatprep.subr.mxu0 0.0
        %2747 = vmatpush2.msra.mxu0 0.0
        %2748 = vmatprep.subr.mxu0 0.0
        %2749 = vmatpush2.msra.mxu0 0.0
        %2750 = vmatprep.subr.mxu0 0.0
        %2751 = vmatpush2.msra.mxu0 0.0
        %2752 = vmatprep.subr.mxu0 0.0
        %2753 = vmatpush2.msra.mxu0 0.0
        %2754 = vmatprep.subr.mxu0 0.0
        %2755 = vmatpush2.msra.mxu0 0.0
        %2756 = vmatprep.subr.mxu0 0.0
        %2757 = vmatpush2.msra.mxu0 0.0
        %2758 = vmatprep.subr.mxu0 0.0
        %2759 = vmatpush2.msra.mxu0 0.0
        %2760 = vmatprep.subr.mxu0 0.0
        %2761 = vmatpush2.msra.mxu0 0.0
        %2762 = vmatprep.subr.mxu0 0.0
        %2763 = vmatpush2.msra.mxu0 0.0
        %2764 = vmatprep.subr.mxu0 0.0
        %2765 = vmatpush2.msra.mxu0 0.0
        %2766 = vmatprep.subr.mxu0 0.0
        %2767 = vmatpush2.msra.mxu0 0.0
        %2768 = vmatprep.subr.mxu0 0.0
        %2769 = vmatpush2.msra.mxu0 0.0
        %2770 = vmatprep.subr.mxu0 0.0
        %2771 = vmatpush2.msra.mxu0 0.0
        %2772 = vmatprep.subr.mxu0 0.0
        %2773 = vmatpush2.msra.mxu0 0.0
        %2774 = vmatprep.mubr.f32.mxu0 0.0
        %2775 = vmatmul.mubr.f32.gmra.mxu0 %v373
        %v2776 = vpop.f32.mrf.mxu0
        %v2777 = vadd.f32 %v370, %v2776
        %v2778 = vpop.f32.mrf.mxu0
        %2779 = vdwg.mxu0
        %v2780 = vmul.f32 %v2777, %v2777
        %v2781 = vsel %vm449, %v2780, 0.0
        %2782 = vadd.xlane.f32.xlu0 %v2781
        %v2783 = vpop.xlane.xlu0 %2782
        %v2784 = vmax.f32 %v2783, 1e-24
        %v2785 = vrsqrt.pop %v2784
        %v2786 = vmul.f32 %v2777, %v2785
        %v2788 = vcombine.high %v2786, %v2786
        %v2790 = vunpack.c.l.s4 1966171168
        %v2791 = vunpack.c.0.s8 %v2790
        %v2792 = vlaneseq
        %v2793 = vshrl.u32 %v2792, 7
        %v2794 = vsub.s32 %v2791, %v2793
        %v2795 = vrot.slane %v2786, %v2794
        %v2797 = vunpack.c.l.s4 1966171168
        %v2798 = vunpack.c.0.s8 %v2797
        %v2799 = vlaneseq
        %v2800 = vshrl.u32 %v2799, 7
        %v2801 = vsub.s32 %v2798, %v2800
        %v2802 = vrot.slane %v2788, %v2801
        %v2803 = vcombine.high %v2795, %v2795
        %v2804 = vcombine.high %v2802, %v2802
        %v2806 = vunpack.c.l.s4 1966171168
        %v2807 = vunpack.c.0.s8 %v2806
        %v2808 = vlaneseq
        %v2809 = vshrl.u32 %v2808, 7
        %v2810 = vsub.s32 %v2807, %v2809
        %v2811 = vrot.slane %v2795, %v2810
        %v2813 = vunpack.c.l.s4 1966171168
        %v2814 = vunpack.c.0.s8 %v2813
        %v2815 = vlaneseq
        %v2816 = vshrl.u32 %v2815, 7
        %v2817 = vsub.s32 %v2814, %v2816
        %v2818 = vrot.slane %v2802, %v2817
        %v2820 = vunpack.c.l.s4 1966171168
        %v2821 = vunpack.c.0.s8 %v2820
        %v2822 = vlaneseq
        %v2823 = vshrl.u32 %v2822, 7
        %v2824 = vsub.s32 %v2821, %v2823
        %v2825 = vrot.slane %v2803, %v2824
        %v2827 = vunpack.c.l.s4 1966171168
        %v2828 = vunpack.c.0.s8 %v2827
        %v2829 = vlaneseq
        %v2830 = vshrl.u32 %v2829, 7
        %v2831 = vsub.s32 %v2828, %v2830
        %v2832 = vrot.slane %v2804, %v2831
        %v2833 = vcombine.high %v2811, %v2811
        %v2834 = vcombine.high %v2818, %v2818
        %v2835 = vcombine.high %v2825, %v2825
        %v2836 = vcombine.high %v2832, %v2832
        %2845 = vst.msk [vmem:[%s260 + $0xa] sm:$0x1] %vm514, %v2811
        %2846 = vst.msk [vmem:[%s260 + $0x1a] sm:$0x1] %vm514, %v2825
        %2847 = vst.msk [vmem:[%s260 + $0x2a] sm:$0x1] %vm514, %v2833
        %2848 = vst.msk [vmem:[%s260 + $0x3a] sm:$0x1] %vm514, %v2835
        %2849 = vst.msk [vmem:[%s260 + $0x4a] sm:$0x1] %vm514, %v2818
        %2850 = vst.msk [vmem:[%s260 + $0x5a] sm:$0x1] %vm514, %v2832
        %2851 = vst.msk [vmem:[%s260 + $0x6a] sm:$0x1] %vm514, %v2834
        %2852 = vst.msk [vmem:[%s260 + $0x7a] sm:$0x1] %vm514, %v2836
        %v2853 = vld [vmem:[%s234 + $0xb] sm:$0x1]
        %v2854 = vld [vmem:[%s234 + $0x1b] sm:$0x1]
        %v2855 = vld [vmem:[%s234 + $0x2b] sm:$0x1]
        %v2856 = vld [vmem:[%s234 + $0x3b] sm:$0x1]
        %v2861 = vrot.slane %v2854, 7
        %v2862 = vsel %vm281, %v2861, %v2853
        %v2863 = vrot.slane %v2855, 6
        %v2864 = vsel %vm284, %v2863, %v2862
        %v2865 = vrot.slane %v2856, 5
        %v2866 = vsel %vm287, %v2865, %v2864
        %v2867 = vsel %vm293, %v2866, 0
        %2869 = vmatprep.subr.mxu0 0.0
        %2870 = vmatpush1.msra.mxu0 0.0
        %2871 = vmatprep.subr.mxu0 0.0
        %2872 = vmatpush1.msra.mxu0 0.0
        %2873 = vmatprep.subr.mxu0 0.0
        %2874 = vmatpush1.msra.mxu0 0.0
        %2875 = vmatprep.subr.mxu0 0.0
        %2876 = vmatpush1.msra.mxu0 0.0
        %2877 = vmatprep.subr.mxu0 0.0
        %2878 = vmatpush1.msra.mxu0 0.0
        %2879 = vmatprep.subr.mxu0 0.0
        %2880 = vmatpush1.msra.mxu0 0.0
        %2881 = vmatprep.subr.mxu0 0.0
        %2882 = vmatpush1.msra.mxu0 0.0
        %2883 = vmatprep.subr.mxu0 0.0
        %2884 = vmatpush1.msra.mxu0 0.0
        %2885 = vmatprep.subr.mxu0 0.0
        %2886 = vmatpush1.msra.mxu0 0.0
        %2887 = vmatprep.subr.mxu0 0.0
        %2888 = vmatpush1.msra.mxu0 0.0
        %2889 = vmatprep.subr.mxu0 0.0
        %2890 = vmatpush1.msra.mxu0 0.0
        %2891 = vmatprep.subr.mxu0 0.0
        %2892 = vmatpush1.msra.mxu0 0.0
        %2893 = vmatprep.subr.mxu0 0.0
        %2894 = vmatpush1.msra.mxu0 0.0
        %2895 = vmatprep.subr.mxu0 0.0
        %2896 = vmatpush1.msra.mxu0 0.0
        %2897 = vmatprep.subr.mxu0 0.0
        %2898 = vmatpush1.msra.mxu0 0.0
        %2899 = vmatprep.subr.mxu0 0.0
        %2900 = vmatpush1.msra.mxu0 %v2867
        %2901 = vmatprep.subr.mxu0 0.0
        %2902 = vmatpush2.msra.mxu0 0.0
        %2903 = vmatprep.subr.mxu0 0.0
        %2904 = vmatpush2.msra.mxu0 0.0
        %2905 = vmatprep.subr.mxu0 0.0
        %2906 = vmatpush2.msra.mxu0 0.0
        %2907 = vmatprep.subr.mxu0 0.0
        %2908 = vmatpush2.msra.mxu0 0.0
        %2909 = vmatprep.subr.mxu0 0.0
        %2910 = vmatpush2.msra.mxu0 0.0
        %2911 = vmatprep.subr.mxu0 0.0
        %2912 = vmatpush2.msra.mxu0 0.0
        %2913 = vmatprep.subr.mxu0 0.0
        %2914 = vmatpush2.msra.mxu0 0.0
        %2915 = vmatprep.subr.mxu0 0.0
        %2916 = vmatpush2.msra.mxu0 0.0
        %2917 = vmatprep.subr.mxu0 0.0
        %2918 = vmatpush2.msra.mxu0 0.0
        %2919 = vmatprep.subr.mxu0 0.0
        %2920 = vmatpush2.msra.mxu0 0.0
        %2921 = vmatprep.subr.mxu0 0.0
        %2922 = vmatpush2.msra.mxu0 0.0
        %2923 = vmatprep.subr.mxu0 0.0
        %2924 = vmatpush2.msra.mxu0 0.0
        %2925 = vmatprep.subr.mxu0 0.0
        %2926 = vmatpush2.msra.mxu0 0.0
        %2927 = vmatprep.subr.mxu0 0.0
        %2928 = vmatpush2.msra.mxu0 0.0
        %2929 = vmatprep.subr.mxu0 0.0
        %2930 = vmatpush2.msra.mxu0 0.0
        %2931 = vmatprep.subr.mxu0 0.0
        %2932 = vmatpush2.msra.mxu0 0.0
        %2933 = vmatprep.mubr.f32.mxu0 0.0
        %2934 = vmatmul.mubr.f32.gmra.mxu0 %v291
        %v2935 = vpop.f32.mrf.mxu0
        %v2936 = vadd.f32 %v274, %v2935
        %v2937 = vpop.f32.mrf.mxu0
        %2938 = vdwg.mxu0
        %v2939 = vmax.f32 %v2936, 0.0
        %v2941 = vsel %vm293, %v2939, 0
        %2943 = vmatprep.subr.mxu0 0.0
        %2944 = vmatpush1.msra.mxu0 0.0
        %2945 = vmatprep.subr.mxu0 0.0
        %2946 = vmatpush1.msra.mxu0 0.0
        %2947 = vmatprep.subr.mxu0 0.0
        %2948 = vmatpush1.msra.mxu0 0.0
        %2949 = vmatprep.subr.mxu0 0.0
        %2950 = vmatpush1.msra.mxu0 0.0
        %2951 = vmatprep.subr.mxu0 0.0
        %2952 = vmatpush1.msra.mxu0 0.0
        %2953 = vmatprep.subr.mxu0 0.0
        %2954 = vmatpush1.msra.mxu0 0.0
        %2955 = vmatprep.subr.mxu0 0.0
        %2956 = vmatpush1.msra.mxu0 0.0
        %2957 = vmatprep.subr.mxu0 0.0
        %2958 = vmatpush1.msra.mxu0 0.0
        %2959 = vmatprep.subr.mxu0 0.0
        %2960 = vmatpush1.msra.mxu0 0.0
        %2961 = vmatprep.subr.mxu0 0.0
        %2962 = vmatpush1.msra.mxu0 0.0
        %2963 = vmatprep.subr.mxu0 0.0
        %2964 = vmatpush1.msra.mxu0 0.0
        %2965 = vmatprep.subr.mxu0 0.0
        %2966 = vmatpush1.msra.mxu0 0.0
        %2967 = vmatprep.subr.mxu0 0.0
        %2968 = vmatpush1.msra.mxu0 0.0
        %2969 = vmatprep.subr.mxu0 0.0
        %2970 = vmatpush1.msra.mxu0 0.0
        %2971 = vmatprep.subr.mxu0 0.0
        %2972 = vmatpush1.msra.mxu0 0.0
        %2973 = vmatprep.subr.mxu0 0.0
        %2974 = vmatpush1.msra.mxu0 %v2941
        %2975 = vmatprep.subr.mxu0 0.0
        %2976 = vmatpush2.msra.mxu0 0.0
        %2977 = vmatprep.subr.mxu0 0.0
        %2978 = vmatpush2.msra.mxu0 0.0
        %2979 = vmatprep.subr.mxu0 0.0
        %2980 = vmatpush2.msra.mxu0 0.0
        %2981 = vmatprep.subr.mxu0 0.0
        %2982 = vmatpush2.msra.mxu0 0.0
        %2983 = vmatprep.subr.mxu0 0.0
        %2984 = vmatpush2.msra.mxu0 0.0
        %2985 = vmatprep.subr.mxu0 0.0
        %2986 = vmatpush2.msra.mxu0 0.0
        %2987 = vmatprep.subr.mxu0 0.0
        %2988 = vmatpush2.msra.mxu0 0.0
        %2989 = vmatprep.subr.mxu0 0.0
        %2990 = vmatpush2.msra.mxu0 0.0
        %2991 = vmatprep.subr.mxu0 0.0
        %2992 = vmatpush2.msra.mxu0 0.0
        %2993 = vmatprep.subr.mxu0 0.0
        %2994 = vmatpush2.msra.mxu0 0.0
        %2995 = vmatprep.subr.mxu0 0.0
        %2996 = vmatpush2.msra.mxu0 0.0
        %2997 = vmatprep.subr.mxu0 0.0
        %2998 = vmatpush2.msra.mxu0 0.0
        %2999 = vmatprep.subr.mxu0 0.0
        %3000 = vmatpush2.msra.mxu0 0.0
        %3001 = vmatprep.subr.mxu0 0.0
        %3002 = vmatpush2.msra.mxu0 0.0
        %3003 = vmatprep.subr.mxu0 0.0
        %3004 = vmatpush2.msra.mxu0 0.0
        %3005 = vmatprep.subr.mxu0 0.0
        %3006 = vmatpush2.msra.mxu0 0.0
        %3007 = vmatprep.mubr.f32.mxu0 0.0
        %3008 = vmatmul.mubr.f32.gmra.mxu0 %v373
        %v3009 = vpop.f32.mrf.mxu0
        %v3010 = vadd.f32 %v370, %v3009
        %v3011 = vpop.f32.mrf.mxu0
        %3012 = vdwg.mxu0
        %v3013 = vmul.f32 %v3010, %v3010
        %v3014 = vsel %vm449, %v3013, 0.0
        %3015 = vadd.xlane.f32.xlu0 %v3014
        %v3016 = vpop.xlane.xlu0 %3015
        %v3017 = vmax.f32 %v3016, 1e-24
        %v3018 = vrsqrt.pop %v3017
        %v3019 = vmul.f32 %v3010, %v3018
        %v3021 = vcombine.high %v3019, %v3019
        %v3023 = vunpack.c.l.s4 1966171168
        %v3024 = vunpack.c.0.s8 %v3023
        %v3025 = vlaneseq
        %v3026 = vshrl.u32 %v3025, 7
        %v3027 = vsub.s32 %v3024, %v3026
        %v3028 = vrot.slane %v3019, %v3027
        %v3030 = vunpack.c.l.s4 1966171168
        %v3031 = vunpack.c.0.s8 %v3030
        %v3032 = vlaneseq
        %v3033 = vshrl.u32 %v3032, 7
        %v3034 = vsub.s32 %v3031, %v3033
        %v3035 = vrot.slane %v3021, %v3034
        %v3036 = vcombine.high %v3028, %v3028
        %v3037 = vcombine.high %v3035, %v3035
        %v3039 = vunpack.c.l.s4 1966171168
        %v3040 = vunpack.c.0.s8 %v3039
        %v3041 = vlaneseq
        %v3042 = vshrl.u32 %v3041, 7
        %v3043 = vsub.s32 %v3040, %v3042
        %v3044 = vrot.slane %v3028, %v3043
        %v3046 = vunpack.c.l.s4 1966171168
        %v3047 = vunpack.c.0.s8 %v3046
        %v3048 = vlaneseq
        %v3049 = vshrl.u32 %v3048, 7
        %v3050 = vsub.s32 %v3047, %v3049
        %v3051 = vrot.slane %v3035, %v3050
        %v3053 = vunpack.c.l.s4 1966171168
        %v3054 = vunpack.c.0.s8 %v3053
        %v3055 = vlaneseq
        %v3056 = vshrl.u32 %v3055, 7
        %v3057 = vsub.s32 %v3054, %v3056
        %v3058 = vrot.slane %v3036, %v3057
        %v3060 = vunpack.c.l.s4 1966171168
        %v3061 = vunpack.c.0.s8 %v3060
        %v3062 = vlaneseq
        %v3063 = vshrl.u32 %v3062, 7
        %v3064 = vsub.s32 %v3061, %v3063
        %v3065 = vrot.slane %v3037, %v3064
        %v3066 = vcombine.high %v3044, %v3044
        %v3067 = vcombine.high %v3051, %v3051
        %v3068 = vcombine.high %v3058, %v3058
        %v3069 = vcombine.high %v3065, %v3065
        %3078 = vst.msk [vmem:[%s260 + $0xb] sm:$0x1] %vm514, %v3044
        %3079 = vst.msk [vmem:[%s260 + $0x1b] sm:$0x1] %vm514, %v3058
        %3080 = vst.msk [vmem:[%s260 + $0x2b] sm:$0x1] %vm514, %v3066
        %3081 = vst.msk [vmem:[%s260 + $0x3b] sm:$0x1] %vm514, %v3068
        %3082 = vst.msk [vmem:[%s260 + $0x4b] sm:$0x1] %vm514, %v3051
        %3083 = vst.msk [vmem:[%s260 + $0x5b] sm:$0x1] %vm514, %v3065
        %3084 = vst.msk [vmem:[%s260 + $0x6b] sm:$0x1] %vm514, %v3067
        %3085 = vst.msk [vmem:[%s260 + $0x7b] sm:$0x1] %vm514, %v3069
        %v3086 = vld [vmem:[%s234 + $0xc] sm:$0x1]
        %v3087 = vld [vmem:[%s234 + $0x1c] sm:$0x1]
        %v3088 = vld [vmem:[%s234 + $0x2c] sm:$0x1]
        %v3089 = vld [vmem:[%s234 + $0x3c] sm:$0x1]
        %v3094 = vrot.slane %v3087, 7
        %v3095 = vsel %vm281, %v3094, %v3086
        %v3096 = vrot.slane %v3088, 6
        %v3097 = vsel %vm284, %v3096, %v3095
        %v3098 = vrot.slane %v3089, 5
        %v3099 = vsel %vm287, %v3098, %v3097
        %v3100 = vsel %vm293, %v3099, 0
        %3102 = vmatprep.subr.mxu0 0.0
        %3103 = vmatpush1.msra.mxu0 0.0
        %3104 = vmatprep.subr.mxu0 0.0
        %3105 = vmatpush1.msra.mxu0 0.0
        %3106 = vmatprep.subr.mxu0 0.0
        %3107 = vmatpush1.msra.mxu0 0.0
        %3108 = vmatprep.subr.mxu0 0.0
        %3109 = vmatpush1.msra.mxu0 0.0
        %3110 = vmatprep.subr.mxu0 0.0
        %3111 = vmatpush1.msra.mxu0 0.0
        %3112 = vmatprep.subr.mxu0 0.0
        %3113 = vmatpush1.msra.mxu0 0.0
        %3114 = vmatprep.subr.mxu0 0.0
        %3115 = vmatpush1.msra.mxu0 0.0
        %3116 = vmatprep.subr.mxu0 0.0
        %3117 = vmatpush1.msra.mxu0 0.0
        %3118 = vmatprep.subr.mxu0 0.0
        %3119 = vmatpush1.msra.mxu0 0.0
        %3120 = vmatprep.subr.mxu0 0.0
        %3121 = vmatpush1.msra.mxu0 0.0
        %3122 = vmatprep.subr.mxu0 0.0
        %3123 = vmatpush1.msra.mxu0 0.0
        %3124 = vmatprep.subr.mxu0 0.0
        %3125 = vmatpush1.msra.mxu0 0.0
        %3126 = vmatprep.subr.mxu0 0.0
        %3127 = vmatpush1.msra.mxu0 0.0
        %3128 = vmatprep.subr.mxu0 0.0
        %3129 = vmatpush1.msra.mxu0 0.0
        %3130 = vmatprep.subr.mxu0 0.0
        %3131 = vmatpush1.msra.mxu0 0.0
        %3132 = vmatprep.subr.mxu0 0.0
        %3133 = vmatpush1.msra.mxu0 %v3100
        %3134 = vmatprep.subr.mxu0 0.0
        %3135 = vmatpush2.msra.mxu0 0.0
        %3136 = vmatprep.subr.mxu0 0.0
        %3137 = vmatpush2.msra.mxu0 0.0
        %3138 = vmatprep.subr.mxu0 0.0
        %3139 = vmatpush2.msra.mxu0 0.0
        %3140 = vmatprep.subr.mxu0 0.0
        %3141 = vmatpush2.msra.mxu0 0.0
        %3142 = vmatprep.subr.mxu0 0.0
        %3143 = vmatpush2.msra.mxu0 0.0
        %3144 = vmatprep.subr.mxu0 0.0
        %3145 = vmatpush2.msra.mxu0 0.0
        %3146 = vmatprep.subr.mxu0 0.0
        %3147 = vmatpush2.msra.mxu0 0.0
        %3148 = vmatprep.subr.mxu0 0.0
        %3149 = vmatpush2.msra.mxu0 0.0
        %3150 = vmatprep.subr.mxu0 0.0
        %3151 = vmatpush2.msra.mxu0 0.0
        %3152 = vmatprep.subr.mxu0 0.0
        %3153 = vmatpush2.msra.mxu0 0.0
        %3154 = vmatprep.subr.mxu0 0.0
        %3155 = vmatpush2.msra.mxu0 0.0
        %3156 = vmatprep.subr.mxu0 0.0
        %3157 = vmatpush2.msra.mxu0 0.0
        %3158 = vmatprep.subr.mxu0 0.0
        %3159 = vmatpush2.msra.mxu0 0.0
        %3160 = vmatprep.subr.mxu0 0.0
        %3161 = vmatpush2.msra.mxu0 0.0
        %3162 = vmatprep.subr.mxu0 0.0
        %3163 = vmatpush2.msra.mxu0 0.0
        %3164 = vmatprep.subr.mxu0 0.0
        %3165 = vmatpush2.msra.mxu0 0.0
        %3166 = vmatprep.mubr.f32.mxu0 0.0
        %3167 = vmatmul.mubr.f32.gmra.mxu0 %v291
        %v3168 = vpop.f32.mrf.mxu0
        %v3169 = vadd.f32 %v274, %v3168
        %v3170 = vpop.f32.mrf.mxu0
        %3171 = vdwg.mxu0
        %v3172 = vmax.f32 %v3169, 0.0
        %v3174 = vsel %vm293, %v3172, 0
        %3176 = vmatprep.subr.mxu0 0.0
        %3177 = vmatpush1.msra.mxu0 0.0
        %3178 = vmatprep.subr.mxu0 0.0
        %3179 = vmatpush1.msra.mxu0 0.0
        %3180 = vmatprep.subr.mxu0 0.0
        %3181 = vmatpush1.msra.mxu0 0.0
        %3182 = vmatprep.subr.mxu0 0.0
        %3183 = vmatpush1.msra.mxu0 0.0
        %3184 = vmatprep.subr.mxu0 0.0
        %3185 = vmatpush1.msra.mxu0 0.0
        %3186 = vmatprep.subr.mxu0 0.0
        %3187 = vmatpush1.msra.mxu0 0.0
        %3188 = vmatprep.subr.mxu0 0.0
        %3189 = vmatpush1.msra.mxu0 0.0
        %3190 = vmatprep.subr.mxu0 0.0
        %3191 = vmatpush1.msra.mxu0 0.0
        %3192 = vmatprep.subr.mxu0 0.0
        %3193 = vmatpush1.msra.mxu0 0.0
        %3194 = vmatprep.subr.mxu0 0.0
        %3195 = vmatpush1.msra.mxu0 0.0
        %3196 = vmatprep.subr.mxu0 0.0
        %3197 = vmatpush1.msra.mxu0 0.0
        %3198 = vmatprep.subr.mxu0 0.0
        %3199 = vmatpush1.msra.mxu0 0.0
        %3200 = vmatprep.subr.mxu0 0.0
        %3201 = vmatpush1.msra.mxu0 0.0
        %3202 = vmatprep.subr.mxu0 0.0
        %3203 = vmatpush1.msra.mxu0 0.0
        %3204 = vmatprep.subr.mxu0 0.0
        %3205 = vmatpush1.msra.mxu0 0.0
        %3206 = vmatprep.subr.mxu0 0.0
        %3207 = vmatpush1.msra.mxu0 %v3174
        %3208 = vmatprep.subr.mxu0 0.0
        %3209 = vmatpush2.msra.mxu0 0.0
        %3210 = vmatprep.subr.mxu0 0.0
        %3211 = vmatpush2.msra.mxu0 0.0
        %3212 = vmatprep.subr.mxu0 0.0
        %3213 = vmatpush2.msra.mxu0 0.0
        %3214 = vmatprep.subr.mxu0 0.0
        %3215 = vmatpush2.msra.mxu0 0.0
        %3216 = vmatprep.subr.mxu0 0.0
        %3217 = vmatpush2.msra.mxu0 0.0
        %3218 = vmatprep.subr.mxu0 0.0
        %3219 = vmatpush2.msra.mxu0 0.0
        %3220 = vmatprep.subr.mxu0 0.0
        %3221 = vmatpush2.msra.mxu0 0.0
        %3222 = vmatprep.subr.mxu0 0.0
        %3223 = vmatpush2.msra.mxu0 0.0
        %3224 = vmatprep.subr.mxu0 0.0
        %3225 = vmatpush2.msra.mxu0 0.0
        %3226 = vmatprep.subr.mxu0 0.0
        %3227 = vmatpush2.msra.mxu0 0.0
        %3228 = vmatprep.subr.mxu0 0.0
        %3229 = vmatpush2.msra.mxu0 0.0
        %3230 = vmatprep.subr.mxu0 0.0
        %3231 = vmatpush2.msra.mxu0 0.0
        %3232 = vmatprep.subr.mxu0 0.0
        %3233 = vmatpush2.msra.mxu0 0.0
        %3234 = vmatprep.subr.mxu0 0.0
        %3235 = vmatpush2.msra.mxu0 0.0
        %3236 = vmatprep.subr.mxu0 0.0
        %3237 = vmatpush2.msra.mxu0 0.0
        %3238 = vmatprep.subr.mxu0 0.0
        %3239 = vmatpush2.msra.mxu0 0.0
        %3240 = vmatprep.mubr.f32.mxu0 0.0
        %3241 = vmatmul.mubr.f32.gmra.mxu0 %v373
        %v3242 = vpop.f32.mrf.mxu0
        %v3243 = vadd.f32 %v370, %v3242
        %v3244 = vpop.f32.mrf.mxu0
        %3245 = vdwg.mxu0
        %v3246 = vmul.f32 %v3243, %v3243
        %v3247 = vsel %vm449, %v3246, 0.0
        %3248 = vadd.xlane.f32.xlu0 %v3247
        %v3249 = vpop.xlane.xlu0 %3248
        %v3250 = vmax.f32 %v3249, 1e-24
        %v3251 = vrsqrt.pop %v3250
        %v3252 = vmul.f32 %v3243, %v3251
        %v3254 = vcombine.high %v3252, %v3252
        %v3256 = vunpack.c.l.s4 1966171168
        %v3257 = vunpack.c.0.s8 %v3256
        %v3258 = vlaneseq
        %v3259 = vshrl.u32 %v3258, 7
        %v3260 = vsub.s32 %v3257, %v3259
        %v3261 = vrot.slane %v3252, %v3260
        %v3263 = vunpack.c.l.s4 1966171168
        %v3264 = vunpack.c.0.s8 %v3263
        %v3265 = vlaneseq
        %v3266 = vshrl.u32 %v3265, 7
        %v3267 = vsub.s32 %v3264, %v3266
        %v3268 = vrot.slane %v3254, %v3267
        %v3269 = vcombine.high %v3261, %v3261
        %v3270 = vcombine.high %v3268, %v3268
        %v3272 = vunpack.c.l.s4 1966171168
        %v3273 = vunpack.c.0.s8 %v3272
        %v3274 = vlaneseq
        %v3275 = vshrl.u32 %v3274, 7
        %v3276 = vsub.s32 %v3273, %v3275
        %v3277 = vrot.slane %v3261, %v3276
        %v3279 = vunpack.c.l.s4 1966171168
        %v3280 = vunpack.c.0.s8 %v3279
        %v3281 = vlaneseq
        %v3282 = vshrl.u32 %v3281, 7
        %v3283 = vsub.s32 %v3280, %v3282
        %v3284 = vrot.slane %v3268, %v3283
        %v3286 = vunpack.c.l.s4 1966171168
        %v3287 = vunpack.c.0.s8 %v3286
        %v3288 = vlaneseq
        %v3289 = vshrl.u32 %v3288, 7
        %v3290 = vsub.s32 %v3287, %v3289
        %v3291 = vrot.slane %v3269, %v3290
        %v3293 = vunpack.c.l.s4 1966171168
        %v3294 = vunpack.c.0.s8 %v3293
        %v3295 = vlaneseq
        %v3296 = vshrl.u32 %v3295, 7
        %v3297 = vsub.s32 %v3294, %v3296
        %v3298 = vrot.slane %v3270, %v3297
        %v3299 = vcombine.high %v3277, %v3277
        %v3300 = vcombine.high %v3284, %v3284
        %v3301 = vcombine.high %v3291, %v3291
        %v3302 = vcombine.high %v3298, %v3298
        %3311 = vst.msk [vmem:[%s260 + $0xc] sm:$0x1] %vm514, %v3277
        %3312 = vst.msk [vmem:[%s260 + $0x1c] sm:$0x1] %vm514, %v3291
        %3313 = vst.msk [vmem:[%s260 + $0x2c] sm:$0x1] %vm514, %v3299
        %3314 = vst.msk [vmem:[%s260 + $0x3c] sm:$0x1] %vm514, %v3301
        %3315 = vst.msk [vmem:[%s260 + $0x4c] sm:$0x1] %vm514, %v3284
        %3316 = vst.msk [vmem:[%s260 + $0x5c] sm:$0x1] %vm514, %v3298
        %3317 = vst.msk [vmem:[%s260 + $0x6c] sm:$0x1] %vm514, %v3300
        %3318 = vst.msk [vmem:[%s260 + $0x7c] sm:$0x1] %vm514, %v3302
        %v3319 = vld [vmem:[%s234 + $0xd] sm:$0x1]
        %v3320 = vld [vmem:[%s234 + $0x1d] sm:$0x1]
        %v3321 = vld [vmem:[%s234 + $0x2d] sm:$0x1]
        %v3322 = vld [vmem:[%s234 + $0x3d] sm:$0x1]
        %v3327 = vrot.slane %v3320, 7
        %v3328 = vsel %vm281, %v3327, %v3319
        %v3329 = vrot.slane %v3321, 6
        %v3330 = vsel %vm284, %v3329, %v3328
        %v3331 = vrot.slane %v3322, 5
        %v3332 = vsel %vm287, %v3331, %v3330
        %v3333 = vsel %vm293, %v3332, 0
        %3335 = vmatprep.subr.mxu0 0.0
        %3336 = vmatpush1.msra.mxu0 0.0
        %3337 = vmatprep.subr.mxu0 0.0
        %3338 = vmatpush1.msra.mxu0 0.0
        %3339 = vmatprep.subr.mxu0 0.0
        %3340 = vmatpush1.msra.mxu0 0.0
        %3341 = vmatprep.subr.mxu0 0.0
        %3342 = vmatpush1.msra.mxu0 0.0
        %3343 = vmatprep.subr.mxu0 0.0
        %3344 = vmatpush1.msra.mxu0 0.0
        %3345 = vmatprep.subr.mxu0 0.0
        %3346 = vmatpush1.msra.mxu0 0.0
        %3347 = vmatprep.subr.mxu0 0.0
        %3348 = vmatpush1.msra.mxu0 0.0
        %3349 = vmatprep.subr.mxu0 0.0
        %3350 = vmatpush1.msra.mxu0 0.0
        %3351 = vmatprep.subr.mxu0 0.0
        %3352 = vmatpush1.msra.mxu0 0.0
        %3353 = vmatprep.subr.mxu0 0.0
        %3354 = vmatpush1.msra.mxu0 0.0
        %3355 = vmatprep.subr.mxu0 0.0
        %3356 = vmatpush1.msra.mxu0 0.0
        %3357 = vmatprep.subr.mxu0 0.0
        %3358 = vmatpush1.msra.mxu0 0.0
        %3359 = vmatprep.subr.mxu0 0.0
        %3360 = vmatpush1.msra.mxu0 0.0
        %3361 = vmatprep.subr.mxu0 0.0
        %3362 = vmatpush1.msra.mxu0 0.0
        %3363 = vmatprep.subr.mxu0 0.0
        %3364 = vmatpush1.msra.mxu0 0.0
        %3365 = vmatprep.subr.mxu0 0.0
        %3366 = vmatpush1.msra.mxu0 %v3333
        %3367 = vmatprep.subr.mxu0 0.0
        %3368 = vmatpush2.msra.mxu0 0.0
        %3369 = vmatprep.subr.mxu0 0.0
        %3370 = vmatpush2.msra.mxu0 0.0
        %3371 = vmatprep.subr.mxu0 0.0
        %3372 = vmatpush2.msra.mxu0 0.0
        %3373 = vmatprep.subr.mxu0 0.0
        %3374 = vmatpush2.msra.mxu0 0.0
        %3375 = vmatprep.subr.mxu0 0.0
        %3376 = vmatpush2.msra.mxu0 0.0
        %3377 = vmatprep.subr.mxu0 0.0
        %3378 = vmatpush2.msra.mxu0 0.0
        %3379 = vmatprep.subr.mxu0 0.0
        %3380 = vmatpush2.msra.mxu0 0.0
        %3381 = vmatprep.subr.mxu0 0.0
        %3382 = vmatpush2.msra.mxu0 0.0
        %3383 = vmatprep.subr.mxu0 0.0
        %3384 = vmatpush2.msra.mxu0 0.0
        %3385 = vmatprep.subr.mxu0 0.0
        %3386 = vmatpush2.msra.mxu0 0.0
        %3387 = vmatprep.subr.mxu0 0.0
        %3388 = vmatpush2.msra.mxu0 0.0
        %3389 = vmatprep.subr.mxu0 0.0
        %3390 = vmatpush2.msra.mxu0 0.0
        %3391 = vmatprep.subr.mxu0 0.0
        %3392 = vmatpush2.msra.mxu0 0.0
        %3393 = vmatprep.subr.mxu0 0.0
        %3394 = vmatpush2.msra.mxu0 0.0
        %3395 = vmatprep.subr.mxu0 0.0
        %3396 = vmatpush2.msra.mxu0 0.0
        %3397 = vmatprep.subr.mxu0 0.0
        %3398 = vmatpush2.msra.mxu0 0.0
        %3399 = vmatprep.mubr.f32.mxu0 0.0
        %3400 = vmatmul.mubr.f32.gmra.mxu0 %v291
        %v3401 = vpop.f32.mrf.mxu0
        %v3402 = vadd.f32 %v274, %v3401
        %v3403 = vpop.f32.mrf.mxu0
        %3404 = vdwg.mxu0
        %v3405 = vmax.f32 %v3402, 0.0
        %v3407 = vsel %vm293, %v3405, 0
        %3409 = vmatprep.subr.mxu0 0.0
        %3410 = vmatpush1.msra.mxu0 0.0
        %3411 = vmatprep.subr.mxu0 0.0
        %3412 = vmatpush1.msra.mxu0 0.0
        %3413 = vmatprep.subr.mxu0 0.0
        %3414 = vmatpush1.msra.mxu0 0.0
        %3415 = vmatprep.subr.mxu0 0.0
        %3416 = vmatpush1.msra.mxu0 0.0
        %3417 = vmatprep.subr.mxu0 0.0
        %3418 = vmatpush1.msra.mxu0 0.0
        %3419 = vmatprep.subr.mxu0 0.0
        %3420 = vmatpush1.msra.mxu0 0.0
        %3421 = vmatprep.subr.mxu0 0.0
        %3422 = vmatpush1.msra.mxu0 0.0
        %3423 = vmatprep.subr.mxu0 0.0
        %3424 = vmatpush1.msra.mxu0 0.0
        %3425 = vmatprep.subr.mxu0 0.0
        %3426 = vmatpush1.msra.mxu0 0.0
        %3427 = vmatprep.subr.mxu0 0.0
        %3428 = vmatpush1.msra.mxu0 0.0
        %3429 = vmatprep.subr.mxu0 0.0
        %3430 = vmatpush1.msra.mxu0 0.0
        %3431 = vmatprep.subr.mxu0 0.0
        %3432 = vmatpush1.msra.mxu0 0.0
        %3433 = vmatprep.subr.mxu0 0.0
        %3434 = vmatpush1.msra.mxu0 0.0
        %3435 = vmatprep.subr.mxu0 0.0
        %3436 = vmatpush1.msra.mxu0 0.0
        %3437 = vmatprep.subr.mxu0 0.0
        %3438 = vmatpush1.msra.mxu0 0.0
        %3439 = vmatprep.subr.mxu0 0.0
        %3440 = vmatpush1.msra.mxu0 %v3407
        %3441 = vmatprep.subr.mxu0 0.0
        %3442 = vmatpush2.msra.mxu0 0.0
        %3443 = vmatprep.subr.mxu0 0.0
        %3444 = vmatpush2.msra.mxu0 0.0
        %3445 = vmatprep.subr.mxu0 0.0
        %3446 = vmatpush2.msra.mxu0 0.0
        %3447 = vmatprep.subr.mxu0 0.0
        %3448 = vmatpush2.msra.mxu0 0.0
        %3449 = vmatprep.subr.mxu0 0.0
        %3450 = vmatpush2.msra.mxu0 0.0
        %3451 = vmatprep.subr.mxu0 0.0
        %3452 = vmatpush2.msra.mxu0 0.0
        %3453 = vmatprep.subr.mxu0 0.0
        %3454 = vmatpush2.msra.mxu0 0.0
        %3455 = vmatprep.subr.mxu0 0.0
        %3456 = vmatpush2.msra.mxu0 0.0
        %3457 = vmatprep.subr.mxu0 0.0
        %3458 = vmatpush2.msra.mxu0 0.0
        %3459 = vmatprep.subr.mxu0 0.0
        %3460 = vmatpush2.msra.mxu0 0.0
        %3461 = vmatprep.subr.mxu0 0.0
        %3462 = vmatpush2.msra.mxu0 0.0
        %3463 = vmatprep.subr.mxu0 0.0
        %3464 = vmatpush2.msra.mxu0 0.0
        %3465 = vmatprep.subr.mxu0 0.0
        %3466 = vmatpush2.msra.mxu0 0.0
        %3467 = vmatprep.subr.mxu0 0.0
        %3468 = vmatpush2.msra.mxu0 0.0
        %3469 = vmatprep.subr.mxu0 0.0
        %3470 = vmatpush2.msra.mxu0 0.0
        %3471 = vmatprep.subr.mxu0 0.0
        %3472 = vmatpush2.msra.mxu0 0.0
        %3473 = vmatprep.mubr.f32.mxu0 0.0
        %3474 = vmatmul.mubr.f32.gmra.mxu0 %v373
        %v3475 = vpop.f32.mrf.mxu0
        %v3476 = vadd.f32 %v370, %v3475
        %v3477 = vpop.f32.mrf.mxu0
        %3478 = vdwg.mxu0
        %v3479 = vmul.f32 %v3476, %v3476
        %v3480 = vsel %vm449, %v3479, 0.0
        %3481 = vadd.xlane.f32.xlu0 %v3480
        %v3482 = vpop.xlane.xlu0 %3481
        %v3483 = vmax.f32 %v3482, 1e-24
        %v3484 = vrsqrt.pop %v3483
        %v3485 = vmul.f32 %v3476, %v3484
        %v3487 = vcombine.high %v3485, %v3485
        %v3489 = vunpack.c.l.s4 1966171168
        %v3490 = vunpack.c.0.s8 %v3489
        %v3491 = vlaneseq
        %v3492 = vshrl.u32 %v3491, 7
        %v3493 = vsub.s32 %v3490, %v3492
        %v3494 = vrot.slane %v3485, %v3493
        %v3496 = vunpack.c.l.s4 1966171168
        %v3497 = vunpack.c.0.s8 %v3496
        %v3498 = vlaneseq
        %v3499 = vshrl.u32 %v3498, 7
        %v3500 = vsub.s32 %v3497, %v3499
        %v3501 = vrot.slane %v3487, %v3500
        %v3502 = vcombine.high %v3494, %v3494
        %v3503 = vcombine.high %v3501, %v3501
        %v3505 = vunpack.c.l.s4 1966171168
        %v3506 = vunpack.c.0.s8 %v3505
        %v3507 = vlaneseq
        %v3508 = vshrl.u32 %v3507, 7
        %v3509 = vsub.s32 %v3506, %v3508
        %v3510 = vrot.slane %v3494, %v3509
        %v3512 = vunpack.c.l.s4 1966171168
        %v3513 = vunpack.c.0.s8 %v3512
        %v3514 = vlaneseq
        %v3515 = vshrl.u32 %v3514, 7
        %v3516 = vsub.s32 %v3513, %v3515
        %v3517 = vrot.slane %v3501, %v3516
        %v3519 = vunpack.c.l.s4 1966171168
        %v3520 = vunpack.c.0.s8 %v3519
        %v3521 = vlaneseq
        %v3522 = vshrl.u32 %v3521, 7
        %v3523 = vsub.s32 %v3520, %v3522
        %v3524 = vrot.slane %v3502, %v3523
        %v3526 = vunpack.c.l.s4 1966171168
        %v3527 = vunpack.c.0.s8 %v3526
        %v3528 = vlaneseq
        %v3529 = vshrl.u32 %v3528, 7
        %v3530 = vsub.s32 %v3527, %v3529
        %v3531 = vrot.slane %v3503, %v3530
        %v3532 = vcombine.high %v3510, %v3510
        %v3533 = vcombine.high %v3517, %v3517
        %v3534 = vcombine.high %v3524, %v3524
        %v3535 = vcombine.high %v3531, %v3531
        %3544 = vst.msk [vmem:[%s260 + $0xd] sm:$0x1] %vm514, %v3510
        %3545 = vst.msk [vmem:[%s260 + $0x1d] sm:$0x1] %vm514, %v3524
        %3546 = vst.msk [vmem:[%s260 + $0x2d] sm:$0x1] %vm514, %v3532
        %3547 = vst.msk [vmem:[%s260 + $0x3d] sm:$0x1] %vm514, %v3534
        %3548 = vst.msk [vmem:[%s260 + $0x4d] sm:$0x1] %vm514, %v3517
        %3549 = vst.msk [vmem:[%s260 + $0x5d] sm:$0x1] %vm514, %v3531
        %3550 = vst.msk [vmem:[%s260 + $0x6d] sm:$0x1] %vm514, %v3533
        %3551 = vst.msk [vmem:[%s260 + $0x7d] sm:$0x1] %vm514, %v3535
        %v3552 = vld [vmem:[%s234 + $0xe] sm:$0x1]
        %v3553 = vld [vmem:[%s234 + $0x1e] sm:$0x1]
        %v3554 = vld [vmem:[%s234 + $0x2e] sm:$0x1]
        %v3555 = vld [vmem:[%s234 + $0x3e] sm:$0x1]
        %v3560 = vrot.slane %v3553, 7
        %v3561 = vsel %vm281, %v3560, %v3552
        %v3562 = vrot.slane %v3554, 6
        %v3563 = vsel %vm284, %v3562, %v3561
        %v3564 = vrot.slane %v3555, 5
        %v3565 = vsel %vm287, %v3564, %v3563
        %v3566 = vsel %vm293, %v3565, 0
        %3568 = vmatprep.subr.mxu0 0.0
        %3569 = vmatpush1.msra.mxu0 0.0
        %3570 = vmatprep.subr.mxu0 0.0
        %3571 = vmatpush1.msra.mxu0 0.0
        %3572 = vmatprep.subr.mxu0 0.0
        %3573 = vmatpush1.msra.mxu0 0.0
        %3574 = vmatprep.subr.mxu0 0.0
        %3575 = vmatpush1.msra.mxu0 0.0
        %3576 = vmatprep.subr.mxu0 0.0
        %3577 = vmatpush1.msra.mxu0 0.0
        %3578 = vmatprep.subr.mxu0 0.0
        %3579 = vmatpush1.msra.mxu0 0.0
        %3580 = vmatprep.subr.mxu0 0.0
        %3581 = vmatpush1.msra.mxu0 0.0
        %3582 = vmatprep.subr.mxu0 0.0
        %3583 = vmatpush1.msra.mxu0 0.0
        %3584 = vmatprep.subr.mxu0 0.0
        %3585 = vmatpush1.msra.mxu0 0.0
        %3586 = vmatprep.subr.mxu0 0.0
        %3587 = vmatpush1.msra.mxu0 0.0
        %3588 = vmatprep.subr.mxu0 0.0
        %3589 = vmatpush1.msra.mxu0 0.0
        %3590 = vmatprep.subr.mxu0 0.0
        %3591 = vmatpush1.msra.mxu0 0.0
        %3592 = vmatprep.subr.mxu0 0.0
        %3593 = vmatpush1.msra.mxu0 0.0
        %3594 = vmatprep.subr.mxu0 0.0
        %3595 = vmatpush1.msra.mxu0 0.0
        %3596 = vmatprep.subr.mxu0 0.0
        %3597 = vmatpush1.msra.mxu0 0.0
        %3598 = vmatprep.subr.mxu0 0.0
        %3599 = vmatpush1.msra.mxu0 %v3566
        %3600 = vmatprep.subr.mxu0 0.0
        %3601 = vmatpush2.msra.mxu0 0.0
        %3602 = vmatprep.subr.mxu0 0.0
        %3603 = vmatpush2.msra.mxu0 0.0
        %3604 = vmatprep.subr.mxu0 0.0
        %3605 = vmatpush2.msra.mxu0 0.0
        %3606 = vmatprep.subr.mxu0 0.0
        %3607 = vmatpush2.msra.mxu0 0.0
        %3608 = vmatprep.subr.mxu0 0.0
        %3609 = vmatpush2.msra.mxu0 0.0
        %3610 = vmatprep.subr.mxu0 0.0
        %3611 = vmatpush2.msra.mxu0 0.0
        %3612 = vmatprep.subr.mxu0 0.0
        %3613 = vmatpush2.msra.mxu0 0.0
        %3614 = vmatprep.subr.mxu0 0.0
        %3615 = vmatpush2.msra.mxu0 0.0
        %3616 = vmatprep.subr.mxu0 0.0
        %3617 = vmatpush2.msra.mxu0 0.0
        %3618 = vmatprep.subr.mxu0 0.0
        %3619 = vmatpush2.msra.mxu0 0.0
        %3620 = vmatprep.subr.mxu0 0.0
        %3621 = vmatpush2.msra.mxu0 0.0
        %3622 = vmatprep.subr.mxu0 0.0
        %3623 = vmatpush2.msra.mxu0 0.0
        %3624 = vmatprep.subr.mxu0 0.0
        %3625 = vmatpush2.msra.mxu0 0.0
        %3626 = vmatprep.subr.mxu0 0.0
        %3627 = vmatpush2.msra.mxu0 0.0
        %3628 = vmatprep.subr.mxu0 0.0
        %3629 = vmatpush2.msra.mxu0 0.0
        %3630 = vmatprep.subr.mxu0 0.0
        %3631 = vmatpush2.msra.mxu0 0.0
        %3632 = vmatprep.mubr.f32.mxu0 0.0
        %3633 = vmatmul.mubr.f32.gmra.mxu0 %v291
        %v3634 = vpop.f32.mrf.mxu0
        %v3635 = vadd.f32 %v274, %v3634
        %v3636 = vpop.f32.mrf.mxu0
        %3637 = vdwg.mxu0
        %v3638 = vmax.f32 %v3635, 0.0
        %v3640 = vsel %vm293, %v3638, 0
        %3642 = vmatprep.subr.mxu0 0.0
        %3643 = vmatpush1.msra.mxu0 0.0
        %3644 = vmatprep.subr.mxu0 0.0
        %3645 = vmatpush1.msra.mxu0 0.0
        %3646 = vmatprep.subr.mxu0 0.0
        %3647 = vmatpush1.msra.mxu0 0.0
        %3648 = vmatprep.subr.mxu0 0.0
        %3649 = vmatpush1.msra.mxu0 0.0
        %3650 = vmatprep.subr.mxu0 0.0
        %3651 = vmatpush1.msra.mxu0 0.0
        %3652 = vmatprep.subr.mxu0 0.0
        %3653 = vmatpush1.msra.mxu0 0.0
        %3654 = vmatprep.subr.mxu0 0.0
        %3655 = vmatpush1.msra.mxu0 0.0
        %3656 = vmatprep.subr.mxu0 0.0
        %3657 = vmatpush1.msra.mxu0 0.0
        %3658 = vmatprep.subr.mxu0 0.0
        %3659 = vmatpush1.msra.mxu0 0.0
        %3660 = vmatprep.subr.mxu0 0.0
        %3661 = vmatpush1.msra.mxu0 0.0
        %3662 = vmatprep.subr.mxu0 0.0
        %3663 = vmatpush1.msra.mxu0 0.0
        %3664 = vmatprep.subr.mxu0 0.0
        %3665 = vmatpush1.msra.mxu0 0.0
        %3666 = vmatprep.subr.mxu0 0.0
        %3667 = vmatpush1.msra.mxu0 0.0
        %3668 = vmatprep.subr.mxu0 0.0
        %3669 = vmatpush1.msra.mxu0 0.0
        %3670 = vmatprep.subr.mxu0 0.0
        %3671 = vmatpush1.msra.mxu0 0.0
        %3672 = vmatprep.subr.mxu0 0.0
        %3673 = vmatpush1.msra.mxu0 %v3640
        %3674 = vmatprep.subr.mxu0 0.0
        %3675 = vmatpush2.msra.mxu0 0.0
        %3676 = vmatprep.subr.mxu0 0.0
        %3677 = vmatpush2.msra.mxu0 0.0
        %3678 = vmatprep.subr.mxu0 0.0
        %3679 = vmatpush2.msra.mxu0 0.0
        %3680 = vmatprep.subr.mxu0 0.0
        %3681 = vmatpush2.msra.mxu0 0.0
        %3682 = vmatprep.subr.mxu0 0.0
        %3683 = vmatpush2.msra.mxu0 0.0
        %3684 = vmatprep.subr.mxu0 0.0
        %3685 = vmatpush2.msra.mxu0 0.0
        %3686 = vmatprep.subr.mxu0 0.0
        %3687 = vmatpush2.msra.mxu0 0.0
        %3688 = vmatprep.subr.mxu0 0.0
        %3689 = vmatpush2.msra.mxu0 0.0
        %3690 = vmatprep.subr.mxu0 0.0
        %3691 = vmatpush2.msra.mxu0 0.0
        %3692 = vmatprep.subr.mxu0 0.0
        %3693 = vmatpush2.msra.mxu0 0.0
        %3694 = vmatprep.subr.mxu0 0.0
        %3695 = vmatpush2.msra.mxu0 0.0
        %3696 = vmatprep.subr.mxu0 0.0
        %3697 = vmatpush2.msra.mxu0 0.0
        %3698 = vmatprep.subr.mxu0 0.0
        %3699 = vmatpush2.msra.mxu0 0.0
        %3700 = vmatprep.subr.mxu0 0.0
        %3701 = vmatpush2.msra.mxu0 0.0
        %3702 = vmatprep.subr.mxu0 0.0
        %3703 = vmatpush2.msra.mxu0 0.0
        %3704 = vmatprep.subr.mxu0 0.0
        %3705 = vmatpush2.msra.mxu0 0.0
        %3706 = vmatprep.mubr.f32.mxu0 0.0
        %3707 = vmatmul.mubr.f32.gmra.mxu0 %v373
        %v3708 = vpop.f32.mrf.mxu0
        %v3709 = vadd.f32 %v370, %v3708
        %v3710 = vpop.f32.mrf.mxu0
        %3711 = vdwg.mxu0
        %v3712 = vmul.f32 %v3709, %v3709
        %v3713 = vsel %vm449, %v3712, 0.0
        %3714 = vadd.xlane.f32.xlu0 %v3713
        %v3715 = vpop.xlane.xlu0 %3714
        %v3716 = vmax.f32 %v3715, 1e-24
        %v3717 = vrsqrt.pop %v3716
        %v3718 = vmul.f32 %v3709, %v3717
        %v3720 = vcombine.high %v3718, %v3718
        %v3722 = vunpack.c.l.s4 1966171168
        %v3723 = vunpack.c.0.s8 %v3722
        %v3724 = vlaneseq
        %v3725 = vshrl.u32 %v3724, 7
        %v3726 = vsub.s32 %v3723, %v3725
        %v3727 = vrot.slane %v3718, %v3726
        %v3729 = vunpack.c.l.s4 1966171168
        %v3730 = vunpack.c.0.s8 %v3729
        %v3731 = vlaneseq
        %v3732 = vshrl.u32 %v3731, 7
        %v3733 = vsub.s32 %v3730, %v3732
        %v3734 = vrot.slane %v3720, %v3733
        %v3735 = vcombine.high %v3727, %v3727
        %v3736 = vcombine.high %v3734, %v3734
        %v3738 = vunpack.c.l.s4 1966171168
        %v3739 = vunpack.c.0.s8 %v3738
        %v3740 = vlaneseq
        %v3741 = vshrl.u32 %v3740, 7
        %v3742 = vsub.s32 %v3739, %v3741
        %v3743 = vrot.slane %v3727, %v3742
        %v3745 = vunpack.c.l.s4 1966171168
        %v3746 = vunpack.c.0.s8 %v3745
        %v3747 = vlaneseq
        %v3748 = vshrl.u32 %v3747, 7
        %v3749 = vsub.s32 %v3746, %v3748
        %v3750 = vrot.slane %v3734, %v3749
        %v3752 = vunpack.c.l.s4 1966171168
        %v3753 = vunpack.c.0.s8 %v3752
        %v3754 = vlaneseq
        %v3755 = vshrl.u32 %v3754, 7
        %v3756 = vsub.s32 %v3753, %v3755
        %v3757 = vrot.slane %v3735, %v3756
        %v3759 = vunpack.c.l.s4 1966171168
        %v3760 = vunpack.c.0.s8 %v3759
        %v3761 = vlaneseq
        %v3762 = vshrl.u32 %v3761, 7
        %v3763 = vsub.s32 %v3760, %v3762
        %v3764 = vrot.slane %v3736, %v3763
        %v3765 = vcombine.high %v3743, %v3743
        %v3766 = vcombine.high %v3750, %v3750
        %v3767 = vcombine.high %v3757, %v3757
        %v3768 = vcombine.high %v3764, %v3764
        %3777 = vst.msk [vmem:[%s260 + $0xe] sm:$0x1] %vm514, %v3743
        %3778 = vst.msk [vmem:[%s260 + $0x1e] sm:$0x1] %vm514, %v3757
        %3779 = vst.msk [vmem:[%s260 + $0x2e] sm:$0x1] %vm514, %v3765
        %3780 = vst.msk [vmem:[%s260 + $0x3e] sm:$0x1] %vm514, %v3767
        %3781 = vst.msk [vmem:[%s260 + $0x4e] sm:$0x1] %vm514, %v3750
        %3782 = vst.msk [vmem:[%s260 + $0x5e] sm:$0x1] %vm514, %v3764
        %3783 = vst.msk [vmem:[%s260 + $0x6e] sm:$0x1] %vm514, %v3766
        %3784 = vst.msk [vmem:[%s260 + $0x7e] sm:$0x1] %vm514, %v3768
        %v3785 = vld [vmem:[%s234 + $0xf] sm:$0x1]
        %v3786 = vld [vmem:[%s234 + $0x1f] sm:$0x1]
        %v3787 = vld [vmem:[%s234 + $0x2f] sm:$0x1]
        %v3788 = vld [vmem:[%s234 + $0x3f] sm:$0x1]
        %v3793 = vrot.slane %v3786, 7
        %v3794 = vsel %vm281, %v3793, %v3785
        %v3795 = vrot.slane %v3787, 6
        %v3796 = vsel %vm284, %v3795, %v3794
        %v3797 = vrot.slane %v3788, 5
        %v3798 = vsel %vm287, %v3797, %v3796
        %v3799 = vsel %vm293, %v3798, 0
        %3801 = vmatprep.subr.mxu0 0.0
        %3802 = vmatpush1.msra.mxu0 0.0
        %3803 = vmatprep.subr.mxu0 0.0
        %3804 = vmatpush1.msra.mxu0 0.0
        %3805 = vmatprep.subr.mxu0 0.0
        %3806 = vmatpush1.msra.mxu0 0.0
        %3807 = vmatprep.subr.mxu0 0.0
        %3808 = vmatpush1.msra.mxu0 0.0
        %3809 = vmatprep.subr.mxu0 0.0
        %3810 = vmatpush1.msra.mxu0 0.0
        %3811 = vmatprep.subr.mxu0 0.0
        %3812 = vmatpush1.msra.mxu0 0.0
        %3813 = vmatprep.subr.mxu0 0.0
        %3814 = vmatpush1.msra.mxu0 0.0
        %3815 = vmatprep.subr.mxu0 0.0
        %3816 = vmatpush1.msra.mxu0 0.0
        %3817 = vmatprep.subr.mxu0 0.0
        %3818 = vmatpush1.msra.mxu0 0.0
        %3819 = vmatprep.subr.mxu0 0.0
        %3820 = vmatpush1.msra.mxu0 0.0
        %3821 = vmatprep.subr.mxu0 0.0
        %3822 = vmatpush1.msra.mxu0 0.0
        %3823 = vmatprep.subr.mxu0 0.0
        %3824 = vmatpush1.msra.mxu0 0.0
        %3825 = vmatprep.subr.mxu0 0.0
        %3826 = vmatpush1.msra.mxu0 0.0
        %3827 = vmatprep.subr.mxu0 0.0
        %3828 = vmatpush1.msra.mxu0 0.0
        %3829 = vmatprep.subr.mxu0 0.0
        %3830 = vmatpush1.msra.mxu0 0.0
        %3831 = vmatprep.subr.mxu0 0.0
        %3832 = vmatpush1.msra.mxu0 %v3799
        %3833 = vmatprep.subr.mxu0 0.0
        %3834 = vmatpush2.msra.mxu0 0.0
        %3835 = vmatprep.subr.mxu0 0.0
        %3836 = vmatpush2.msra.mxu0 0.0
        %3837 = vmatprep.subr.mxu0 0.0
        %3838 = vmatpush2.msra.mxu0 0.0
        %3839 = vmatprep.subr.mxu0 0.0
        %3840 = vmatpush2.msra.mxu0 0.0
        %3841 = vmatprep.subr.mxu0 0.0
        %3842 = vmatpush2.msra.mxu0 0.0
        %3843 = vmatprep.subr.mxu0 0.0
        %3844 = vmatpush2.msra.mxu0 0.0
        %3845 = vmatprep.subr.mxu0 0.0
        %3846 = vmatpush2.msra.mxu0 0.0
        %3847 = vmatprep.subr.mxu0 0.0
        %3848 = vmatpush2.msra.mxu0 0.0
        %3849 = vmatprep.subr.mxu0 0.0
        %3850 = vmatpush2.msra.mxu0 0.0
        %3851 = vmatprep.subr.mxu0 0.0
        %3852 = vmatpush2.msra.mxu0 0.0
        %3853 = vmatprep.subr.mxu0 0.0
        %3854 = vmatpush2.msra.mxu0 0.0
        %3855 = vmatprep.subr.mxu0 0.0
        %3856 = vmatpush2.msra.mxu0 0.0
        %3857 = vmatprep.subr.mxu0 0.0
        %3858 = vmatpush2.msra.mxu0 0.0
        %3859 = vmatprep.subr.mxu0 0.0
        %3860 = vmatpush2.msra.mxu0 0.0
        %3861 = vmatprep.subr.mxu0 0.0
        %3862 = vmatpush2.msra.mxu0 0.0
        %3863 = vmatprep.subr.mxu0 0.0
        %3864 = vmatpush2.msra.mxu0 0.0
        %3865 = vmatprep.mubr.f32.mxu0 0.0
        %3866 = vmatmul.mubr.f32.gmra.mxu0 %v291
        %v3867 = vpop.f32.mrf.mxu0
        %v3868 = vadd.f32 %v274, %v3867
        %v3869 = vpop.f32.mrf.mxu0
        %3870 = vdwg.mxu0
        %v3871 = vmax.f32 %v3868, 0.0
        %v3873 = vsel %vm293, %v3871, 0
        %3875 = vmatprep.subr.mxu0 0.0
        %3876 = vmatpush1.msra.mxu0 0.0
        %3877 = vmatprep.subr.mxu0 0.0
        %3878 = vmatpush1.msra.mxu0 0.0
        %3879 = vmatprep.subr.mxu0 0.0
        %3880 = vmatpush1.msra.mxu0 0.0
        %3881 = vmatprep.subr.mxu0 0.0
        %3882 = vmatpush1.msra.mxu0 0.0
        %3883 = vmatprep.subr.mxu0 0.0
        %3884 = vmatpush1.msra.mxu0 0.0
        %3885 = vmatprep.subr.mxu0 0.0
        %3886 = vmatpush1.msra.mxu0 0.0
        %3887 = vmatprep.subr.mxu0 0.0
        %3888 = vmatpush1.msra.mxu0 0.0
        %3889 = vmatprep.subr.mxu0 0.0
        %3890 = vmatpush1.msra.mxu0 0.0
        %3891 = vmatprep.subr.mxu0 0.0
        %3892 = vmatpush1.msra.mxu0 0.0
        %3893 = vmatprep.subr.mxu0 0.0
        %3894 = vmatpush1.msra.mxu0 0.0
        %3895 = vmatprep.subr.mxu0 0.0
        %3896 = vmatpush1.msra.mxu0 0.0
        %3897 = vmatprep.subr.mxu0 0.0
        %3898 = vmatpush1.msra.mxu0 0.0
        %3899 = vmatprep.subr.mxu0 0.0
        %3900 = vmatpush1.msra.mxu0 0.0
        %3901 = vmatprep.subr.mxu0 0.0
        %3902 = vmatpush1.msra.mxu0 0.0
        %3903 = vmatprep.subr.mxu0 0.0
        %3904 = vmatpush1.msra.mxu0 0.0
        %3905 = vmatprep.subr.mxu0 0.0
        %3906 = vmatpush1.msra.mxu0 %v3873
        %3907 = vmatprep.subr.mxu0 0.0
        %3908 = vmatpush2.msra.mxu0 0.0
        %3909 = vmatprep.subr.mxu0 0.0
        %3910 = vmatpush2.msra.mxu0 0.0
        %3911 = vmatprep.subr.mxu0 0.0
        %3912 = vmatpush2.msra.mxu0 0.0
        %3913 = vmatprep.subr.mxu0 0.0
        %3914 = vmatpush2.msra.mxu0 0.0
        %3915 = vmatprep.subr.mxu0 0.0
        %3916 = vmatpush2.msra.mxu0 0.0
        %3917 = vmatprep.subr.mxu0 0.0
        %3918 = vmatpush2.msra.mxu0 0.0
        %3919 = vmatprep.subr.mxu0 0.0
        %3920 = vmatpush2.msra.mxu0 0.0
        %3921 = vmatprep.subr.mxu0 0.0
        %3922 = vmatpush2.msra.mxu0 0.0
        %3923 = vmatprep.subr.mxu0 0.0
        %3924 = vmatpush2.msra.mxu0 0.0
        %3925 = vmatprep.subr.mxu0 0.0
        %3926 = vmatpush2.msra.mxu0 0.0
        %3927 = vmatprep.subr.mxu0 0.0
        %3928 = vmatpush2.msra.mxu0 0.0
        %3929 = vmatprep.subr.mxu0 0.0
        %3930 = vmatpush2.msra.mxu0 0.0
        %3931 = vmatprep.subr.mxu0 0.0
        %3932 = vmatpush2.msra.mxu0 0.0
        %3933 = vmatprep.subr.mxu0 0.0
        %3934 = vmatpush2.msra.mxu0 0.0
        %3935 = vmatprep.subr.mxu0 0.0
        %3936 = vmatpush2.msra.mxu0 0.0
        %3937 = vmatprep.subr.mxu0 0.0
        %3938 = vmatpush2.msra.mxu0 0.0
        %3939 = vmatprep.mubr.f32.mxu0 0.0
        %3940 = vmatmul.mubr.f32.gmra.mxu0 %v373
        %v3941 = vpop.f32.mrf.mxu0
        %v3942 = vadd.f32 %v370, %v3941
        %v3943 = vpop.f32.mrf.mxu0
        %3944 = vdwg.mxu0
        %v3945 = vmul.f32 %v3942, %v3942
        %v3946 = vsel %vm449, %v3945, 0.0
        %3947 = vadd.xlane.f32.xlu0 %v3946
        %v3948 = vpop.xlane.xlu0 %3947
        %v3949 = vmax.f32 %v3948, 1e-24
        %v3950 = vrsqrt.pop %v3949
        %v3951 = vmul.f32 %v3942, %v3950
        %v3953 = vcombine.high %v3951, %v3951
        %v3955 = vunpack.c.l.s4 1966171168
        %v3956 = vunpack.c.0.s8 %v3955
        %v3957 = vlaneseq
        %v3958 = vshrl.u32 %v3957, 7
        %v3959 = vsub.s32 %v3956, %v3958
        %v3960 = vrot.slane %v3951, %v3959
        %v3962 = vunpack.c.l.s4 1966171168
        %v3963 = vunpack.c.0.s8 %v3962
        %v3964 = vlaneseq
        %v3965 = vshrl.u32 %v3964, 7
        %v3966 = vsub.s32 %v3963, %v3965
        %v3967 = vrot.slane %v3953, %v3966
        %v3968 = vcombine.high %v3960, %v3960
        %v3969 = vcombine.high %v3967, %v3967
        %v3971 = vunpack.c.l.s4 1966171168
        %v3972 = vunpack.c.0.s8 %v3971
        %v3973 = vlaneseq
        %v3974 = vshrl.u32 %v3973, 7
        %v3975 = vsub.s32 %v3972, %v3974
        %v3976 = vrot.slane %v3960, %v3975
        %v3978 = vunpack.c.l.s4 1966171168
        %v3979 = vunpack.c.0.s8 %v3978
        %v3980 = vlaneseq
        %v3981 = vshrl.u32 %v3980, 7
        %v3982 = vsub.s32 %v3979, %v3981
        %v3983 = vrot.slane %v3967, %v3982
        %v3985 = vunpack.c.l.s4 1966171168
        %v3986 = vunpack.c.0.s8 %v3985
        %v3987 = vlaneseq
        %v3988 = vshrl.u32 %v3987, 7
        %v3989 = vsub.s32 %v3986, %v3988
        %v3990 = vrot.slane %v3968, %v3989
        %v3992 = vunpack.c.l.s4 1966171168
        %v3993 = vunpack.c.0.s8 %v3992
        %v3994 = vlaneseq
        %v3995 = vshrl.u32 %v3994, 7
        %v3996 = vsub.s32 %v3993, %v3995
        %v3997 = vrot.slane %v3969, %v3996
        %v3998 = vcombine.high %v3976, %v3976
        %v3999 = vcombine.high %v3983, %v3983
        %v4000 = vcombine.high %v3990, %v3990
        %v4001 = vcombine.high %v3997, %v3997
        %4010 = vst.msk [vmem:[%s260 + $0xf] sm:$0x1] %vm514, %v3976
        %4011 = vst.msk [vmem:[%s260 + $0x1f] sm:$0x1] %vm514, %v3990
        %4012 = vst.msk [vmem:[%s260 + $0x2f] sm:$0x1] %vm514, %v3998
        %4013 = vst.msk [vmem:[%s260 + $0x3f] sm:$0x1] %vm514, %v4000
        %4014 = vst.msk [vmem:[%s260 + $0x4f] sm:$0x1] %vm514, %v3983
        %4015 = vst.msk [vmem:[%s260 + $0x5f] sm:$0x1] %vm514, %v3997
        %4016 = vst.msk [vmem:[%s260 + $0x6f] sm:$0x1] %vm514, %v3999
        %4017 = vst.msk [vmem:[%s260 + $0x7f] sm:$0x1] %vm514, %v4001
        %s4018 = sand.u32 %s156, 1
        %s4019 = scalar_lea.sflag [#allocation4], %s4018
        %s4020 = sand.u32 %s156, 1
        %s4021 = smul.addr %s4020, 128
        %s4022 = scalar_lea.vmem [#allocation5], %s4021
        // Predicated region
        $region45: #{tpu_custom_call.1} parent=39 // pred_check
          %p4023 = pneg %p166
        $region46: #{tpu_custom_call.1} parent=39 // pred_check_branch
          %4025 = sbr.rel (%p4023) target = $region48
        $region47: #{tpu_custom_call.1} parent=39 // pred_region
          %s4026 = smul.u32 2, %s27
          %s4028 = ssub.s32 2048, 2048
          %4029 = vsyncadd %s4019, %s4028
          %s4030 = smul.addr %s26, 16
          %s4031 = sadd.s32 %s4026, %s4030
          %s4032 = smul.addr %s4031, 128
          %s4033 = scalar_lea.hbm %s5, %s4032
          %s4034 = sshll.u32 %s4022, 4
          %s4035 = int_to_ptr.vmem [resolvable:$true] %s4034
          %4040 = dma.vmem_to_hbm [thread:$0]  %s4035, 2048, %s4033, %s4019, 128, 128, 8
        $region48: #{tpu_custom_call.1} parent=39 // pred_fallthru
          _
      $region40: #{tpu_custom_call.1} parent=5 // pred_fallthru
        _
      %p4041 = scmp.le.s32.totalorder 2, %s17
      // Predicated region
      $region49: #{tpu_custom_call.1} parent=5 // pred_check
        %p4042 = pneg %p4041
      $region50: #{tpu_custom_call.1} parent=5 // pred_check_branch
        %4044 = sbr.rel (%p4042) target = $region52
      $region51: #{tpu_custom_call.1} parent=5 // pred_region
        %s4045 = ssub.s32 %s17, 2
        // Predicated region
        $region53: #{tpu_custom_call.1} parent=51 // pred_check
          %p4046 = pneg %p172
        $region54: #{tpu_custom_call.1} parent=51 // pred_check_branch
          %4048 = sbr.rel (%p4046) target = $region56
        $region55: #{tpu_custom_call.1} parent=51 // pred_region
          %s4049 = sand.u32 %s157, 1
          %s4050 = scalar_lea.sflag [#allocation4], %s4049
          %s4051 = sand.u32 %s157, 1
          %s4052 = smul.addr %s4051, 128
          %s4053 = scalar_lea.vmem [#allocation5], %s4052
          %4054 = dma.done %s4050, 2048
        $region56: #{tpu_custom_call.1} parent=51 // pred_fallthru
          _
      $region52: #{tpu_custom_call.1} parent=5 // pred_fallthru
        _
    $region6: #{tpu_custom_call.1} parent=1 // loop_footer
      %s21 = sadd.s32 1, %s17
    $region7: #{tpu_custom_call.1} parent=1 // loop_footer_branch
      %16 = sbr.rel target = $region3
    $region8: #{tpu_custom_call.1} parent=1 // loop_exit
      _
    %4055 = vsyncpa [#allocation3], 1
    %s4056 = scalar_lea.sflag [#allocation3], 1
    %4057 = vsyncpa %s4056, 1
    %4058 = vsyncpa [#allocation4], 1
    %s4059 = scalar_lea.sflag [#allocation4], 1
    %4060 = vsyncpa %s4059, 1

</llo_original>
